<compile_context>
chip_gen: v5e
topology: v5e:2x2
jax: 0.10.0
libtpu: 0.0.40
codegen_flags: <defaults>
</compile_context>

<pallas_src>
import functools

import jax
import jax.numpy as jnp
from jax import lax
from jax.experimental import pallas as pl
from jax.experimental.pallas import tpu as pltpu


def _block_layout(a):
    """(heads, d) -> (heads, heads*d): row i holds a[i] in columns i*d:(i+1)*d."""
    heads, d = a.shape
    eye = jnp.eye(heads, dtype=a.dtype)
    return (eye[:, :, None] * a[None, :, :]).reshape(heads, heads * d)


# ---------------------------------------------------------------------------
# In-kernel building blocks
# ---------------------------------------------------------------------------
def _multihead_gat_layer(x_bf, w_bf, a_src_blk, a_dst_blk, ones_blk, bias,
                         p_all_ref, rhs_ref, *, bf16_exp):
    """Multi-head GAT layer on VMEM-resident values.  Returns (N, H*D) f32.

    a_src_blk / a_dst_blk: (H, H*D) bf16 block layouts (row h holds head-h's
    attention vector in columns h*D:(h+1)*D).  ones_blk: same layout, f32 ones
    (used to broadcast per-head 1/denominator across that head's D columns).
    p_all_ref: (N, H*N) bf16 scratch.  rhs_ref: (H*N, H*D + H) bf16 scratch.
    """
    heads = a_src_blk.shape[0]
    cols = a_src_blk.shape[1]                       # H*D
    d_out = cols // heads
    n = bias.shape[0]

    # Projection on the MXU (bf16 operands, f32 accumulation).
    h = jnp.dot(x_bf, w_bf, preferred_element_type=jnp.float32)        # (N, H*D)
    h_bf = h.astype(jnp.bfloat16)

    # All per-head scores via two small NT matmuls against the block layouts:
    #   s_dst[n, h]   = <h[n, h*D:(h+1)*D], a_dst[h]>
    #   s_src_t[h, n] = <h[n, h*D:(h+1)*D], a_src[h]>
    s_dst = lax.dot_general(h_bf, a_dst_blk, (((1,), (1,)), ((), ())),
                            preferred_element_type=jnp.float32)        # (N, H)
    s_src_t = lax.dot_general(a_src_blk, h_bf, (((1,), (1,)), ((), ())),
                              preferred_element_type=jnp.float32)      # (H, N)

    # Zero the block-diagonal RHS once (off-diagonal blocks must stay 0).
    rhs_ref[...] = jnp.zeros_like(rhs_ref)

    # Static unroll over heads; every iteration ends in scratch stores, so no
    # per-head value stays live until a final concatenate (bounds vreg pressure).
    for hd in range(heads):
        # e[i, j] = LeakyReLU(s_dst[i] + s_src[j]) for edge j -> i.
        e = s_dst[:, hd:hd + 1] + s_src_t[hd:hd + 1, :]                # (N, N)
        e = jnp.maximum(e, 0.2 * e)                                    # LeakyReLU(0.2)
        e = e + bias                                                   # -1e30 off-edge
        m = jnp.max(e, axis=-1, keepdims=True)
        z = e - m                                                      # f32 max-sub
        if bf16_exp:
            p = jnp.exp(z.astype(jnp.bfloat16))        # bf16 EUP (v6e / v7x)
        else:
            p = jnp.exp(z).astype(jnp.bfloat16)        # f32 EUP (v5e and older)
        # Column block hd of the batched matmul LHS (masked entries are exact 0).
        p_all_ref[:, hd * n:(hd + 1) * n] = p
        # Block-diagonal RHS: this head's projected features, plus one
        # ones-column so the softmax denominator falls out of the same matmul.
        rhs_ref[hd * n:(hd + 1) * n, hd * d_out:(hd + 1) * d_out] = (
            h_bf[:, hd * d_out:(hd + 1) * d_out])
        rhs_ref[hd * n:(hd + 1) * n, cols + hd:cols + hd + 1] = (
            jnp.ones((n, 1), jnp.bfloat16))

    # One batched (N, H*N) x (H*N, H*D + H) MXU matmul (f32 accumulation):
    #   columns [0, H*D)     -> unnormalized per-head aggregations, lane-dense,
    #                           already in the concatenated output layout;
    #   columns [H*D, H*D+H) -> per-head softmax denominators.
    res = jnp.dot(p_all_ref[...], rhs_ref[...],
                  preferred_element_type=jnp.float32)                  # (N, H*D+H)
    agg = res[:, :cols]
    inv = pl.reciprocal(res[:, cols:], approx=True)                    # (N, H), EUP
    # Broadcast each head's 1/denominator across its D output columns with a tiny
    # exact f32 matmul against the constant ones block layout (MXU has slack;
    # avoids lane shuffles / repeats on the XLU).
    inv_dense = jnp.dot(inv, ones_blk, preferred_element_type=jnp.float32)
    return agg * inv_dense


def _single_head_gat_logsoftmax(h_bf, w_bf, a_src, a_dst, bias, *, num_classes):
    """Single-head GAT layer + log_softmax over the first num_classes columns.

    Padded columns (if any) are masked off before the softmax.  Returns
    (N, C_pad) f32; the wrapper slices to (N, num_classes).
    """
    padded_c = w_bf.shape[1]
    h2 = jnp.dot(h_bf, w_bf, preferred_element_type=jnp.float32)       # (N, C_pad)
    # Single head: cheap VPU scores + one small XLU transpose.
    s_dst = jnp.sum(h2 * a_dst, axis=-1, keepdims=True)                # (N, 1)
    s_src_t = jnp.transpose(jnp.sum(h2 * a_src, axis=-1, keepdims=True))  # (1, N)
    e = s_dst + s_src_t
    e = jnp.maximum(e, 0.2 * e) + bias                                 # LeakyReLU + mask
    m = jnp.max(e, axis=-1, keepdims=True)
    p = jnp.exp(e - m)                                                 # f32; off-edge -> 0
    denom = jnp.sum(p, axis=-1, keepdims=True)                         # >= 1 (self loop)
    agg = jnp.dot(p.astype(jnp.bfloat16), h2.astype(jnp.bfloat16),
                  preferred_element_type=jnp.float32)                  # (N, C_pad)
    out = agg * pl.reciprocal(denom, approx=True)
    if padded_c > num_classes:                                         # mask the pad
        col = lax.broadcasted_iota(jnp.int32, (1, padded_c), 1)
        out = jnp.where(col < num_classes, out, jnp.float32(-1e30))
    mo = jnp.max(out, axis=-1, keepdims=True)
    z = out - mo
    lse = jnp.log(jnp.sum(jnp.exp(z), axis=-1, keepdims=True))
    return z - lse


# ---------------------------------------------------------------------------
# Kernels
# ---------------------------------------------------------------------------
def _fused_kernel(x_ref, adj_ref, w1_ref, a1s_ref, a1d_ref, ones1_ref,
                  w2_ref, a2s_ref, a2d_ref, out_ref, p_all_ref, rhs_ref,
                  *, num_classes, bf16_exp):
    """Whole forward pass in one grid-less call (one TensorCore chips)."""
    # Additive mask bias: 0 on edges, -1e30 off edges; shared by both layers.
    bias = (adj_ref[...].astype(jnp.float32) - 1.0) * jnp.float32(1e30)

    h1 = _multihead_gat_layer(x_ref[...], w1_ref[...], a1s_ref[...], a1d_ref[...],
                              ones1_ref[...], bias, p_all_ref, rhs_ref,
                              bf16_exp=bf16_exp)
    # ELU (overflow-safe form).
    h1 = jnp.where(h1 > 0, h1, jnp.exp(jnp.minimum(h1, 0.0)) - 1.0)

    out_ref[...] = _single_head_gat_logsoftmax(
        h1.astype(jnp.bfloat16), w2_ref[...], a2s_ref[...], a2d_ref[...], bias,
        num_classes=num_classes).astype(out_ref.dtype)


def _layer1_kernel(x_ref, adj_ref, w1_ref, a1s_ref, a1d_ref, ones_ref,
                   h1_ref, p_all_ref, rhs_ref, *, bf16_exp):
    """One head group of layer 1 (grid step == one TensorCore on v7x)."""
    bias = (adj_ref[...].astype(jnp.float32) - 1.0) * jnp.float32(1e30)
    h1 = _multihead_gat_layer(x_ref[...], w1_ref[0], a1s_ref[0], a1d_ref[0],
                              ones_ref[0], bias, p_all_ref, rhs_ref,
                              bf16_exp=bf16_exp)
    h1 = jnp.where(h1 > 0, h1, jnp.exp(jnp.minimum(h1, 0.0)) - 1.0)     # ELU
    h1_ref[0] = h1.astype(h1_ref.dtype)


def _layer2_kernel(h1_ref, adj_ref, w2_ref, a2s_ref, a2d_ref, out_ref,
                   *, num_classes):
    bias = (adj_ref[...].astype(jnp.float32) - 1.0) * jnp.float32(1e30)
    out_ref[...] = _single_head_gat_logsoftmax(
        h1_ref[...], w2_ref[...], a2s_ref[...], a2d_ref[...], bias,
        num_classes=num_classes).astype(out_ref.dtype)


# ---------------------------------------------------------------------------
# Wrapper
# ---------------------------------------------------------------------------
@functools.partial(jax.jit, static_argnames=("bf16_exp", "num_groups"))
def _forward(x, adj_i8, w1, a1_src, a1_dst, w2, a2_src, a2_dst, *,
             bf16_exp, num_groups):
    n, f_in = x.shape
    heads, hidden = a1_src.shape
    num_classes = w2.shape[1]
    padded_c = ((num_classes + 7) // 8) * 8
    pad = padded_c - num_classes

    # Pre-cast / pre-layout (plain XLA, outside the kernel; all tiny).
    x_bf = x.astype(jnp.bfloat16)
    w1_bf = w1.astype(jnp.bfloat16)
    w2_bf = jnp.pad(w2, ((0, 0), (0, pad))).astype(jnp.bfloat16)
    a2s = jnp.pad(a2_src, ((0, 0), (0, pad)))          # stays f32 (VPU path)
    a2d = jnp.pad(a2_dst, ((0, 0), (0, pad)))

    vmem = pl.BlockSpec(memory_space=pltpu.MemorySpace.VMEM)

    if num_groups == 1:
        # Single fused, grid-less call: x/adj/weights/activations VMEM-resident.
        a1s = _block_layout(a1_src).astype(jnp.bfloat16)           # (H, H*D)
        a1d = _block_layout(a1_dst).astype(jnp.bfloat16)
        ones1 = _block_layout(jnp.ones((heads, hidden), jnp.float32))
        kernel = functools.partial(_fused_kernel, num_classes=num_classes,
                                   bf16_exp=bf16_exp)
        out = pl.pallas_call(
            kernel,
            out_shape=jax.ShapeDtypeStruct((n, padded_c), jnp.float32),
            in_specs=[vmem] * 9,
            out_specs=vmem,
            scratch_shapes=[
                pltpu.VMEM((n, heads * n), jnp.bfloat16),
                pltpu.VMEM((heads * n, heads * hidden + heads), jnp.bfloat16),
            ],
        )(x_bf, adj_i8, w1_bf, a1s, a1d, ones1, w2_bf, a2s, a2d)
    else:
        # v7x: split layer 1's heads across TensorCores via a "parallel" grid.
        g = num_groups
        hps = heads // g
        # Per-group parameters carry a leading group axis so every grid step sees
        # a fully static head group (keeps all in-kernel slices static and keeps
        # the last two block dims equal to the full array dims).
        w1_g = w1_bf.reshape(f_in, g, hps * hidden).transpose(1, 0, 2)
        a1s_g = jnp.stack([_block_layout(a1_src[gi * hps:(gi + 1) * hps])
                           for gi in range(g)]).astype(jnp.bfloat16)
        a1d_g = jnp.stack([_block_layout(a1_dst[gi * hps:(gi + 1) * hps])
                           for gi in range(g)]).astype(jnp.bfloat16)
        ones_grp = _block_layout(jnp.ones((hps, hidden), jnp.float32))
        ones_g = jnp.stack([ones_grp] * g)

        l1 = functools.partial(_layer1_kernel, bf16_exp=bf16_exp)
        h1_g = pl.pallas_call(
            l1,
            out_shape=jax.ShapeDtypeStruct((g, n, hps * hidden), jnp.bfloat16),
            grid=(g,),
            in_specs=[
                pl.BlockSpec((n, f_in), lambda i: (0, 0)),
                pl.BlockSpec((n, n), lambda i: (0, 0)),
                pl.BlockSpec((1, f_in, hps * hidden), lambda i: (i, 0, 0)),
                pl.BlockSpec((1, hps, hps * hidden), lambda i: (i, 0, 0)),
                pl.BlockSpec((1, hps, hps * hidden), lambda i: (i, 0, 0)),
                pl.BlockSpec((1, hps, hps * hidden), lambda i: (i, 0, 0)),
            ],
            out_specs=pl.BlockSpec((1, n, hps * hidden), lambda i: (i, 0, 0)),
            scratch_shapes=[
                pltpu.VMEM((n, hps * n), jnp.bfloat16),
                pltpu.VMEM((hps * n, hps * hidden + hps), jnp.bfloat16),
            ],
            compiler_params=pltpu.CompilerParams(
                dimension_semantics=("parallel",)),
        )(x_bf, adj_i8, w1_g, a1s_g, a1d_g, ones_g)

        # Reassemble (g, N, hps*hidden) -> (N, heads*hidden); 32 KiB, trivial XLA.
        h1 = jnp.transpose(h1_g, (1, 0, 2)).reshape(n, heads * hidden)

        l2 = functools.partial(_layer2_kernel, num_classes=num_classes)
        out = pl.pallas_call(
            l2,
            out_shape=jax.ShapeDtypeStruct((n, padded_c), jnp.float32),
            in_specs=[vmem] * 5,
            out_specs=vmem,
        )(h1, adj_i8, w2_bf, a2s, a2d)

    return out[:, :num_classes]


def monomial_gat_net(x, adj_i8, params, *, force_groups=None):
    """Forward pass.  Picks the kernel variant per TPU generation:
       - v6e/v7x: bf16 attention exp;  v5e/older: f32 exp.
       - v7x: layer 1 split over the 2 TensorCores; otherwise single fused call.
    """
    try:
        kind = jax.devices()[0].device_kind.lower()
    except Exception:  # pragma: no cover - detection is best-effort
        kind = ""
    is_v7 = ("v7" in kind) or ("tpu7" in kind)
    bf16_exp = is_v7 or ("v6" in kind)
    heads = params["a1_src"].shape[0]
    if force_groups is not None:
        num_groups = force_groups
    else:
        num_groups = 2 if (is_v7 and heads % 2 == 0) else 1

    args = (x, adj_i8, params["w1"], params["a1_src"], params["a1_dst"],
            params["w2"], params["a2_src"], params["a2_dst"])
    try:
        return _forward(*args, bf16_exp=bf16_exp, num_groups=num_groups)
    except Exception:
        if not bf16_exp:
            raise
        # Defensive fallback if this jax/libtpu build rejects bf16 transcendentals.
        return _forward(*args, bf16_exp=False, num_groups=num_groups)


def init_params(key, num_features, num_classes, hidden=8, heads=8):
    ks = jax.random.split(key, 6)

    def glorot(k, shape):
        lim = jnp.sqrt(6.0 / (shape[0] + shape[1]))
        return jax.random.uniform(k, shape, jnp.float32, -lim, lim)

    return {
        "w1": glorot(ks[0], (num_features, heads * hidden)),
        "a1_src": glorot(ks[1], (heads, hidden)),
        "a1_dst": glorot(ks[2], (heads, hidden)),
        "w2": glorot(ks[3], (heads * hidden, num_classes)),
        "a2_src": glorot(ks[4], (1, num_classes)),
        "a2_dst": glorot(ks[5], (1, num_classes)),
    }


def _reference(x, adj, params):
    """Pure-JAX float32 reference (standard GAT attention, eval mode)."""
    adj_f = adj.astype(jnp.float32)

    def layer(h_in, w, a_src, a_dst):
        heads, d = a_src.shape
        h = h_in @ w                                     # (N, heads*d)
        hh = h.reshape(-1, heads, d)
        sd = jnp.einsum("nhd,hd->nh", hh, a_dst)
        ss = jnp.einsum("nhd,hd->nh", hh, a_src)
        e = sd[:, None, :] + ss[None, :, :]              # (N, N, heads), edge j->i
        e = jax.nn.leaky_relu(e, 0.2)
        e = jnp.where(adj_f[:, :, None] > 0, e, -jnp.inf)
        p = jax.nn.softmax(e, axis=1)
        out = jnp.einsum("nmh,mhd->nhd", p, hh)
        return out.reshape(-1, heads * d)

    h1 = jax.nn.elu(layer(x, params["w1"], params["a1_src"], params["a1_dst"]))
    h2 = layer(h1, params["w2"], params["a2_src"], params["a2_dst"])
    return jax.nn.log_softmax(h2, axis=-1)


if __name__ == "__main__":
    N, F_IN, NUM_CLASSES = 128, 32, 7

    key = jax.random.PRNGKey(0)
    k_x, k_adj, k_par = jax.random.split(key, 3)

    # Node features (Cora features are row-normalized; mimic that).
    x = jax.random.uniform(k_x, (N, F_IN), jnp.float32)
    x = x / jnp.sum(x, axis=-1, keepdims=True)

    # Deterministic sparse undirected graph + self loops, as an int8 0/1 mask.
    rnd = jax.random.bernoulli(k_adj, p=0.05, shape=(N, N))
    adj = jnp.logical_or(rnd, rnd.T)
    adj = jnp.logical_or(adj, jnp.eye(N, dtype=bool))
    adj_i8 = adj.astype(jnp.int8)

    params = init_params(k_par, F_IN, NUM_CLASSES)

    # Auto-selected variant for this chip.
    out = jax.block_until_ready(monomial_gat_net(x, adj_i8, params))
    assert out.shape == (N, NUM_CLASSES)
    assert bool(jnp.all(jnp.isfinite(out)))
    row_sums = jnp.sum(jnp.exp(out), axis=-1)
    assert bool(jnp.all(jnp.abs(row_sums - 1.0) < 1e-3))

    # Exercise BOTH code paths (fused single-call and 2-group head split used on
    # v7x) so the split path is covered on any chip, and check they agree.
    out_fused = jax.block_until_ready(
        monomial_gat_net(x, adj_i8, params, force_groups=1))
    out_split = jax.block_until_ready(
        monomial_gat_net(x, adj_i8, params, force_groups=2))
    assert float(jnp.max(jnp.abs(out_fused - out_split))) < 2e-2

    # Accuracy vs. a pure-JAX f32 reference (bf16 MXU + approx reciprocal noise).
    ref = _reference(x, adj, params)
    assert float(jnp.max(jnp.abs(out - ref))) < 5e-2

    print("KERNEL_OK")
</pallas_src>

<mosaic_0001>
module attributes {stable_mosaic.version = 11 : i64} {
  func.func @_fused_kernel(%arg0: memref<128x32xbf16, #tpu.memory_space<vmem>>, %arg1: memref<128x128xi8, #tpu.memory_space<vmem>>, %arg2: memref<32x64xbf16, #tpu.memory_space<vmem>>, %arg3: memref<8x64xbf16, #tpu.memory_space<vmem>>, %arg4: memref<8x64xbf16, #tpu.memory_space<vmem>>, %arg5: memref<8x64xf32, #tpu.memory_space<vmem>>, %arg6: memref<64x8xbf16, #tpu.memory_space<vmem>>, %arg7: memref<1x8xf32, #tpu.memory_space<vmem>>, %arg8: memref<1x8xf32, #tpu.memory_space<vmem>>, %arg9: memref<128x8xf32, #tpu.memory_space<vmem>>, %arg10: memref<128x1024xbf16, #tpu.memory_space<vmem>>, %arg11: memref<1024x72xbf16, #tpu.memory_space<vmem>>) attributes {dimension_semantics = [], scalar_prefetch = 0 : i64, scratch_operands = 2 : i64, tpu.core_type = #tpu.core_type<tc>} {
    %c0 = arith.constant 0 : index
    %c0_0 = arith.constant 0 : index
    %0 = vector.load %arg1[%c0, %c0_0] : memref<128x128xi8, #tpu.memory_space<vmem>>, vector<128x128xi8>
    %1 = arith.sitofp %0 : vector<128x128xi8> to vector<128x128xf32>
    %cst = arith.constant 1.000000e+00 : f32
    %2 = vector.broadcast %cst : f32 to vector<128x128xf32>
    %3 = arith.subf %1, %2 : vector<128x128xf32>
    %cst_1 = arith.constant 1.000000e+30 : f32
    %4 = vector.broadcast %cst_1 : f32 to vector<128x128xf32>
    %5 = arith.mulf %3, %4 : vector<128x128xf32>
    %c0_2 = arith.constant 0 : index
    %c0_3 = arith.constant 0 : index
    %6 = vector.load %arg0[%c0_2, %c0_3] : memref<128x32xbf16, #tpu.memory_space<vmem>>, vector<128x32xbf16>
    %c0_4 = arith.constant 0 : index
    %c0_5 = arith.constant 0 : index
    %7 = vector.load %arg2[%c0_4, %c0_5] : memref<32x64xbf16, #tpu.memory_space<vmem>>, vector<32x64xbf16>
    %c0_6 = arith.constant 0 : index
    %c0_7 = arith.constant 0 : index
    %8 = vector.load %arg3[%c0_6, %c0_7] : memref<8x64xbf16, #tpu.memory_space<vmem>>, vector<8x64xbf16>
    %c0_8 = arith.constant 0 : index
    %c0_9 = arith.constant 0 : index
    %9 = vector.load %arg4[%c0_8, %c0_9] : memref<8x64xbf16, #tpu.memory_space<vmem>>, vector<8x64xbf16>
    %c0_10 = arith.constant 0 : index
    %c0_11 = arith.constant 0 : index
    %10 = vector.load %arg5[%c0_10, %c0_11] : memref<8x64xf32, #tpu.memory_space<vmem>>, vector<8x64xf32>
    %cst_12 = arith.constant dense<0.000000e+00> : vector<128x64xf32>
    %11 = tpu.matmul %6, %7, %cst_12 {dimension_numbers = #tpu.dot_dimension_numbers<[1], [0], [0], [1], [0, 0, 1, 1], [], []>} : vector<128x32xbf16>, vector<32x64xbf16>, vector<128x64xf32> -> vector<128x64xf32>
    %12 = arith.truncf %11 : vector<128x64xf32> to vector<128x64xbf16>
    %cst_13 = arith.constant dense<0.000000e+00> : vector<128x8xf32>
    %13 = tpu.matmul %12, %9, %cst_13 {dimension_numbers = #tpu.dot_dimension_numbers<[1], [1], [0], [0], [0, 0, 1, 0], [], []>} : vector<128x64xbf16>, vector<8x64xbf16>, vector<128x8xf32> -> vector<128x8xf32>
    %cst_14 = arith.constant dense<0.000000e+00> : vector<8x128xf32>
    %14 = tpu.matmul %8, %12, %cst_14 {dimension_numbers = #tpu.dot_dimension_numbers<[1], [1], [0], [0], [0, 0, 1, 0], [], []>} : vector<8x64xbf16>, vector<128x64xbf16>, vector<8x128xf32> -> vector<8x128xf32>
    %cst_15 = arith.constant 0.000000e+00 : bf16
    %15 = vector.broadcast %cst_15 : bf16 to vector<1024x72xbf16>
    %c0_16 = arith.constant 0 : index
    %c0_17 = arith.constant 0 : index
    %16 = vector.load %arg11[%c0_16, %c0_17] : memref<1024x72xbf16, #tpu.memory_space<vmem>>, vector<1024x72xbf16>
    tpu.vector_store %arg11[%c0_16, %c0_17], %15 {strides = array<i32>} : memref<1024x72xbf16, #tpu.memory_space<vmem>>, vector<1024x72xbf16>,
    %17 = vector.extract_strided_slice %13 {offsets = [0, 0], sizes = [128, 1], strides = [1, 1]} : vector<128x8xf32> to vector<128x1xf32>
    %18 = vector.extract_strided_slice %14 {offsets = [0, 0], sizes = [1, 128], strides = [1, 1]} : vector<8x128xf32> to vector<1x128xf32>
    %19 = vector.broadcast %17 : vector<128x1xf32> to vector<128x128xf32>
    %20 = vector.broadcast %18 : vector<1x128xf32> to vector<128x128xf32>
    %21 = arith.addf %19, %20 : vector<128x128xf32>
    %cst_18 = arith.constant 2.000000e-01 : f32
    %22 = vector.broadcast %cst_18 : f32 to vector<128x128xf32>
    %23 = arith.mulf %22, %21 : vector<128x128xf32>
    %24 = arith.maximumf %21, %23 : vector<128x128xf32>
    %25 = arith.addf %24, %5 : vector<128x128xf32>
    %cst_19 = arith.constant dense<0xFF800000> : vector<128xf32>
    %26 = vector.multi_reduction <maximumf>, %25, %cst_19 [1] : vector<128x128xf32> to vector<128xf32>
    %27 = vector.shape_cast %26 : vector<128xf32> to vector<128x1xf32>
    %28 = vector.broadcast %27 : vector<128x1xf32> to vector<128x128xf32>
    %29 = arith.subf %25, %28 : vector<128x128xf32>
    %30 = math.exp %29 : vector<128x128xf32>
    %31 = arith.truncf %30 : vector<128x128xf32> to vector<128x128xbf16>
    %c0_20 = arith.constant 0 : index
    %c0_21 = arith.constant 0 : index
    %32 = vector.load %arg10[%c0_20, %c0_21] : memref<128x1024xbf16, #tpu.memory_space<vmem>>, vector<128x128xbf16>
    tpu.vector_store %arg10[%c0_20, %c0_21], %31 {strides = array<i32>} : memref<128x1024xbf16, #tpu.memory_space<vmem>>, vector<128x128xbf16>,
    %33 = vector.extract_strided_slice %12 {offsets = [0, 0], sizes = [128, 8], strides = [1, 1]} : vector<128x64xbf16> to vector<128x8xbf16>
    %c0_22 = arith.constant 0 : index
    %c0_23 = arith.constant 0 : index
    %34 = vector.load %arg11[%c0_22, %c0_23] : memref<1024x72xbf16, #tpu.memory_space<vmem>>, vector<128x8xbf16>
    tpu.vector_store %arg11[%c0_22, %c0_23], %33 {strides = array<i32>} : memref<1024x72xbf16, #tpu.memory_space<vmem>>, vector<128x8xbf16>,
    %cst_24 = arith.constant 1.000000e+00 : bf16
    %35 = vector.broadcast %cst_24 : bf16 to vector<128x1xbf16>
    %c0_25 = arith.constant 0 : index
    %c64 = arith.constant 64 : index
    %36 = vector.load %arg11[%c0_25, %c64] : memref<1024x72xbf16, #tpu.memory_space<vmem>>, vector<128x1xbf16>
    tpu.vector_store %arg11[%c0_25, %c64], %35 {strides = array<i32>} : memref<1024x72xbf16, #tpu.memory_space<vmem>>, vector<128x1xbf16>,
    %37 = vector.extract_strided_slice %13 {offsets = [0, 1], sizes = [128, 1], strides = [1, 1]} : vector<128x8xf32> to vector<128x1xf32>
    %38 = vector.extract_strided_slice %14 {offsets = [1, 0], sizes = [1, 128], strides = [1, 1]} : vector<8x128xf32> to vector<1x128xf32>
    %39 = vector.broadcast %37 : vector<128x1xf32> to vector<128x128xf32>
    %40 = vector.broadcast %38 : vector<1x128xf32> to vector<128x128xf32>
    %41 = arith.addf %39, %40 : vector<128x128xf32>
    %cst_26 = arith.constant 2.000000e-01 : f32
    %42 = vector.broadcast %cst_26 : f32 to vector<128x128xf32>
    %43 = arith.mulf %42, %41 : vector<128x128xf32>
    %44 = arith.maximumf %41, %43 : vector<128x128xf32>
    %45 = arith.addf %44, %5 : vector<128x128xf32>
    %cst_27 = arith.constant dense<0xFF800000> : vector<128xf32>
    %46 = vector.multi_reduction <maximumf>, %45, %cst_27 [1] : vector<128x128xf32> to vector<128xf32>
    %47 = vector.shape_cast %46 : vector<128xf32> to vector<128x1xf32>
    %48 = vector.broadcast %47 : vector<128x1xf32> to vector<128x128xf32>
    %49 = arith.subf %45, %48 : vector<128x128xf32>
    %50 = math.exp %49 : vector<128x128xf32>
    %51 = arith.truncf %50 : vector<128x128xf32> to vector<128x128xbf16>
    %c0_28 = arith.constant 0 : index
    %c128 = arith.constant 128 : index
    %52 = vector.load %arg10[%c0_28, %c128] : memref<128x1024xbf16, #tpu.memory_space<vmem>>, vector<128x128xbf16>
    tpu.vector_store %arg10[%c0_28, %c128], %51 {strides = array<i32>} : memref<128x1024xbf16, #tpu.memory_space<vmem>>, vector<128x128xbf16>,
    %53 = vector.extract_strided_slice %12 {offsets = [0, 8], sizes = [128, 8], strides = [1, 1]} : vector<128x64xbf16> to vector<128x8xbf16>
    %c128_29 = arith.constant 128 : index
    %c8 = arith.constant 8 : index
    %54 = vector.load %arg11[%c128_29, %c8] : memref<1024x72xbf16, #tpu.memory_space<vmem>>, vector<128x8xbf16>
    tpu.vector_store %arg11[%c128_29, %c8], %53 {strides = array<i32>} : memref<1024x72xbf16, #tpu.memory_space<vmem>>, vector<128x8xbf16>,
    %cst_30 = arith.constant 1.000000e+00 : bf16
    %55 = vector.broadcast %cst_30 : bf16 to vector<128x1xbf16>
    %c128_31 = arith.constant 128 : index
    %c65 = arith.constant 65 : index
    %56 = vector.load %arg11[%c128_31, %c65] : memref<1024x72xbf16, #tpu.memory_space<vmem>>, vector<128x1xbf16>
    tpu.vector_store %arg11[%c128_31, %c65], %55 {strides = array<i32>} : memref<1024x72xbf16, #tpu.memory_space<vmem>>, vector<128x1xbf16>,
    %57 = vector.extract_strided_slice %13 {offsets = [0, 2], sizes = [128, 1], strides = [1, 1]} : vector<128x8xf32> to vector<128x1xf32>
    %58 = vector.extract_strided_slice %14 {offsets = [2, 0], sizes = [1, 128], strides = [1, 1]} : vector<8x128xf32> to vector<1x128xf32>
    %59 = vector.broadcast %57 : vector<128x1xf32> to vector<128x128xf32>
    %60 = vector.broadcast %58 : vector<1x128xf32> to vector<128x128xf32>
    %61 = arith.addf %59, %60 : vector<128x128xf32>
    %cst_32 = arith.constant 2.000000e-01 : f32
    %62 = vector.broadcast %cst_32 : f32 to vector<128x128xf32>
    %63 = arith.mulf %62, %61 : vector<128x128xf32>
    %64 = arith.maximumf %61, %63 : vector<128x128xf32>
    %65 = arith.addf %64, %5 : vector<128x128xf32>
    %cst_33 = arith.constant dense<0xFF800000> : vector<128xf32>
    %66 = vector.multi_reduction <maximumf>, %65, %cst_33 [1] : vector<128x128xf32> to vector<128xf32>
    %67 = vector.shape_cast %66 : vector<128xf32> to vector<128x1xf32>
    %68 = vector.broadcast %67 : vector<128x1xf32> to vector<128x128xf32>
    %69 = arith.subf %65, %68 : vector<128x128xf32>
    %70 = math.exp %69 : vector<128x128xf32>
    %71 = arith.truncf %70 : vector<128x128xf32> to vector<128x128xbf16>
    %c0_34 = arith.constant 0 : index
    %c256 = arith.constant 256 : index
    %72 = vector.load %arg10[%c0_34, %c256] : memref<128x1024xbf16, #tpu.memory_space<vmem>>, vector<128x128xbf16>
    tpu.vector_store %arg10[%c0_34, %c256], %71 {strides = array<i32>} : memref<128x1024xbf16, #tpu.memory_space<vmem>>, vector<128x128xbf16>,
    %73 = vector.extract_strided_slice %12 {offsets = [0, 16], sizes = [128, 8], strides = [1, 1]} : vector<128x64xbf16> to vector<128x8xbf16>
    %c256_35 = arith.constant 256 : index
    %c16 = arith.constant 16 : index
    %74 = vector.load %arg11[%c256_35, %c16] : memref<1024x72xbf16, #tpu.memory_space<vmem>>, vector<128x8xbf16>
    tpu.vector_store %arg11[%c256_35, %c16], %73 {strides = array<i32>} : memref<1024x72xbf16, #tpu.memory_space<vmem>>, vector<128x8xbf16>,
    %cst_36 = arith.constant 1.000000e+00 : bf16
    %75 = vector.broadcast %cst_36 : bf16 to vector<128x1xbf16>
    %c256_37 = arith.constant 256 : index
    %c66 = arith.constant 66 : index
    %76 = vector.load %arg11[%c256_37, %c66] : memref<1024x72xbf16, #tpu.memory_space<vmem>>, vector<128x1xbf16>
    tpu.vector_store %arg11[%c256_37, %c66], %75 {strides = array<i32>} : memref<1024x72xbf16, #tpu.memory_space<vmem>>, vector<128x1xbf16>,
    %77 = vector.extract_strided_slice %13 {offsets = [0, 3], sizes = [128, 1], strides = [1, 1]} : vector<128x8xf32> to vector<128x1xf32>
    %78 = vector.extract_strided_slice %14 {offsets = [3, 0], sizes = [1, 128], strides = [1, 1]} : vector<8x128xf32> to vector<1x128xf32>
    %79 = vector.broadcast %77 : vector<128x1xf32> to vector<128x128xf32>
    %80 = vector.broadcast %78 : vector<1x128xf32> to vector<128x128xf32>
    %81 = arith.addf %79, %80 : vector<128x128xf32>
    %cst_38 = arith.constant 2.000000e-01 : f32
    %82 = vector.broadcast %cst_38 : f32 to vector<128x128xf32>
    %83 = arith.mulf %82, %81 : vector<128x128xf32>
    %84 = arith.maximumf %81, %83 : vector<128x128xf32>
    %85 = arith.addf %84, %5 : vector<128x128xf32>
    %cst_39 = arith.constant dense<0xFF800000> : vector<128xf32>
    %86 = vector.multi_reduction <maximumf>, %85, %cst_39 [1] : vector<128x128xf32> to vector<128xf32>
    %87 = vector.shape_cast %86 : vector<128xf32> to vector<128x1xf32>
    %88 = vector.broadcast %87 : vector<128x1xf32> to vector<128x128xf32>
    %89 = arith.subf %85, %88 : vector<128x128xf32>
    %90 = math.exp %89 : vector<128x128xf32>
    %91 = arith.truncf %90 : vector<128x128xf32> to vector<128x128xbf16>
    %c0_40 = arith.constant 0 : index
    %c384 = arith.constant 384 : index
    %92 = vector.load %arg10[%c0_40, %c384] : memref<128x1024xbf16, #tpu.memory_space<vmem>>, vector<128x128xbf16>
    tpu.vector_store %arg10[%c0_40, %c384], %91 {strides = array<i32>} : memref<128x1024xbf16, #tpu.memory_space<vmem>>, vector<128x128xbf16>,
    %93 = vector.extract_strided_slice %12 {offsets = [0, 24], sizes = [128, 8], strides = [1, 1]} : vector<128x64xbf16> to vector<128x8xbf16>
    %c384_41 = arith.constant 384 : index
    %c24 = arith.constant 24 : index
    %94 = vector.load %arg11[%c384_41, %c24] : memref<1024x72xbf16, #tpu.memory_space<vmem>>, vector<128x8xbf16>
    tpu.vector_store %arg11[%c384_41, %c24], %93 {strides = array<i32>} : memref<1024x72xbf16, #tpu.memory_space<vmem>>, vector<128x8xbf16>,
    %cst_42 = arith.constant 1.000000e+00 : bf16
    %95 = vector.broadcast %cst_42 : bf16 to vector<128x1xbf16>
    %c384_43 = arith.constant 384 : index
    %c67 = arith.constant 67 : index
    %96 = vector.load %arg11[%c384_43, %c67] : memref<1024x72xbf16, #tpu.memory_space<vmem>>, vector<128x1xbf16>
    tpu.vector_store %arg11[%c384_43, %c67], %95 {strides = array<i32>} : memref<1024x72xbf16, #tpu.memory_space<vmem>>, vector<128x1xbf16>,
    %97 = vector.extract_strided_slice %13 {offsets = [0, 4], sizes = [128, 1], strides = [1, 1]} : vector<128x8xf32> to vector<128x1xf32>
    %98 = vector.extract_strided_slice %14 {offsets = [4, 0], sizes = [1, 128], strides = [1, 1]} : vector<8x128xf32> to vector<1x128xf32>
    %99 = vector.broadcast %97 : vector<128x1xf32> to vector<128x128xf32>
    %100 = vector.broadcast %98 : vector<1x128xf32> to vector<128x128xf32>
    %101 = arith.addf %99, %100 : vector<128x128xf32>
    %cst_44 = arith.constant 2.000000e-01 : f32
    %102 = vector.broadcast %cst_44 : f32 to vector<128x128xf32>
    %103 = arith.mulf %102, %101 : vector<128x128xf32>
    %104 = arith.maximumf %101, %103 : vector<128x128xf32>
    %105 = arith.addf %104, %5 : vector<128x128xf32>
    %cst_45 = arith.constant dense<0xFF800000> : vector<128xf32>
    %106 = vector.multi_reduction <maximumf>, %105, %cst_45 [1] : vector<128x128xf32> to vector<128xf32>
    %107 = vector.shape_cast %106 : vector<128xf32> to vector<128x1xf32>
    %108 = vector.broadcast %107 : vector<128x1xf32> to vector<128x128xf32>
    %109 = arith.subf %105, %108 : vector<128x128xf32>
    %110 = math.exp %109 : vector<128x128xf32>
    %111 = arith.truncf %110 : vector<128x128xf32> to vector<128x128xbf16>
    %c0_46 = arith.constant 0 : index
    %c512 = arith.constant 512 : index
    %112 = vector.load %arg10[%c0_46, %c512] : memref<128x1024xbf16, #tpu.memory_space<vmem>>, vector<128x128xbf16>
    tpu.vector_store %arg10[%c0_46, %c512], %111 {strides = array<i32>} : memref<128x1024xbf16, #tpu.memory_space<vmem>>, vector<128x128xbf16>,
    %113 = vector.extract_strided_slice %12 {offsets = [0, 32], sizes = [128, 8], strides = [1, 1]} : vector<128x64xbf16> to vector<128x8xbf16>
    %c512_47 = arith.constant 512 : index
    %c32 = arith.constant 32 : index
    %114 = vector.load %arg11[%c512_47, %c32] : memref<1024x72xbf16, #tpu.memory_space<vmem>>, vector<128x8xbf16>
    tpu.vector_store %arg11[%c512_47, %c32], %113 {strides = array<i32>} : memref<1024x72xbf16, #tpu.memory_space<vmem>>, vector<128x8xbf16>,
    %cst_48 = arith.constant 1.000000e+00 : bf16
    %115 = vector.broadcast %cst_48 : bf16 to vector<128x1xbf16>
    %c512_49 = arith.constant 512 : index
    %c68 = arith.constant 68 : index
    %116 = vector.load %arg11[%c512_49, %c68] : memref<1024x72xbf16, #tpu.memory_space<vmem>>, vector<128x1xbf16>
    tpu.vector_store %arg11[%c512_49, %c68], %115 {strides = array<i32>} : memref<1024x72xbf16, #tpu.memory_space<vmem>>, vector<128x1xbf16>,
    %117 = vector.extract_strided_slice %13 {offsets = [0, 5], sizes = [128, 1], strides = [1, 1]} : vector<128x8xf32> to vector<128x1xf32>
    %118 = vector.extract_strided_slice %14 {offsets = [5, 0], sizes = [1, 128], strides = [1, 1]} : vector<8x128xf32> to vector<1x128xf32>
    %119 = vector.broadcast %117 : vector<128x1xf32> to vector<128x128xf32>
    %120 = vector.broadcast %118 : vector<1x128xf32> to vector<128x128xf32>
    %121 = arith.addf %119, %120 : vector<128x128xf32>
    %cst_50 = arith.constant 2.000000e-01 : f32
    %122 = vector.broadcast %cst_50 : f32 to vector<128x128xf32>
    %123 = arith.mulf %122, %121 : vector<128x128xf32>
    %124 = arith.maximumf %121, %123 : vector<128x128xf32>
    %125 = arith.addf %124, %5 : vector<128x128xf32>
    %cst_51 = arith.constant dense<0xFF800000> : vector<128xf32>
    %126 = vector.multi_reduction <maximumf>, %125, %cst_51 [1] : vector<128x128xf32> to vector<128xf32>
    %127 = vector.shape_cast %126 : vector<128xf32> to vector<128x1xf32>
    %128 = vector.broadcast %127 : vector<128x1xf32> to vector<128x128xf32>
    %129 = arith.subf %125, %128 : vector<128x128xf32>
    %130 = math.exp %129 : vector<128x128xf32>
    %131 = arith.truncf %130 : vector<128x128xf32> to vector<128x128xbf16>
    %c0_52 = arith.constant 0 : index
    %c640 = arith.constant 640 : index
    %132 = vector.load %arg10[%c0_52, %c640] : memref<128x1024xbf16, #tpu.memory_space<vmem>>, vector<128x128xbf16>
    tpu.vector_store %arg10[%c0_52, %c640], %131 {strides = array<i32>} : memref<128x1024xbf16, #tpu.memory_space<vmem>>, vector<128x128xbf16>,
    %133 = vector.extract_strided_slice %12 {offsets = [0, 40], sizes = [128, 8], strides = [1, 1]} : vector<128x64xbf16> to vector<128x8xbf16>
    %c640_53 = arith.constant 640 : index
    %c40 = arith.constant 40 : index
    %134 = vector.load %arg11[%c640_53, %c40] : memref<1024x72xbf16, #tpu.memory_space<vmem>>, vector<128x8xbf16>
    tpu.vector_store %arg11[%c640_53, %c40], %133 {strides = array<i32>} : memref<1024x72xbf16, #tpu.memory_space<vmem>>, vector<128x8xbf16>,
    %cst_54 = arith.constant 1.000000e+00 : bf16
    %135 = vector.broadcast %cst_54 : bf16 to vector<128x1xbf16>
    %c640_55 = arith.constant 640 : index
    %c69 = arith.constant 69 : index
    %136 = vector.load %arg11[%c640_55, %c69] : memref<1024x72xbf16, #tpu.memory_space<vmem>>, vector<128x1xbf16>
    tpu.vector_store %arg11[%c640_55, %c69], %135 {strides = array<i32>} : memref<1024x72xbf16, #tpu.memory_space<vmem>>, vector<128x1xbf16>,
    %137 = vector.extract_strided_slice %13 {offsets = [0, 6], sizes = [128, 1], strides = [1, 1]} : vector<128x8xf32> to vector<128x1xf32>
    %138 = vector.extract_strided_slice %14 {offsets = [6, 0], sizes = [1, 128], strides = [1, 1]} : vector<8x128xf32> to vector<1x128xf32>
    %139 = vector.broadcast %137 : vector<128x1xf32> to vector<128x128xf32>
    %140 = vector.broadcast %138 : vector<1x128xf32> to vector<128x128xf32>
    %141 = arith.addf %139, %140 : vector<128x128xf32>
    %cst_56 = arith.constant 2.000000e-01 : f32
    %142 = vector.broadcast %cst_56 : f32 to vector<128x128xf32>
    %143 = arith.mulf %142, %141 : vector<128x128xf32>
    %144 = arith.maximumf %141, %143 : vector<128x128xf32>
    %145 = arith.addf %144, %5 : vector<128x128xf32>
    %cst_57 = arith.constant dense<0xFF800000> : vector<128xf32>
    %146 = vector.multi_reduction <maximumf>, %145, %cst_57 [1] : vector<128x128xf32> to vector<128xf32>
    %147 = vector.shape_cast %146 : vector<128xf32> to vector<128x1xf32>
    %148 = vector.broadcast %147 : vector<128x1xf32> to vector<128x128xf32>
    %149 = arith.subf %145, %148 : vector<128x128xf32>
    %150 = math.exp %149 : vector<128x128xf32>
    %151 = arith.truncf %150 : vector<128x128xf32> to vector<128x128xbf16>
    %c0_58 = arith.constant 0 : index
    %c768 = arith.constant 768 : index
    %152 = vector.load %arg10[%c0_58, %c768] : memref<128x1024xbf16, #tpu.memory_space<vmem>>, vector<128x128xbf16>
    tpu.vector_store %arg10[%c0_58, %c768], %151 {strides = array<i32>} : memref<128x1024xbf16, #tpu.memory_space<vmem>>, vector<128x128xbf16>,
    %153 = vector.extract_strided_slice %12 {offsets = [0, 48], sizes = [128, 8], strides = [1, 1]} : vector<128x64xbf16> to vector<128x8xbf16>
    %c768_59 = arith.constant 768 : index
    %c48 = arith.constant 48 : index
    %154 = vector.load %arg11[%c768_59, %c48] : memref<1024x72xbf16, #tpu.memory_space<vmem>>, vector<128x8xbf16>
    tpu.vector_store %arg11[%c768_59, %c48], %153 {strides = array<i32>} : memref<1024x72xbf16, #tpu.memory_space<vmem>>, vector<128x8xbf16>,
    %cst_60 = arith.constant 1.000000e+00 : bf16
    %155 = vector.broadcast %cst_60 : bf16 to vector<128x1xbf16>
    %c768_61 = arith.constant 768 : index
    %c70 = arith.constant 70 : index
    %156 = vector.load %arg11[%c768_61, %c70] : memref<1024x72xbf16, #tpu.memory_space<vmem>>, vector<128x1xbf16>
    tpu.vector_store %arg11[%c768_61, %c70], %155 {strides = array<i32>} : memref<1024x72xbf16, #tpu.memory_space<vmem>>, vector<128x1xbf16>,
    %157 = vector.extract_strided_slice %13 {offsets = [0, 7], sizes = [128, 1], strides = [1, 1]} : vector<128x8xf32> to vector<128x1xf32>
    %158 = vector.extract_strided_slice %14 {offsets = [7, 0], sizes = [1, 128], strides = [1, 1]} : vector<8x128xf32> to vector<1x128xf32>
    %159 = vector.broadcast %157 : vector<128x1xf32> to vector<128x128xf32>
    %160 = vector.broadcast %158 : vector<1x128xf32> to vector<128x128xf32>
    %161 = arith.addf %159, %160 : vector<128x128xf32>
    %cst_62 = arith.constant 2.000000e-01 : f32
    %162 = vector.broadcast %cst_62 : f32 to vector<128x128xf32>
    %163 = arith.mulf %162, %161 : vector<128x128xf32>
    %164 = arith.maximumf %161, %163 : vector<128x128xf32>
    %165 = arith.addf %164, %5 : vector<128x128xf32>
    %cst_63 = arith.constant dense<0xFF800000> : vector<128xf32>
    %166 = vector.multi_reduction <maximumf>, %165, %cst_63 [1] : vector<128x128xf32> to vector<128xf32>
    %167 = vector.shape_cast %166 : vector<128xf32> to vector<128x1xf32>
    %168 = vector.broadcast %167 : vector<128x1xf32> to vector<128x128xf32>
    %169 = arith.subf %165, %168 : vector<128x128xf32>
    %170 = math.exp %169 : vector<128x128xf32>
    %171 = arith.truncf %170 : vector<128x128xf32> to vector<128x128xbf16>
    %c0_64 = arith.constant 0 : index
    %c896 = arith.constant 896 : index
    %172 = vector.load %arg10[%c0_64, %c896] : memref<128x1024xbf16, #tpu.memory_space<vmem>>, vector<128x128xbf16>
    tpu.vector_store %arg10[%c0_64, %c896], %171 {strides = array<i32>} : memref<128x1024xbf16, #tpu.memory_space<vmem>>, vector<128x128xbf16>,
    %173 = vector.extract_strided_slice %12 {offsets = [0, 56], sizes = [128, 8], strides = [1, 1]} : vector<128x64xbf16> to vector<128x8xbf16>
    %c896_65 = arith.constant 896 : index
    %c56 = arith.constant 56 : index
    %174 = vector.load %arg11[%c896_65, %c56] : memref<1024x72xbf16, #tpu.memory_space<vmem>>, vector<128x8xbf16>
    tpu.vector_store %arg11[%c896_65, %c56], %173 {strides = array<i32>} : memref<1024x72xbf16, #tpu.memory_space<vmem>>, vector<128x8xbf16>,
    %cst_66 = arith.constant 1.000000e+00 : bf16
    %175 = vector.broadcast %cst_66 : bf16 to vector<128x1xbf16>
    %c896_67 = arith.constant 896 : index
    %c71 = arith.constant 71 : index
    %176 = vector.load %arg11[%c896_67, %c71] : memref<1024x72xbf16, #tpu.memory_space<vmem>>, vector<128x1xbf16>
    tpu.vector_store %arg11[%c896_67, %c71], %175 {strides = array<i32>} : memref<1024x72xbf16, #tpu.memory_space<vmem>>, vector<128x1xbf16>,
    %c0_68 = arith.constant 0 : index
    %c0_69 = arith.constant 0 : index
    %177 = vector.load %arg10[%c0_68, %c0_69] : memref<128x1024xbf16, #tpu.memory_space<vmem>>, vector<128x1024xbf16>
    %c0_70 = arith.constant 0 : index
    %c0_71 = arith.constant 0 : index
    %178 = vector.load %arg11[%c0_70, %c0_71] : memref<1024x72xbf16, #tpu.memory_space<vmem>>, vector<1024x72xbf16>
    %cst_72 = arith.constant dense<0.000000e+00> : vector<128x72xf32>
    %179 = tpu.matmul %177, %178, %cst_72 {dimension_numbers = #tpu.dot_dimension_numbers<[1], [0], [0], [1], [0, 0, 1, 1], [], []>} : vector<128x1024xbf16>, vector<1024x72xbf16>, vector<128x72xf32> -> vector<128x72xf32>
    %180 = vector.extract_strided_slice %179 {offsets = [0, 0], sizes = [128, 64], strides = [1, 1]} : vector<128x72xf32> to vector<128x64xf32>
    %181 = vector.extract_strided_slice %179 {offsets = [0, 64], sizes = [128, 8], strides = [1, 1]} : vector<128x72xf32> to vector<128x8xf32>
    %182 = tpu.reciprocal %181 {approx = true} : vector<128x8xf32> -> vector<128x8xf32>
    %cst_73 = arith.constant dense<0.000000e+00> : vector<128x64xf32>
    %183 = tpu.matmul %182, %10, %cst_73 {dimension_numbers = #tpu.dot_dimension_numbers<[1], [0], [0], [1], [0, 0, 1, 1], [], []>} : vector<128x8xf32>, vector<8x64xf32>, vector<128x64xf32> -> vector<128x64xf32>
    %184 = arith.mulf %180, %183 : vector<128x64xf32>
    %cst_74 = arith.constant 0.000000e+00 : f32
    %185 = vector.broadcast %cst_74 : f32 to vector<128x64xf32>
    %186 = arith.cmpf ogt, %184, %185 : vector<128x64xf32>
    %cst_75 = arith.constant 0.000000e+00 : f32
    %187 = vector.broadcast %cst_75 : f32 to vector<128x64xf32>
    %188 = arith.minimumf %184, %187 : vector<128x64xf32>
    %189 = math.exp %188 : vector<128x64xf32>
    %cst_76 = arith.constant 1.000000e+00 : f32
    %190 = vector.broadcast %cst_76 : f32 to vector<128x64xf32>
    %191 = arith.subf %189, %190 : vector<128x64xf32>
    %192 = arith.select %186, %184, %191 : vector<128x64xi1>, vector<128x64xf32>
    %193 = arith.truncf %192 : vector<128x64xf32> to vector<128x64xbf16>
    %c0_77 = arith.constant 0 : index
    %c0_78 = arith.constant 0 : index
    %194 = vector.load %arg6[%c0_77, %c0_78] : memref<64x8xbf16, #tpu.memory_space<vmem>>, vector<64x8xbf16>
    %c0_79 = arith.constant 0 : index
    %c0_80 = arith.constant 0 : index
    %195 = vector.load %arg7[%c0_79, %c0_80] : memref<1x8xf32, #tpu.memory_space<vmem>>, vector<1x8xf32>
    %c0_81 = arith.constant 0 : index
    %c0_82 = arith.constant 0 : index
    %196 = vector.load %arg8[%c0_81, %c0_82] : memref<1x8xf32, #tpu.memory_space<vmem>>, vector<1x8xf32>
    %cst_83 = arith.constant dense<0.000000e+00> : vector<128x8xf32>
    %197 = tpu.matmul %193, %194, %cst_83 {dimension_numbers = #tpu.dot_dimension_numbers<[1], [0], [0], [1], [0, 0, 1, 1], [], []>} : vector<128x64xbf16>, vector<64x8xbf16>, vector<128x8xf32> -> vector<128x8xf32>
    %198 = vector.broadcast %196 : vector<1x8xf32> to vector<128x8xf32>
    %199 = arith.mulf %197, %198 : vector<128x8xf32>
    %cst_84 = arith.constant dense<0.000000e+00> : vector<128xf32>
    %200 = vector.multi_reduction <add>, %199, %cst_84 [1] : vector<128x8xf32> to vector<128xf32>
    %201 = vector.shape_cast %200 : vector<128xf32> to vector<128x1xf32>
    %202 = vector.broadcast %195 : vector<1x8xf32> to vector<128x8xf32>
    %203 = arith.mulf %197, %202 : vector<128x8xf32>
    %cst_85 = arith.constant dense<0.000000e+00> : vector<128xf32>
    %204 = vector.multi_reduction <add>, %203, %cst_85 [1] : vector<128x8xf32> to vector<128xf32>
    %205 = vector.shape_cast %204 : vector<128xf32> to vector<128x1xf32>
    %206 = tpu.transpose %205, [1, 0] : vector<128x1xf32> -> vector<1x128xf32>
    %207 = vector.broadcast %201 : vector<128x1xf32> to vector<128x128xf32>
    %208 = vector.broadcast %206 : vector<1x128xf32> to vector<128x128xf32>
    %209 = arith.addf %207, %208 : vector<128x128xf32>
    %cst_86 = arith.constant 2.000000e-01 : f32
    %210 = vector.broadcast %cst_86 : f32 to vector<128x128xf32>
    %211 = arith.mulf %210, %209 : vector<128x128xf32>
    %212 = arith.maximumf %209, %211 : vector<128x128xf32>
    %213 = arith.addf %212, %5 : vector<128x128xf32>
    %cst_87 = arith.constant dense<0xFF800000> : vector<128xf32>
    %214 = vector.multi_reduction <maximumf>, %213, %cst_87 [1] : vector<128x128xf32> to vector<128xf32>
    %215 = vector.shape_cast %214 : vector<128xf32> to vector<128x1xf32>
    %216 = vector.broadcast %215 : vector<128x1xf32> to vector<128x128xf32>
    %217 = arith.subf %213, %216 : vector<128x128xf32>
    %218 = math.exp %217 : vector<128x128xf32>
    %cst_88 = arith.constant dense<0.000000e+00> : vector<128xf32>
    %219 = vector.multi_reduction <add>, %218, %cst_88 [1] : vector<128x128xf32> to vector<128xf32>
    %220 = vector.shape_cast %219 : vector<128xf32> to vector<128x1xf32>
    %221 = arith.truncf %218 : vector<128x128xf32> to vector<128x128xbf16>
    %222 = arith.truncf %197 : vector<128x8xf32> to vector<128x8xbf16>
    %cst_89 = arith.constant dense<0.000000e+00> : vector<128x8xf32>
    %223 = tpu.matmul %221, %222, %cst_89 {dimension_numbers = #tpu.dot_dimension_numbers<[1], [0], [0], [1], [0, 0, 1, 1], [], []>} : vector<128x128xbf16>, vector<128x8xbf16>, vector<128x8xf32> -> vector<128x8xf32>
    %224 = tpu.reciprocal %220 {approx = true} : vector<128x1xf32> -> vector<128x1xf32>
    %225 = vector.broadcast %224 : vector<128x1xf32> to vector<128x8xf32>
    %226 = arith.mulf %223, %225 : vector<128x8xf32>
    %227 = tpu.iota {dimensions = array<i32: 1>} : vector<1x8xi32>
    %c7_i32 = arith.constant 7 : i32
    %228 = vector.broadcast %c7_i32 : i32 to vector<1x8xi32>
    %229 = arith.cmpi slt, %227, %228 : vector<1x8xi32>
    %cst_90 = arith.constant -1.000000e+30 : f32
    %230 = vector.shape_cast %229 : vector<1x8xi1> to vector<1x8xi1>
    %231 = vector.broadcast %230 : vector<1x8xi1> to vector<128x8xi1>
    %232 = vector.broadcast %cst_90 : f32 to vector<128x8xf32>
    %233 = arith.select %231, %226, %232 : vector<128x8xi1>, vector<128x8xf32>
    %cst_91 = arith.constant dense<0xFF800000> : vector<128xf32>
    %234 = vector.multi_reduction <maximumf>, %233, %cst_91 [1] : vector<128x8xf32> to vector<128xf32>
    %235 = vector.shape_cast %234 : vector<128xf32> to vector<128x1xf32>
    %236 = vector.broadcast %235 : vector<128x1xf32> to vector<128x8xf32>
    %237 = arith.subf %233, %236 : vector<128x8xf32>
    %238 = math.exp %237 : vector<128x8xf32>
    %cst_92 = arith.constant dense<0.000000e+00> : vector<128xf32>
    %239 = vector.multi_reduction <add>, %238, %cst_92 [1] : vector<128x8xf32> to vector<128xf32>
    %240 = vector.shape_cast %239 : vector<128xf32> to vector<128x1xf32>
    %241 = math.log %240 : vector<128x1xf32>
    %242 = vector.broadcast %241 : vector<128x1xf32> to vector<128x8xf32>
    %243 = arith.subf %237, %242 : vector<128x8xf32>
    %c0_93 = arith.constant 0 : index
    %c0_94 = arith.constant 0 : index
    %244 = vector.load %arg9[%c0_93, %c0_94] : memref<128x8xf32, #tpu.memory_space<vmem>>, vector<128x8xf32>
    tpu.vector_store %arg9[%c0_93, %c0_94], %243 {strides = array<i32>} : memref<128x8xf32, #tpu.memory_space<vmem>>, vector<128x8xf32>,
    return
  }
}

</mosaic_0001>

<llo_original>
// kernel: _forward.1
$region0: #{_forward.1}
  #allocation0 [shape = 'u32[]', space=smem, size = 0x4, offset = 0x4, fixed_abs, tag = 'smem constant byte address 0x4 - core index']
  #allocation1 [shape = 'u32[72,128]{1,0:T(1,128)}', space=vmem, size = 0x9000, scoped, tag = 'internal scratch']
  #allocation2 [shape = 'bf16[128,1024]{1,0:T(8,128)(2,1)}', space=vmem, size = 0x40000, scoped, tag = 'scratch operand']
  #allocation3 [shape = 'bf16[1024,72]{1,0:T(8,128)(2,1)}', space=vmem, size = 0x40000, scoped, tag = 'scratch operand']
  %s0 = inlined_call_operand.vmem [shape: bf16[128,32], index: 0, kind: input, shape index: {}]
  %s1 = inlined_call_operand.vmem [shape: s8[128,128], index: 1, kind: input, shape index: {}]
  %s2 = inlined_call_operand.vmem [shape: bf16[32,64], index: 2, kind: input, shape index: {}]
  %s3 = inlined_call_operand.vmem [shape: bf16[8,64], index: 3, kind: input, shape index: {}]
  %s4 = inlined_call_operand.vmem [shape: bf16[8,64], index: 4, kind: input, shape index: {}]
  %s5 = inlined_call_operand.vmem [shape: f32[8,64], index: 5, kind: input, shape index: {}]
  %s6 = inlined_call_operand.vmem [shape: bf16[64,8], index: 6, kind: input, shape index: {}]
  %s7 = inlined_call_operand.vmem [shape: f32[1,8], index: 7, kind: input, shape index: {}]
  %s8 = inlined_call_operand.vmem [shape: f32[1,8], index: 8, kind: input, shape index: {}]
  %s9 = inlined_call_operand.vmem [shape: f32[128,8], index: 9, kind: output, shape index: {}]
  %s10 = sld [smem:[#allocation0]]
  $region46: #{_forward.1} parent=0
    _
  %s12 = ssub.s32 1, %s10
  %s13 = scalar_select 0, %s12, %s10
  // Predicated region
  $region2: #{_forward.1} parent=0 // pred_check
    _
  $region3: #{_forward.1} parent=0 // pred_check_branch
    %15 = sbr.rel (0) target = $region5
  $region4: #{_forward.1} parent=0 // pred_region
    _
  $region5: #{_forward.1} parent=0 // pred_fallthru
    _
  // Predicated region
  $region6: #{_forward.1} parent=0 // pred_check
    _
  $region7: #{_forward.1} parent=0 // pred_check_branch
    %17 = sbr.rel (0) target = $region9
  $region8: #{_forward.1} parent=0 // pred_region
    _
  $region9: #{_forward.1} parent=0 // pred_fallthru
    _
  // Predicated region
  $region10: #{_forward.1} parent=0 // pred_check
    _
  $region11: #{_forward.1} parent=0 // pred_check_branch
    %19 = sbr.rel (0) target = $region13
  $region12: #{_forward.1} parent=0 // pred_region
    _
  $region13: #{_forward.1} parent=0 // pred_fallthru
    _
  // Predicated region
  $region14: #{_forward.1} parent=0 // pred_check
    _
  $region15: #{_forward.1} parent=0 // pred_check_branch
    %21 = sbr.rel (0) target = $region17
  $region16: #{_forward.1} parent=0 // pred_region
    _
  $region17: #{_forward.1} parent=0 // pred_fallthru
    _
  // Predicated region
  $region18: #{_forward.1} parent=0 // pred_check
    _
  $region19: #{_forward.1} parent=0 // pred_check_branch
    %23 = sbr.rel (0) target = $region21
  $region20: #{_forward.1} parent=0 // pred_region
    _
  $region21: #{_forward.1} parent=0 // pred_fallthru
    _
  // Predicated region
  $region22: #{_forward.1} parent=0 // pred_check
    _
  $region23: #{_forward.1} parent=0 // pred_check_branch
    %25 = sbr.rel (0) target = $region25
  $region24: #{_forward.1} parent=0 // pred_region
    _
  $region25: #{_forward.1} parent=0 // pred_fallthru
    _
  // Predicated region
  $region26: #{_forward.1} parent=0 // pred_check
    _
  $region27: #{_forward.1} parent=0 // pred_check_branch
    %27 = sbr.rel (0) target = $region29
  $region28: #{_forward.1} parent=0 // pred_region
    _
  $region29: #{_forward.1} parent=0 // pred_fallthru
    _
  // Predicated region
  $region30: #{_forward.1} parent=0 // pred_check
    _
  $region31: #{_forward.1} parent=0 // pred_check_branch
    %29 = sbr.rel (0) target = $region33
  $region32: #{_forward.1} parent=0 // pred_region
    _
  $region33: #{_forward.1} parent=0 // pred_fallthru
    _
  // Predicated region
  $region34: #{_forward.1} parent=0 // pred_check
    _
  $region35: #{_forward.1} parent=0 // pred_check_branch
    %31 = sbr.rel (0) target = $region37
  $region36: #{_forward.1} parent=0 // pred_region
    _
  $region37: #{_forward.1} parent=0 // pred_fallthru
    _
  %v34 = vld [vmem:[%s1] sm:$0xff]
  %v35 = vld [vmem:[%s1 + $0x8] sm:$0xff]
  %v36 = vld [vmem:[%s1 + $0x10] sm:$0xff]
  %v37 = vld [vmem:[%s1 + $0x18] sm:$0xff]
  %v38 = vunpack.c.0.s8 %v34
  %v39 = vunpack.c.1.s8 %v34
  %v40 = vunpack.c.2.s8 %v34
  %v41 = vunpack.c.3.s8 %v34
  %v42 = vunpack.c.0.s8 %v35
  %v43 = vunpack.c.1.s8 %v35
  %v44 = vunpack.c.2.s8 %v35
  %v45 = vunpack.c.3.s8 %v35
  %v46 = vunpack.c.0.s8 %v36
  %v47 = vunpack.c.1.s8 %v36
  %v48 = vunpack.c.2.s8 %v36
  %v49 = vunpack.c.3.s8 %v36
  %v50 = vunpack.c.0.s8 %v37
  %v51 = vunpack.c.1.s8 %v37
  %v52 = vunpack.c.2.s8 %v37
  %v53 = vunpack.c.3.s8 %v37
  %v54 = vcvt.s32.f32 %v38
  %v55 = vcvt.s32.f32 %v39
  %v56 = vcvt.s32.f32 %v40
  %v57 = vcvt.s32.f32 %v41
  %v58 = vcvt.s32.f32 %v42
  %v59 = vcvt.s32.f32 %v43
  %v60 = vcvt.s32.f32 %v44
  %v61 = vcvt.s32.f32 %v45
  %v62 = vcvt.s32.f32 %v46
  %v63 = vcvt.s32.f32 %v47
  %v64 = vcvt.s32.f32 %v48
  %v65 = vcvt.s32.f32 %v49
  %v66 = vcvt.s32.f32 %v50
  %v67 = vcvt.s32.f32 %v51
  %v68 = vcvt.s32.f32 %v52
  %v69 = vcvt.s32.f32 %v53
  %v70 = vsub.f32 %v54, 1.0
  %v71 = vsub.f32 %v55, 1.0
  %v72 = vsub.f32 %v56, 1.0
  %v73 = vsub.f32 %v57, 1.0
  %v74 = vsub.f32 %v58, 1.0
  %v75 = vsub.f32 %v59, 1.0
  %v76 = vsub.f32 %v60, 1.0
  %v77 = vsub.f32 %v61, 1.0
  %v78 = vsub.f32 %v62, 1.0
  %v79 = vsub.f32 %v63, 1.0
  %v80 = vsub.f32 %v64, 1.0
  %v81 = vsub.f32 %v65, 1.0
  %v82 = vsub.f32 %v66, 1.0
  %v83 = vsub.f32 %v67, 1.0
  %v84 = vsub.f32 %v68, 1.0
  %v85 = vsub.f32 %v69, 1.0
  %v86 = vmul.f32 %v70, 1e+30
  %v87 = vmul.f32 %v71, 1e+30
  %v88 = vmul.f32 %v72, 1e+30
  %v89 = vmul.f32 %v73, 1e+30
  %v90 = vmul.f32 %v74, 1e+30
  %v91 = vmul.f32 %v75, 1e+30
  %v92 = vmul.f32 %v76, 1e+30
  %v93 = vmul.f32 %v77, 1e+30
  %v94 = vmul.f32 %v78, 1e+30
  %v95 = vmul.f32 %v79, 1e+30
  %v96 = vmul.f32 %v80, 1e+30
  %v97 = vmul.f32 %v81, 1e+30
  %v98 = vmul.f32 %v82, 1e+30
  %v99 = vmul.f32 %v83, 1e+30
  %v100 = vmul.f32 %v84, 1e+30
  %v101 = vmul.f32 %v85, 1e+30
  %v102 = vld [vmem:[%s0] sm:$0xf]
  %v103 = vld [vmem:[%s0 + $0x4] sm:$0xf]
  %v104 = vld [vmem:[%s0 + $0x8] sm:$0xf]
  %v105 = vld [vmem:[%s0 + $0xc] sm:$0xf]
  %v106 = vld [vmem:[%s0 + $0x10] sm:$0xf]
  %v107 = vld [vmem:[%s0 + $0x14] sm:$0xf]
  %v108 = vld [vmem:[%s0 + $0x18] sm:$0xf]
  %v109 = vld [vmem:[%s0 + $0x1c] sm:$0xf]
  %v110 = vld [vmem:[%s0 + $0x20] sm:$0xf]
  %v111 = vld [vmem:[%s0 + $0x24] sm:$0xf]
  %v112 = vld [vmem:[%s0 + $0x28] sm:$0xf]
  %v113 = vld [vmem:[%s0 + $0x2c] sm:$0xf]
  %v114 = vld [vmem:[%s0 + $0x30] sm:$0xf]
  %v115 = vld [vmem:[%s0 + $0x34] sm:$0xf]
  %v116 = vld [vmem:[%s0 + $0x38] sm:$0xf]
  %v117 = vld [vmem:[%s0 + $0x3c] sm:$0xf]
  %v118 = vld [vmem:[%s2] sm:$0xf]
  %v119 = vld [vmem:[%s2 + $0x4] sm:$0xf]
  %v120 = vld [vmem:[%s2 + $0x8] sm:$0xf]
  %v121 = vld [vmem:[%s2 + $0xc] sm:$0xf]
  %v122 = vld [vmem:[%s3] sm:$0xf]
  %v123 = vld [vmem:[%s4] sm:$0xf]
  %v124 = vld [vmem:[%s5] sm:$0xff]
  %v141 = vunpack.c.l.b16 %v102
  %v142 = vunpack.c.l.b16 %v103
  %v143 = vunpack.c.l.b16 %v104
  %v144 = vunpack.c.l.b16 %v105
  %v145 = vunpack.c.l.b16 %v106
  %v146 = vunpack.c.l.b16 %v107
  %v147 = vunpack.c.l.b16 %v108
  %v148 = vunpack.c.l.b16 %v109
  %v149 = vunpack.c.l.b16 %v110
  %v150 = vunpack.c.l.b16 %v111
  %v151 = vunpack.c.l.b16 %v112
  %v152 = vunpack.c.l.b16 %v113
  %v153 = vunpack.c.l.b16 %v114
  %v154 = vunpack.c.l.b16 %v115
  %v155 = vunpack.c.l.b16 %v116
  %v156 = vunpack.c.l.b16 %v117
  %v157 = vpack.c.b16 %v142, %v141
  %v158 = vpack.c.b16 %v144, %v143
  %v159 = vpack.c.b16 %v146, %v145
  %v160 = vpack.c.b16 %v148, %v147
  %v161 = vpack.c.b16 %v150, %v149
  %v162 = vpack.c.b16 %v152, %v151
  %v163 = vpack.c.b16 %v154, %v153
  %v164 = vpack.c.b16 %v156, %v155
  %v169 = vunpack.c.l.b16 %v118
  %v170 = vunpack.c.l.b16 %v119
  %v171 = vunpack.c.l.b16 %v120
  %v172 = vunpack.c.l.b16 %v121
  %v173 = vpack.c.b16 %v170, %v169
  %v174 = vpack.c.b16 %v172, %v171
  %vm177 = vcmask 261120
  %v179 = vsel %vm177, %v157, 0
  %v182 = vsel %vm177, %v158, 0
  %v185 = vsel %vm177, %v159, 0
  %v188 = vsel %vm177, %v160, 0
  %v191 = vsel %vm177, %v161, 0
  %v194 = vsel %vm177, %v162, 0
  %v197 = vsel %vm177, %v163, 0
  %v200 = vsel %vm177, %v164, 0
  %202 = vmatpush.bf16.msra.mxu0 0
  %203 = vmatpush.bf16.msra.mxu0 0
  %204 = vmatpush.bf16.msra.mxu0 0
  %205 = vmatpush.bf16.msra.mxu0 0
  %206 = vmatpush.bf16.msra.mxu0 0
  %207 = vmatpush.bf16.msra.mxu0 0
  %208 = vmatpush.bf16.msra.mxu0 %v174
  %209 = vmatpush.bf16.msra.mxu0 %v173
  %210 = vmatmul.bf16.gmra.mxu0 %v179
  %v211 = vpop.f32.mrf.mxu0
  %v212 = vadd.f32 0.0, %v211
  %v213 = vpop.f32.mrf.mxu0
  %v214 = vadd.f32 0.0, %v213
  %215 = vmatmul.bf16.gmra.mxu0 %v182
  %v216 = vpop.f32.mrf.mxu0
  %v217 = vadd.f32 0.0, %v216
  %v218 = vpop.f32.mrf.mxu0
  %v219 = vadd.f32 0.0, %v218
  %220 = vmatmul.bf16.gmra.mxu0 %v185
  %v221 = vpop.f32.mrf.mxu0
  %v222 = vadd.f32 0.0, %v221
  %v223 = vpop.f32.mrf.mxu0
  %v224 = vadd.f32 0.0, %v223
  %225 = vmatmul.bf16.gmra.mxu0 %v188
  %v226 = vpop.f32.mrf.mxu0
  %v227 = vadd.f32 0.0, %v226
  %v228 = vpop.f32.mrf.mxu0
  %v229 = vadd.f32 0.0, %v228
  %230 = vmatmul.bf16.gmra.mxu0 %v191
  %v231 = vpop.f32.mrf.mxu0
  %v232 = vadd.f32 0.0, %v231
  %v233 = vpop.f32.mrf.mxu0
  %v234 = vadd.f32 0.0, %v233
  %235 = vmatmul.bf16.gmra.mxu0 %v194
  %v236 = vpop.f32.mrf.mxu0
  %v237 = vadd.f32 0.0, %v236
  %v238 = vpop.f32.mrf.mxu0
  %v239 = vadd.f32 0.0, %v238
  %240 = vmatmul.bf16.gmra.mxu0 %v197
  %v241 = vpop.f32.mrf.mxu0
  %v242 = vadd.f32 0.0, %v241
  %v243 = vpop.f32.mrf.mxu0
  %v244 = vadd.f32 0.0, %v243
  %245 = vmatmul.bf16.gmra.mxu0 %v200
  %v246 = vpop.f32.mrf.mxu0
  %v247 = vadd.f32 0.0, %v246
  %v248 = vpop.f32.mrf.mxu0
  %v249 = vadd.f32 0.0, %v248
  %250 = vdwg.mxu0
  %v251 = vpack.c.bf16 %v212, %v212
  %v252 = vpack.c.bf16 %v214, %v214
  %v253 = vpack.c.bf16 %v217, %v217
  %v254 = vpack.c.bf16 %v219, %v219
  %v255 = vpack.c.bf16 %v222, %v222
  %v256 = vpack.c.bf16 %v224, %v224
  %v257 = vpack.c.bf16 %v227, %v227
  %v258 = vpack.c.bf16 %v229, %v229
  %v259 = vpack.c.bf16 %v232, %v232
  %v260 = vpack.c.bf16 %v234, %v234
  %v261 = vpack.c.bf16 %v237, %v237
  %v262 = vpack.c.bf16 %v239, %v239
  %v263 = vpack.c.bf16 %v242, %v242
  %v264 = vpack.c.bf16 %v244, %v244
  %v265 = vpack.c.bf16 %v247, %v247
  %v266 = vpack.c.bf16 %v249, %v249
  %v283 = vunpack.c.l.b16 %v251
  %v284 = vunpack.c.l.b16 %v252
  %v285 = vunpack.c.l.b16 %v253
  %v286 = vunpack.c.l.b16 %v254
  %v287 = vunpack.c.l.b16 %v255
  %v288 = vunpack.c.l.b16 %v256
  %v289 = vunpack.c.l.b16 %v257
  %v290 = vunpack.c.l.b16 %v258
  %v291 = vunpack.c.l.b16 %v259
  %v292 = vunpack.c.l.b16 %v260
  %v293 = vunpack.c.l.b16 %v261
  %v294 = vunpack.c.l.b16 %v262
  %v295 = vunpack.c.l.b16 %v263
  %v296 = vunpack.c.l.b16 %v264
  %v297 = vunpack.c.l.b16 %v265
  %v298 = vunpack.c.l.b16 %v266
  %v299 = vpack.c.b16 %v284, %v283
  %v300 = vpack.c.b16 %v286, %v285
  %v301 = vpack.c.b16 %v288, %v287
  %v302 = vpack.c.b16 %v290, %v289
  %v303 = vpack.c.b16 %v292, %v291
  %v304 = vpack.c.b16 %v294, %v293
  %v305 = vpack.c.b16 %v296, %v295
  %v306 = vpack.c.b16 %v298, %v297
  %vm307 = vcmask 523264
  %v309 = vsel %vm307, %v299, 0
  %v312 = vsel %vm307, %v300, 0
  %v315 = vsel %vm307, %v301, 0
  %v318 = vsel %vm307, %v302, 0
  %v321 = vsel %vm307, %v303, 0
  %v324 = vsel %vm307, %v304, 0
  %v327 = vsel %vm307, %v305, 0
  %v330 = vsel %vm307, %v306, 0
  %v333 = vsel %vm307, %v123, 0
  %335 = vmatpush.bf16.xpose.msra.mxu0 0
  %336 = vmatpush.bf16.xpose.msra.mxu0 0
  %337 = vmatpush.bf16.xpose.msra.mxu0 0
  %338 = vmatpush.bf16.xpose.msra.mxu0 0
  %339 = vmatpush.bf16.xpose.msra.mxu0 0
  %340 = vmatpush.bf16.xpose.msra.mxu0 0
  %341 = vmatpush.bf16.xpose.msra.mxu0 0
  %342 = vmatpush.bf16.xpose.msra.mxu0 %v333
  %343 = vmatmul.bf16.gmra.mxu0 %v309
  %v344 = vpop.f32.mrf.mxu0
  %v345 = vadd.f32 0.0, %v344
  %v346 = vpop.f32.mrf.mxu0
  %v347 = vadd.f32 0.0, %v346
  %348 = vmatmul.bf16.gmra.mxu0 %v312
  %v349 = vpop.f32.mrf.mxu0
  %v350 = vadd.f32 0.0, %v349
  %v351 = vpop.f32.mrf.mxu0
  %v352 = vadd.f32 0.0, %v351
  %353 = vmatmul.bf16.gmra.mxu0 %v315
  %v354 = vpop.f32.mrf.mxu0
  %v355 = vadd.f32 0.0, %v354
  %v356 = vpop.f32.mrf.mxu0
  %v357 = vadd.f32 0.0, %v356
  %358 = vmatmul.bf16.gmra.mxu0 %v318
  %v359 = vpop.f32.mrf.mxu0
  %v360 = vadd.f32 0.0, %v359
  %v361 = vpop.f32.mrf.mxu0
  %v362 = vadd.f32 0.0, %v361
  %363 = vmatmul.bf16.gmra.mxu0 %v321
  %v364 = vpop.f32.mrf.mxu0
  %v365 = vadd.f32 0.0, %v364
  %v366 = vpop.f32.mrf.mxu0
  %v367 = vadd.f32 0.0, %v366
  %368 = vmatmul.bf16.gmra.mxu0 %v324
  %v369 = vpop.f32.mrf.mxu0
  %v370 = vadd.f32 0.0, %v369
  %v371 = vpop.f32.mrf.mxu0
  %v372 = vadd.f32 0.0, %v371
  %373 = vmatmul.bf16.gmra.mxu0 %v327
  %v374 = vpop.f32.mrf.mxu0
  %v375 = vadd.f32 0.0, %v374
  %v376 = vpop.f32.mrf.mxu0
  %v377 = vadd.f32 0.0, %v376
  %378 = vmatmul.bf16.gmra.mxu0 %v330
  %v379 = vpop.f32.mrf.mxu0
  %v380 = vadd.f32 0.0, %v379
  %v381 = vpop.f32.mrf.mxu0
  %v382 = vadd.f32 0.0, %v381
  %383 = vdwg.mxu0
  %v385 = vsel %vm307, %v122, 0
  %387 = vmatpush.bf16.xpose.msra.mxu0 %v330
  %388 = vmatpush.bf16.xpose.msra.mxu0 %v327
  %389 = vmatpush.bf16.xpose.msra.mxu0 %v324
  %390 = vmatpush.bf16.xpose.msra.mxu0 %v321
  %391 = vmatpush.bf16.xpose.msra.mxu0 %v318
  %392 = vmatpush.bf16.xpose.msra.mxu0 %v315
  %393 = vmatpush.bf16.xpose.msra.mxu0 %v312
  %394 = vmatpush.bf16.xpose.msra.mxu0 %v309
  %395 = vmatmul.bf16.gmra.mxu0 %v385
  %v396 = vpop.f32.mrf.mxu0
  %v397 = vadd.f32 0.0, %v396
  %v398 = vpop.f32.mrf.mxu0
  %399 = vdwg.mxu0
  %vm400 = vcmask 584704
  %401 = vst.msk [vmem:[#allocation3] sm:$0xf] %vm400, 0
  %402 = vst.msk [vmem:[#allocation3 + $0x4] sm:$0xf] %vm400, 0
  %403 = vst.msk [vmem:[#allocation3 + $0x8] sm:$0xf] %vm400, 0
  %404 = vst.msk [vmem:[#allocation3 + $0xc] sm:$0xf] %vm400, 0
  %405 = vst.msk [vmem:[#allocation3 + $0x10] sm:$0xf] %vm400, 0
  %406 = vst.msk [vmem:[#allocation3 + $0x14] sm:$0xf] %vm400, 0
  %407 = vst.msk [vmem:[#allocation3 + $0x18] sm:$0xf] %vm400, 0
  %408 = vst.msk [vmem:[#allocation3 + $0x1c] sm:$0xf] %vm400, 0
  %409 = vst.msk [vmem:[#allocation3 + $0x20] sm:$0xf] %vm400, 0
  %410 = vst.msk [vmem:[#allocation3 + $0x24] sm:$0xf] %vm400, 0
  %411 = vst.msk [vmem:[#allocation3 + $0x28] sm:$0xf] %vm400, 0
  %412 = vst.msk [vmem:[#allocation3 + $0x2c] sm:$0xf] %vm400, 0
  %413 = vst.msk [vmem:[#allocation3 + $0x30] sm:$0xf] %vm400, 0
  %414 = vst.msk [vmem:[#allocation3 + $0x34] sm:$0xf] %vm400, 0
  %415 = vst.msk [vmem:[#allocation3 + $0x38] sm:$0xf] %vm400, 0
  %416 = vst.msk [vmem:[#allocation3 + $0x3c] sm:$0xf] %vm400, 0
  %417 = vst.msk [vmem:[#allocation3 + $0x40] sm:$0xf] %vm400, 0
  %418 = vst.msk [vmem:[#allocation3 + $0x44] sm:$0xf] %vm400, 0
  %419 = vst.msk [vmem:[#allocation3 + $0x48] sm:$0xf] %vm400, 0
  %420 = vst.msk [vmem:[#allocation3 + $0x4c] sm:$0xf] %vm400, 0
  %421 = vst.msk [vmem:[#allocation3 + $0x50] sm:$0xf] %vm400, 0
  %422 = vst.msk [vmem:[#allocation3 + $0x54] sm:$0xf] %vm400, 0
  %423 = vst.msk [vmem:[#allocation3 + $0x58] sm:$0xf] %vm400, 0
  %424 = vst.msk [vmem:[#allocation3 + $0x5c] sm:$0xf] %vm400, 0
  %425 = vst.msk [vmem:[#allocation3 + $0x60] sm:$0xf] %vm400, 0
  %426 = vst.msk [vmem:[#allocation3 + $0x64] sm:$0xf] %vm400, 0
  %427 = vst.msk [vmem:[#allocation3 + $0x68] sm:$0xf] %vm400, 0
  %428 = vst.msk [vmem:[#allocation3 + $0x6c] sm:$0xf] %vm400, 0
  %429 = vst.msk [vmem:[#allocation3 + $0x70] sm:$0xf] %vm400, 0
  %430 = vst.msk [vmem:[#allocation3 + $0x74] sm:$0xf] %vm400, 0
  %431 = vst.msk [vmem:[#allocation3 + $0x78] sm:$0xf] %vm400, 0
  %432 = vst.msk [vmem:[#allocation3 + $0x7c] sm:$0xf] %vm400, 0
  %433 = vst.msk [vmem:[#allocation3 + $0x80] sm:$0xf] %vm400, 0
  %434 = vst.msk [vmem:[#allocation3 + $0x84] sm:$0xf] %vm400, 0
  %435 = vst.msk [vmem:[#allocation3 + $0x88] sm:$0xf] %vm400, 0
  %436 = vst.msk [vmem:[#allocation3 + $0x8c] sm:$0xf] %vm400, 0
  %437 = vst.msk [vmem:[#allocation3 + $0x90] sm:$0xf] %vm400, 0
  %438 = vst.msk [vmem:[#allocation3 + $0x94] sm:$0xf] %vm400, 0
  %439 = vst.msk [vmem:[#allocation3 + $0x98] sm:$0xf] %vm400, 0
  %440 = vst.msk [vmem:[#allocation3 + $0x9c] sm:$0xf] %vm400, 0
  %441 = vst.msk [vmem:[#allocation3 + $0xa0] sm:$0xf] %vm400, 0
  %442 = vst.msk [vmem:[#allocation3 + $0xa4] sm:$0xf] %vm400, 0
  %443 = vst.msk [vmem:[#allocation3 + $0xa8] sm:$0xf] %vm400, 0
  %444 = vst.msk [vmem:[#allocation3 + $0xac] sm:$0xf] %vm400, 0
  %445 = vst.msk [vmem:[#allocation3 + $0xb0] sm:$0xf] %vm400, 0
  %446 = vst.msk [vmem:[#allocation3 + $0xb4] sm:$0xf] %vm400, 0
  %447 = vst.msk [vmem:[#allocation3 + $0xb8] sm:$0xf] %vm400, 0
  %448 = vst.msk [vmem:[#allocation3 + $0xbc] sm:$0xf] %vm400, 0
  %449 = vst.msk [vmem:[#allocation3 + $0xc0] sm:$0xf] %vm400, 0
  %450 = vst.msk [vmem:[#allocation3 + $0xc4] sm:$0xf] %vm400, 0
  %451 = vst.msk [vmem:[#allocation3 + $0xc8] sm:$0xf] %vm400, 0
  %452 = vst.msk [vmem:[#allocation3 + $0xcc] sm:$0xf] %vm400, 0
  %453 = vst.msk [vmem:[#allocation3 + $0xd0] sm:$0xf] %vm400, 0
  %454 = vst.msk [vmem:[#allocation3 + $0xd4] sm:$0xf] %vm400, 0
  %455 = vst.msk [vmem:[#allocation3 + $0xd8] sm:$0xf] %vm400, 0
  %456 = vst.msk [vmem:[#allocation3 + $0xdc] sm:$0xf] %vm400, 0
  %457 = vst.msk [vmem:[#allocation3 + $0xe0] sm:$0xf] %vm400, 0
  %458 = vst.msk [vmem:[#allocation3 + $0xe4] sm:$0xf] %vm400, 0
  %459 = vst.msk [vmem:[#allocation3 + $0xe8] sm:$0xf] %vm400, 0
  %460 = vst.msk [vmem:[#allocation3 + $0xec] sm:$0xf] %vm400, 0
  %461 = vst.msk [vmem:[#allocation3 + $0xf0] sm:$0xf] %vm400, 0
  %462 = vst.msk [vmem:[#allocation3 + $0xf4] sm:$0xf] %vm400, 0
  %463 = vst.msk [vmem:[#allocation3 + $0xf8] sm:$0xf] %vm400, 0
  %464 = vst.msk [vmem:[#allocation3 + $0xfc] sm:$0xf] %vm400, 0
  %465 = vst.msk [vmem:[#allocation3 + $0x100] sm:$0xf] %vm400, 0
  %466 = vst.msk [vmem:[#allocation3 + $0x104] sm:$0xf] %vm400, 0
  %467 = vst.msk [vmem:[#allocation3 + $0x108] sm:$0xf] %vm400, 0
  %468 = vst.msk [vmem:[#allocation3 + $0x10c] sm:$0xf] %vm400, 0
  %469 = vst.msk [vmem:[#allocation3 + $0x110] sm:$0xf] %vm400, 0
  %470 = vst.msk [vmem:[#allocation3 + $0x114] sm:$0xf] %vm400, 0
  %471 = vst.msk [vmem:[#allocation3 + $0x118] sm:$0xf] %vm400, 0
  %472 = vst.msk [vmem:[#allocation3 + $0x11c] sm:$0xf] %vm400, 0
  %473 = vst.msk [vmem:[#allocation3 + $0x120] sm:$0xf] %vm400, 0
  %474 = vst.msk [vmem:[#allocation3 + $0x124] sm:$0xf] %vm400, 0
  %475 = vst.msk [vmem:[#allocation3 + $0x128] sm:$0xf] %vm400, 0
  %476 = vst.msk [vmem:[#allocation3 + $0x12c] sm:$0xf] %vm400, 0
  %477 = vst.msk [vmem:[#allocation3 + $0x130] sm:$0xf] %vm400, 0
  %478 = vst.msk [vmem:[#allocation3 + $0x134] sm:$0xf] %vm400, 0
  %479 = vst.msk [vmem:[#allocation3 + $0x138] sm:$0xf] %vm400, 0
  %480 = vst.msk [vmem:[#allocation3 + $0x13c] sm:$0xf] %vm400, 0
  %481 = vst.msk [vmem:[#allocation3 + $0x140] sm:$0xf] %vm400, 0
  %482 = vst.msk [vmem:[#allocation3 + $0x144] sm:$0xf] %vm400, 0
  %483 = vst.msk [vmem:[#allocation3 + $0x148] sm:$0xf] %vm400, 0
  %484 = vst.msk [vmem:[#allocation3 + $0x14c] sm:$0xf] %vm400, 0
  %485 = vst.msk [vmem:[#allocation3 + $0x150] sm:$0xf] %vm400, 0
  %486 = vst.msk [vmem:[#allocation3 + $0x154] sm:$0xf] %vm400, 0
  %487 = vst.msk [vmem:[#allocation3 + $0x158] sm:$0xf] %vm400, 0
  %488 = vst.msk [vmem:[#allocation3 + $0x15c] sm:$0xf] %vm400, 0
  %489 = vst.msk [vmem:[#allocation3 + $0x160] sm:$0xf] %vm400, 0
  %490 = vst.msk [vmem:[#allocation3 + $0x164] sm:$0xf] %vm400, 0
  %491 = vst.msk [vmem:[#allocation3 + $0x168] sm:$0xf] %vm400, 0
  %492 = vst.msk [vmem:[#allocation3 + $0x16c] sm:$0xf] %vm400, 0
  %493 = vst.msk [vmem:[#allocation3 + $0x170] sm:$0xf] %vm400, 0
  %494 = vst.msk [vmem:[#allocation3 + $0x174] sm:$0xf] %vm400, 0
  %495 = vst.msk [vmem:[#allocation3 + $0x178] sm:$0xf] %vm400, 0
  %496 = vst.msk [vmem:[#allocation3 + $0x17c] sm:$0xf] %vm400, 0
  %497 = vst.msk [vmem:[#allocation3 + $0x180] sm:$0xf] %vm400, 0
  %498 = vst.msk [vmem:[#allocation3 + $0x184] sm:$0xf] %vm400, 0
  %499 = vst.msk [vmem:[#allocation3 + $0x188] sm:$0xf] %vm400, 0
  %500 = vst.msk [vmem:[#allocation3 + $0x18c] sm:$0xf] %vm400, 0
  %501 = vst.msk [vmem:[#allocation3 + $0x190] sm:$0xf] %vm400, 0
  %502 = vst.msk [vmem:[#allocation3 + $0x194] sm:$0xf] %vm400, 0
  %503 = vst.msk [vmem:[#allocation3 + $0x198] sm:$0xf] %vm400, 0
  %504 = vst.msk [vmem:[#allocation3 + $0x19c] sm:$0xf] %vm400, 0
  %505 = vst.msk [vmem:[#allocation3 + $0x1a0] sm:$0xf] %vm400, 0
  %506 = vst.msk [vmem:[#allocation3 + $0x1a4] sm:$0xf] %vm400, 0
  %507 = vst.msk [vmem:[#allocation3 + $0x1a8] sm:$0xf] %vm400, 0
  %508 = vst.msk [vmem:[#allocation3 + $0x1ac] sm:$0xf] %vm400, 0
  %509 = vst.msk [vmem:[#allocation3 + $0x1b0] sm:$0xf] %vm400, 0
  %510 = vst.msk [vmem:[#allocation3 + $0x1b4] sm:$0xf] %vm400, 0
  %511 = vst.msk [vmem:[#allocation3 + $0x1b8] sm:$0xf] %vm400, 0
  %512 = vst.msk [vmem:[#allocation3 + $0x1bc] sm:$0xf] %vm400, 0
  %513 = vst.msk [vmem:[#allocation3 + $0x1c0] sm:$0xf] %vm400, 0
  %514 = vst.msk [vmem:[#allocation3 + $0x1c4] sm:$0xf] %vm400, 0
  %515 = vst.msk [vmem:[#allocation3 + $0x1c8] sm:$0xf] %vm400, 0
  %516 = vst.msk [vmem:[#allocation3 + $0x1cc] sm:$0xf] %vm400, 0
  %517 = vst.msk [vmem:[#allocation3 + $0x1d0] sm:$0xf] %vm400, 0
  %518 = vst.msk [vmem:[#allocation3 + $0x1d4] sm:$0xf] %vm400, 0
  %519 = vst.msk [vmem:[#allocation3 + $0x1d8] sm:$0xf] %vm400, 0
  %520 = vst.msk [vmem:[#allocation3 + $0x1dc] sm:$0xf] %vm400, 0
  %521 = vst.msk [vmem:[#allocation3 + $0x1e0] sm:$0xf] %vm400, 0
  %522 = vst.msk [vmem:[#allocation3 + $0x1e4] sm:$0xf] %vm400, 0
  %523 = vst.msk [vmem:[#allocation3 + $0x1e8] sm:$0xf] %vm400, 0
  %524 = vst.msk [vmem:[#allocation3 + $0x1ec] sm:$0xf] %vm400, 0
  %525 = vst.msk [vmem:[#allocation3 + $0x1f0] sm:$0xf] %vm400, 0
  %526 = vst.msk [vmem:[#allocation3 + $0x1f4] sm:$0xf] %vm400, 0
  %527 = vst.msk [vmem:[#allocation3 + $0x1f8] sm:$0xf] %vm400, 0
  %528 = vst.msk [vmem:[#allocation3 + $0x1fc] sm:$0xf] %vm400, 0
  %530 = vset.pattern.permute.xlu0 0
  %531 = vperm.xlu0 %530, %v345
  %v532 = vpop.permute.xlu0 %531
  %535 = vset.pattern.permute.xlu0 0
  %536 = vperm.xlu0 %535, %v347
  %v537 = vpop.permute.xlu0 %536
  %540 = vset.pattern.permute.xlu0 0
  %541 = vperm.xlu0 %540, %v350
  %v542 = vpop.permute.xlu0 %541
  %545 = vset.pattern.permute.xlu0 0
  %546 = vperm.xlu0 %545, %v352
  %v547 = vpop.permute.xlu0 %546
  %550 = vset.pattern.permute.xlu0 0
  %551 = vperm.xlu0 %550, %v355
  %v552 = vpop.permute.xlu0 %551
  %555 = vset.pattern.permute.xlu0 0
  %556 = vperm.xlu0 %555, %v357
  %v557 = vpop.permute.xlu0 %556
  %560 = vset.pattern.permute.xlu0 0
  %561 = vperm.xlu0 %560, %v360
  %v562 = vpop.permute.xlu0 %561
  %565 = vset.pattern.permute.xlu0 0
  %566 = vperm.xlu0 %565, %v362
  %v567 = vpop.permute.xlu0 %566
  %570 = vset.pattern.permute.xlu0 0
  %571 = vperm.xlu0 %570, %v365
  %v572 = vpop.permute.xlu0 %571
  %575 = vset.pattern.permute.xlu0 0
  %576 = vperm.xlu0 %575, %v367
  %v577 = vpop.permute.xlu0 %576
  %580 = vset.pattern.permute.xlu0 0
  %581 = vperm.xlu0 %580, %v370
  %v582 = vpop.permute.xlu0 %581
  %585 = vset.pattern.permute.xlu0 0
  %586 = vperm.xlu0 %585, %v372
  %v587 = vpop.permute.xlu0 %586
  %590 = vset.pattern.permute.xlu0 0
  %591 = vperm.xlu0 %590, %v375
  %v592 = vpop.permute.xlu0 %591
  %595 = vset.pattern.permute.xlu0 0
  %596 = vperm.xlu0 %595, %v377
  %v597 = vpop.permute.xlu0 %596
  %600 = vset.pattern.permute.xlu0 0
  %601 = vperm.xlu0 %600, %v380
  %v602 = vpop.permute.xlu0 %601
  %605 = vset.pattern.permute.xlu0 0
  %606 = vperm.xlu0 %605, %v382
  %v607 = vpop.permute.xlu0 %606
  %v609 = vperm.slane %v397, 0
  %v610 = vadd.f32 %v532, %v609
  %v611 = vadd.f32 %v537, %v609
  %v612 = vadd.f32 %v542, %v609
  %v613 = vadd.f32 %v547, %v609
  %v614 = vadd.f32 %v552, %v609
  %v615 = vadd.f32 %v557, %v609
  %v616 = vadd.f32 %v562, %v609
  %v617 = vadd.f32 %v567, %v609
  %v618 = vadd.f32 %v572, %v609
  %v619 = vadd.f32 %v577, %v609
  %v620 = vadd.f32 %v582, %v609
  %v621 = vadd.f32 %v587, %v609
  %v622 = vadd.f32 %v592, %v609
  %v623 = vadd.f32 %v597, %v609
  %v624 = vadd.f32 %v602, %v609
  %v625 = vadd.f32 %v607, %v609
  %v626 = vmul.f32 %v610, 0.2
  %v627 = vmul.f32 %v611, 0.2
  %v628 = vmul.f32 %v612, 0.2
  %v629 = vmul.f32 %v613, 0.2
  %v630 = vmul.f32 %v614, 0.2
  %v631 = vmul.f32 %v615, 0.2
  %v632 = vmul.f32 %v616, 0.2
  %v633 = vmul.f32 %v617, 0.2
  %v634 = vmul.f32 %v618, 0.2
  %v635 = vmul.f32 %v619, 0.2
  %v636 = vmul.f32 %v620, 0.2
  %v637 = vmul.f32 %v621, 0.2
  %v638 = vmul.f32 %v622, 0.2
  %v639 = vmul.f32 %v623, 0.2
  %v640 = vmul.f32 %v624, 0.2
  %v641 = vmul.f32 %v625, 0.2
  %v642 = vmax.f32 %v610, %v626
  %v643 = vmax.f32 %v611, %v627
  %v644 = vmax.f32 %v612, %v628
  %v645 = vmax.f32 %v613, %v629
  %v646 = vmax.f32 %v614, %v630
  %v647 = vmax.f32 %v615, %v631
  %v648 = vmax.f32 %v616, %v632
  %v649 = vmax.f32 %v617, %v633
  %v650 = vmax.f32 %v618, %v634
  %v651 = vmax.f32 %v619, %v635
  %v652 = vmax.f32 %v620, %v636
  %v653 = vmax.f32 %v621, %v637
  %v654 = vmax.f32 %v622, %v638
  %v655 = vmax.f32 %v623, %v639
  %v656 = vmax.f32 %v624, %v640
  %v657 = vmax.f32 %v625, %v641
  %v658 = vadd.f32 %v642, %v86
  %v659 = vadd.f32 %v643, %v87
  %v660 = vadd.f32 %v644, %v88
  %v661 = vadd.f32 %v645, %v89
  %v662 = vadd.f32 %v646, %v90
  %v663 = vadd.f32 %v647, %v91
  %v664 = vadd.f32 %v648, %v92
  %v665 = vadd.f32 %v649, %v93
  %v666 = vadd.f32 %v650, %v94
  %v667 = vadd.f32 %v651, %v95
  %v668 = vadd.f32 %v652, %v96
  %v669 = vadd.f32 %v653, %v97
  %v670 = vadd.f32 %v654, %v98
  %v671 = vadd.f32 %v655, %v99
  %v672 = vadd.f32 %v656, %v100
  %v673 = vadd.f32 %v657, %v101
  %674 = vmax.xlane.f32.xlu0 %v658
  %v675 = vpop.xlane.xlu0 %674
  %676 = vmax.xlane.f32.xlu0 %v659
  %v677 = vpop.xlane.xlu0 %676
  %678 = vmax.xlane.f32.xlu0 %v660
  %v679 = vpop.xlane.xlu0 %678
  %680 = vmax.xlane.f32.xlu0 %v661
  %v681 = vpop.xlane.xlu0 %680
  %682 = vmax.xlane.f32.xlu0 %v662
  %v683 = vpop.xlane.xlu0 %682
  %684 = vmax.xlane.f32.xlu0 %v663
  %v685 = vpop.xlane.xlu0 %684
  %686 = vmax.xlane.f32.xlu0 %v664
  %v687 = vpop.xlane.xlu0 %686
  %688 = vmax.xlane.f32.xlu0 %v665
  %v689 = vpop.xlane.xlu0 %688
  %690 = vmax.xlane.f32.xlu0 %v666
  %v691 = vpop.xlane.xlu0 %690
  %692 = vmax.xlane.f32.xlu0 %v667
  %v693 = vpop.xlane.xlu0 %692
  %694 = vmax.xlane.f32.xlu0 %v668
  %v695 = vpop.xlane.xlu0 %694
  %696 = vmax.xlane.f32.xlu0 %v669
  %v697 = vpop.xlane.xlu0 %696
  %698 = vmax.xlane.f32.xlu0 %v670
  %v699 = vpop.xlane.xlu0 %698
  %700 = vmax.xlane.f32.xlu0 %v671
  %v701 = vpop.xlane.xlu0 %700
  %702 = vmax.xlane.f32.xlu0 %v672
  %v703 = vpop.xlane.xlu0 %702
  %704 = vmax.xlane.f32.xlu0 %v673
  %v705 = vpop.xlane.xlu0 %704
  %v706 = vsub.f32 %v658, %v675
  %v707 = vsub.f32 %v659, %v677
  %v708 = vsub.f32 %v660, %v679
  %v709 = vsub.f32 %v661, %v681
  %v710 = vsub.f32 %v662, %v683
  %v711 = vsub.f32 %v663, %v685
  %v712 = vsub.f32 %v664, %v687
  %v713 = vsub.f32 %v665, %v689
  %v714 = vsub.f32 %v666, %v691
  %v715 = vsub.f32 %v667, %v693
  %v716 = vsub.f32 %v668, %v695
  %v717 = vsub.f32 %v669, %v697
  %v718 = vsub.f32 %v670, %v699
  %v719 = vsub.f32 %v671, %v701
  %v720 = vsub.f32 %v672, %v703
  %v721 = vsub.f32 %v673, %v705
  %v722 = vmul.f32 %v706, 1.442695
  %v723 = vpow.pop %v722
  %v724 = vmul.f32 %v707, 1.442695
  %v725 = vpow.pop %v724
  %v726 = vmul.f32 %v708, 1.442695
  %v727 = vpow.pop %v726
  %v728 = vmul.f32 %v709, 1.442695
  %v729 = vpow.pop %v728
  %v730 = vmul.f32 %v710, 1.442695
  %v731 = vpow.pop %v730
  %v732 = vmul.f32 %v711, 1.442695
  %v733 = vpow.pop %v732
  %v734 = vmul.f32 %v712, 1.442695
  %v735 = vpow.pop %v734
  %v736 = vmul.f32 %v713, 1.442695
  %v737 = vpow.pop %v736
  %v738 = vmul.f32 %v714, 1.442695
  %v739 = vpow.pop %v738
  %v740 = vmul.f32 %v715, 1.442695
  %v741 = vpow.pop %v740
  %v742 = vmul.f32 %v716, 1.442695
  %v743 = vpow.pop %v742
  %v744 = vmul.f32 %v717, 1.442695
  %v745 = vpow.pop %v744
  %v746 = vmul.f32 %v718, 1.442695
  %v747 = vpow.pop %v746
  %v748 = vmul.f32 %v719, 1.442695
  %v749 = vpow.pop %v748
  %v750 = vmul.f32 %v720, 1.442695
  %v751 = vpow.pop %v750
  %v752 = vmul.f32 %v721, 1.442695
  %v753 = vpow.pop %v752
  %v754 = vpack.c.bf16 %v723, %v723
  %v755 = vpack.c.bf16 %v725, %v725
  %v756 = vpack.c.bf16 %v727, %v727
  %v757 = vpack.c.bf16 %v729, %v729
  %v758 = vpack.c.bf16 %v731, %v731
  %v759 = vpack.c.bf16 %v733, %v733
  %v760 = vpack.c.bf16 %v735, %v735
  %v761 = vpack.c.bf16 %v737, %v737
  %v762 = vpack.c.bf16 %v739, %v739
  %v763 = vpack.c.bf16 %v741, %v741
  %v764 = vpack.c.bf16 %v743, %v743
  %v765 = vpack.c.bf16 %v745, %v745
  %v766 = vpack.c.bf16 %v747, %v747
  %v767 = vpack.c.bf16 %v749, %v749
  %v768 = vpack.c.bf16 %v751, %v751
  %v769 = vpack.c.bf16 %v753, %v753
  %770 = vst [vmem:[#allocation2] sm:$0xf] %v754
  %771 = vst [vmem:[#allocation2 + $0x20] sm:$0xf] %v755
  %772 = vst [vmem:[#allocation2 + $0x40] sm:$0xf] %v756
  %773 = vst [vmem:[#allocation2 + $0x60] sm:$0xf] %v757
  %774 = vst [vmem:[#allocation2 + $0x80] sm:$0xf] %v758
  %775 = vst [vmem:[#allocation2 + $0xa0] sm:$0xf] %v759
  %776 = vst [vmem:[#allocation2 + $0xc0] sm:$0xf] %v760
  %777 = vst [vmem:[#allocation2 + $0xe0] sm:$0xf] %v761
  %778 = vst [vmem:[#allocation2 + $0x100] sm:$0xf] %v762
  %779 = vst [vmem:[#allocation2 + $0x120] sm:$0xf] %v763
  %780 = vst [vmem:[#allocation2 + $0x140] sm:$0xf] %v764
  %781 = vst [vmem:[#allocation2 + $0x160] sm:$0xf] %v765
  %782 = vst [vmem:[#allocation2 + $0x180] sm:$0xf] %v766
  %783 = vst [vmem:[#allocation2 + $0x1a0] sm:$0xf] %v767
  %784 = vst [vmem:[#allocation2 + $0x1c0] sm:$0xf] %v768
  %785 = vst [vmem:[#allocation2 + $0x1e0] sm:$0xf] %v769
  %vm786 = vcmask 60416
  %787 = vst.msk [vmem:[#allocation3] sm:$0xf] %vm786, %v251
  %788 = vst.msk [vmem:[#allocation3 + $0x4] sm:$0xf] %vm786, %v252
  %789 = vst.msk [vmem:[#allocation3 + $0x8] sm:$0xf] %vm786, %v253
  %790 = vst.msk [vmem:[#allocation3 + $0xc] sm:$0xf] %vm786, %v254
  %791 = vst.msk [vmem:[#allocation3 + $0x10] sm:$0xf] %vm786, %v255
  %792 = vst.msk [vmem:[#allocation3 + $0x14] sm:$0xf] %vm786, %v256
  %793 = vst.msk [vmem:[#allocation3 + $0x18] sm:$0xf] %vm786, %v257
  %794 = vst.msk [vmem:[#allocation3 + $0x1c] sm:$0xf] %vm786, %v258
  %795 = vst.msk [vmem:[#allocation3 + $0x20] sm:$0xf] %vm786, %v259
  %796 = vst.msk [vmem:[#allocation3 + $0x24] sm:$0xf] %vm786, %v260
  %797 = vst.msk [vmem:[#allocation3 + $0x28] sm:$0xf] %vm786, %v261
  %798 = vst.msk [vmem:[#allocation3 + $0x2c] sm:$0xf] %vm786, %v262
  %799 = vst.msk [vmem:[#allocation3 + $0x30] sm:$0xf] %vm786, %v263
  %800 = vst.msk [vmem:[#allocation3 + $0x34] sm:$0xf] %vm786, %v264
  %801 = vst.msk [vmem:[#allocation3 + $0x38] sm:$0xf] %vm786, %v265
  %802 = vst.msk [vmem:[#allocation3 + $0x3c] sm:$0xf] %vm786, %v266
  %vm803 = vcmask 527872
  %804 = vst.msk [vmem:[#allocation3] sm:$0xf] %vm803, 1065369472
  %805 = vst.msk [vmem:[#allocation3 + $0x4] sm:$0xf] %vm803, 1065369472
  %806 = vst.msk [vmem:[#allocation3 + $0x8] sm:$0xf] %vm803, 1065369472
  %807 = vst.msk [vmem:[#allocation3 + $0xc] sm:$0xf] %vm803, 1065369472
  %808 = vst.msk [vmem:[#allocation3 + $0x10] sm:$0xf] %vm803, 1065369472
  %809 = vst.msk [vmem:[#allocation3 + $0x14] sm:$0xf] %vm803, 1065369472
  %810 = vst.msk [vmem:[#allocation3 + $0x18] sm:$0xf] %vm803, 1065369472
  %811 = vst.msk [vmem:[#allocation3 + $0x1c] sm:$0xf] %vm803, 1065369472
  %812 = vst.msk [vmem:[#allocation3 + $0x20] sm:$0xf] %vm803, 1065369472
  %813 = vst.msk [vmem:[#allocation3 + $0x24] sm:$0xf] %vm803, 1065369472
  %814 = vst.msk [vmem:[#allocation3 + $0x28] sm:$0xf] %vm803, 1065369472
  %815 = vst.msk [vmem:[#allocation3 + $0x2c] sm:$0xf] %vm803, 1065369472
  %816 = vst.msk [vmem:[#allocation3 + $0x30] sm:$0xf] %vm803, 1065369472
  %817 = vst.msk [vmem:[#allocation3 + $0x34] sm:$0xf] %vm803, 1065369472
  %818 = vst.msk [vmem:[#allocation3 + $0x38] sm:$0xf] %vm803, 1065369472
  %819 = vst.msk [vmem:[#allocation3 + $0x3c] sm:$0xf] %vm803, 1065369472
  %820 = vset.pattern.permute.xlu0 1
  %821 = vperm.xlu0 %820, %v345
  %v822 = vpop.permute.xlu0 %821
  %824 = vset.pattern.permute.xlu0 1
  %825 = vperm.xlu0 %824, %v347
  %v826 = vpop.permute.xlu0 %825
  %828 = vset.pattern.permute.xlu0 1
  %829 = vperm.xlu0 %828, %v350
  %v830 = vpop.permute.xlu0 %829
  %832 = vset.pattern.permute.xlu0 1
  %833 = vperm.xlu0 %832, %v352
  %v834 = vpop.permute.xlu0 %833
  %836 = vset.pattern.permute.xlu0 1
  %837 = vperm.xlu0 %836, %v355
  %v838 = vpop.permute.xlu0 %837
  %840 = vset.pattern.permute.xlu0 1
  %841 = vperm.xlu0 %840, %v357
  %v842 = vpop.permute.xlu0 %841
  %844 = vset.pattern.permute.xlu0 1
  %845 = vperm.xlu0 %844, %v360
  %v846 = vpop.permute.xlu0 %845
  %848 = vset.pattern.permute.xlu0 1
  %849 = vperm.xlu0 %848, %v362
  %v850 = vpop.permute.xlu0 %849
  %852 = vset.pattern.permute.xlu0 1
  %853 = vperm.xlu0 %852, %v365
  %v854 = vpop.permute.xlu0 %853
  %856 = vset.pattern.permute.xlu0 1
  %857 = vperm.xlu0 %856, %v367
  %v858 = vpop.permute.xlu0 %857
  %860 = vset.pattern.permute.xlu0 1
  %861 = vperm.xlu0 %860, %v370
  %v862 = vpop.permute.xlu0 %861
  %864 = vset.pattern.permute.xlu0 1
  %865 = vperm.xlu0 %864, %v372
  %v866 = vpop.permute.xlu0 %865
  %868 = vset.pattern.permute.xlu0 1
  %869 = vperm.xlu0 %868, %v375
  %v870 = vpop.permute.xlu0 %869
  %872 = vset.pattern.permute.xlu0 1
  %873 = vperm.xlu0 %872, %v377
  %v874 = vpop.permute.xlu0 %873
  %876 = vset.pattern.permute.xlu0 1
  %877 = vperm.xlu0 %876, %v380
  %v878 = vpop.permute.xlu0 %877
  %880 = vset.pattern.permute.xlu0 1
  %881 = vperm.xlu0 %880, %v382
  %v882 = vpop.permute.xlu0 %881
  %v884 = vperm.slane %v397, 1
  %v885 = vadd.f32 %v822, %v884
  %v886 = vadd.f32 %v826, %v884
  %v887 = vadd.f32 %v830, %v884
  %v888 = vadd.f32 %v834, %v884
  %v889 = vadd.f32 %v838, %v884
  %v890 = vadd.f32 %v842, %v884
  %v891 = vadd.f32 %v846, %v884
  %v892 = vadd.f32 %v850, %v884
  %v893 = vadd.f32 %v854, %v884
  %v894 = vadd.f32 %v858, %v884
  %v895 = vadd.f32 %v862, %v884
  %v896 = vadd.f32 %v866, %v884
  %v897 = vadd.f32 %v870, %v884
  %v898 = vadd.f32 %v874, %v884
  %v899 = vadd.f32 %v878, %v884
  %v900 = vadd.f32 %v882, %v884
  %v901 = vmul.f32 %v885, 0.2
  %v902 = vmul.f32 %v886, 0.2
  %v903 = vmul.f32 %v887, 0.2
  %v904 = vmul.f32 %v888, 0.2
  %v905 = vmul.f32 %v889, 0.2
  %v906 = vmul.f32 %v890, 0.2
  %v907 = vmul.f32 %v891, 0.2
  %v908 = vmul.f32 %v892, 0.2
  %v909 = vmul.f32 %v893, 0.2
  %v910 = vmul.f32 %v894, 0.2
  %v911 = vmul.f32 %v895, 0.2
  %v912 = vmul.f32 %v896, 0.2
  %v913 = vmul.f32 %v897, 0.2
  %v914 = vmul.f32 %v898, 0.2
  %v915 = vmul.f32 %v899, 0.2
  %v916 = vmul.f32 %v900, 0.2
  %v917 = vmax.f32 %v885, %v901
  %v918 = vmax.f32 %v886, %v902
  %v919 = vmax.f32 %v887, %v903
  %v920 = vmax.f32 %v888, %v904
  %v921 = vmax.f32 %v889, %v905
  %v922 = vmax.f32 %v890, %v906
  %v923 = vmax.f32 %v891, %v907
  %v924 = vmax.f32 %v892, %v908
  %v925 = vmax.f32 %v893, %v909
  %v926 = vmax.f32 %v894, %v910
  %v927 = vmax.f32 %v895, %v911
  %v928 = vmax.f32 %v896, %v912
  %v929 = vmax.f32 %v897, %v913
  %v930 = vmax.f32 %v898, %v914
  %v931 = vmax.f32 %v899, %v915
  %v932 = vmax.f32 %v900, %v916
  %v933 = vadd.f32 %v917, %v86
  %v934 = vadd.f32 %v918, %v87
  %v935 = vadd.f32 %v919, %v88
  %v936 = vadd.f32 %v920, %v89
  %v937 = vadd.f32 %v921, %v90
  %v938 = vadd.f32 %v922, %v91
  %v939 = vadd.f32 %v923, %v92
  %v940 = vadd.f32 %v924, %v93
  %v941 = vadd.f32 %v925, %v94
  %v942 = vadd.f32 %v926, %v95
  %v943 = vadd.f32 %v927, %v96
  %v944 = vadd.f32 %v928, %v97
  %v945 = vadd.f32 %v929, %v98
  %v946 = vadd.f32 %v930, %v99
  %v947 = vadd.f32 %v931, %v100
  %v948 = vadd.f32 %v932, %v101
  %949 = vmax.xlane.f32.xlu0 %v933
  %v950 = vpop.xlane.xlu0 %949
  %951 = vmax.xlane.f32.xlu0 %v934
  %v952 = vpop.xlane.xlu0 %951
  %953 = vmax.xlane.f32.xlu0 %v935
  %v954 = vpop.xlane.xlu0 %953
  %955 = vmax.xlane.f32.xlu0 %v936
  %v956 = vpop.xlane.xlu0 %955
  %957 = vmax.xlane.f32.xlu0 %v937
  %v958 = vpop.xlane.xlu0 %957
  %959 = vmax.xlane.f32.xlu0 %v938
  %v960 = vpop.xlane.xlu0 %959
  %961 = vmax.xlane.f32.xlu0 %v939
  %v962 = vpop.xlane.xlu0 %961
  %963 = vmax.xlane.f32.xlu0 %v940
  %v964 = vpop.xlane.xlu0 %963
  %965 = vmax.xlane.f32.xlu0 %v941
  %v966 = vpop.xlane.xlu0 %965
  %967 = vmax.xlane.f32.xlu0 %v942
  %v968 = vpop.xlane.xlu0 %967
  %969 = vmax.xlane.f32.xlu0 %v943
  %v970 = vpop.xlane.xlu0 %969
  %971 = vmax.xlane.f32.xlu0 %v944
  %v972 = vpop.xlane.xlu0 %971
  %973 = vmax.xlane.f32.xlu0 %v945
  %v974 = vpop.xlane.xlu0 %973
  %975 = vmax.xlane.f32.xlu0 %v946
  %v976 = vpop.xlane.xlu0 %975
  %977 = vmax.xlane.f32.xlu0 %v947
  %v978 = vpop.xlane.xlu0 %977
  %979 = vmax.xlane.f32.xlu0 %v948
  %v980 = vpop.xlane.xlu0 %979
  %v981 = vsub.f32 %v933, %v950
  %v982 = vsub.f32 %v934, %v952
  %v983 = vsub.f32 %v935, %v954
  %v984 = vsub.f32 %v936, %v956
  %v985 = vsub.f32 %v937, %v958
  %v986 = vsub.f32 %v938, %v960
  %v987 = vsub.f32 %v939, %v962
  %v988 = vsub.f32 %v940, %v964
  %v989 = vsub.f32 %v941, %v966
  %v990 = vsub.f32 %v942, %v968
  %v991 = vsub.f32 %v943, %v970
  %v992 = vsub.f32 %v944, %v972
  %v993 = vsub.f32 %v945, %v974
  %v994 = vsub.f32 %v946, %v976
  %v995 = vsub.f32 %v947, %v978
  %v996 = vsub.f32 %v948, %v980
  %v997 = vmul.f32 %v981, 1.442695
  %v998 = vpow.pop %v997
  %v999 = vmul.f32 %v982, 1.442695
  %v1000 = vpow.pop %v999
  %v1001 = vmul.f32 %v983, 1.442695
  %v1002 = vpow.pop %v1001
  %v1003 = vmul.f32 %v984, 1.442695
  %v1004 = vpow.pop %v1003
  %v1005 = vmul.f32 %v985, 1.442695
  %v1006 = vpow.pop %v1005
  %v1007 = vmul.f32 %v986, 1.442695
  %v1008 = vpow.pop %v1007
  %v1009 = vmul.f32 %v987, 1.442695
  %v1010 = vpow.pop %v1009
  %v1011 = vmul.f32 %v988, 1.442695
  %v1012 = vpow.pop %v1011
  %v1013 = vmul.f32 %v989, 1.442695
  %v1014 = vpow.pop %v1013
  %v1015 = vmul.f32 %v990, 1.442695
  %v1016 = vpow.pop %v1015
  %v1017 = vmul.f32 %v991, 1.442695
  %v1018 = vpow.pop %v1017
  %v1019 = vmul.f32 %v992, 1.442695
  %v1020 = vpow.pop %v1019
  %v1021 = vmul.f32 %v993, 1.442695
  %v1022 = vpow.pop %v1021
  %v1023 = vmul.f32 %v994, 1.442695
  %v1024 = vpow.pop %v1023
  %v1025 = vmul.f32 %v995, 1.442695
  %v1026 = vpow.pop %v1025
  %v1027 = vmul.f32 %v996, 1.442695
  %v1028 = vpow.pop %v1027
  %v1029 = vpack.c.bf16 %v998, %v998
  %v1030 = vpack.c.bf16 %v1000, %v1000
  %v1031 = vpack.c.bf16 %v1002, %v1002
  %v1032 = vpack.c.bf16 %v1004, %v1004
  %v1033 = vpack.c.bf16 %v1006, %v1006
  %v1034 = vpack.c.bf16 %v1008, %v1008
  %v1035 = vpack.c.bf16 %v1010, %v1010
  %v1036 = vpack.c.bf16 %v1012, %v1012
  %v1037 = vpack.c.bf16 %v1014, %v1014
  %v1038 = vpack.c.bf16 %v1016, %v1016
  %v1039 = vpack.c.bf16 %v1018, %v1018
  %v1040 = vpack.c.bf16 %v1020, %v1020
  %v1041 = vpack.c.bf16 %v1022, %v1022
  %v1042 = vpack.c.bf16 %v1024, %v1024
  %v1043 = vpack.c.bf16 %v1026, %v1026
  %v1044 = vpack.c.bf16 %v1028, %v1028
  %1045 = vst [vmem:[#allocation2 + $0x4] sm:$0xf] %v1029
  %1046 = vst [vmem:[#allocation2 + $0x24] sm:$0xf] %v1030
  %1047 = vst [vmem:[#allocation2 + $0x44] sm:$0xf] %v1031
  %1048 = vst [vmem:[#allocation2 + $0x64] sm:$0xf] %v1032
  %1049 = vst [vmem:[#allocation2 + $0x84] sm:$0xf] %v1033
  %1050 = vst [vmem:[#allocation2 + $0xa4] sm:$0xf] %v1034
  %1051 = vst [vmem:[#allocation2 + $0xc4] sm:$0xf] %v1035
  %1052 = vst [vmem:[#allocation2 + $0xe4] sm:$0xf] %v1036
  %1053 = vst [vmem:[#allocation2 + $0x104] sm:$0xf] %v1037
  %1054 = vst [vmem:[#allocation2 + $0x124] sm:$0xf] %v1038
  %1055 = vst [vmem:[#allocation2 + $0x144] sm:$0xf] %v1039
  %1056 = vst [vmem:[#allocation2 + $0x164] sm:$0xf] %v1040
  %1057 = vst [vmem:[#allocation2 + $0x184] sm:$0xf] %v1041
  %1058 = vst [vmem:[#allocation2 + $0x1a4] sm:$0xf] %v1042
  %1059 = vst [vmem:[#allocation2 + $0x1c4] sm:$0xf] %v1043
  %1060 = vst [vmem:[#allocation2 + $0x1e4] sm:$0xf] %v1044
  %vm1061 = vcmask 126016
  %1062 = vst.msk [vmem:[#allocation3 + $0x40] sm:$0xf] %vm1061, %v251
  %1063 = vst.msk [vmem:[#allocation3 + $0x44] sm:$0xf] %vm1061, %v252
  %1064 = vst.msk [vmem:[#allocation3 + $0x48] sm:$0xf] %vm1061, %v253
  %1065 = vst.msk [vmem:[#allocation3 + $0x4c] sm:$0xf] %vm1061, %v254
  %1066 = vst.msk [vmem:[#allocation3 + $0x50] sm:$0xf] %vm1061, %v255
  %1067 = vst.msk [vmem:[#allocation3 + $0x54] sm:$0xf] %vm1061, %v256
  %1068 = vst.msk [vmem:[#allocation3 + $0x58] sm:$0xf] %vm1061, %v257
  %1069 = vst.msk [vmem:[#allocation3 + $0x5c] sm:$0xf] %vm1061, %v258
  %1070 = vst.msk [vmem:[#allocation3 + $0x60] sm:$0xf] %vm1061, %v259
  %1071 = vst.msk [vmem:[#allocation3 + $0x64] sm:$0xf] %vm1061, %v260
  %1072 = vst.msk [vmem:[#allocation3 + $0x68] sm:$0xf] %vm1061, %v261
  %1073 = vst.msk [vmem:[#allocation3 + $0x6c] sm:$0xf] %vm1061, %v262
  %1074 = vst.msk [vmem:[#allocation3 + $0x70] sm:$0xf] %vm1061, %v263
  %1075 = vst.msk [vmem:[#allocation3 + $0x74] sm:$0xf] %vm1061, %v264
  %1076 = vst.msk [vmem:[#allocation3 + $0x78] sm:$0xf] %vm1061, %v265
  %1077 = vst.msk [vmem:[#allocation3 + $0x7c] sm:$0xf] %vm1061, %v266
  %vm1078 = vcmask 536072
  %1079 = vst.msk [vmem:[#allocation3 + $0x40] sm:$0xf] %vm1078, 1065369472
  %1080 = vst.msk [vmem:[#allocation3 + $0x44] sm:$0xf] %vm1078, 1065369472
  %1081 = vst.msk [vmem:[#allocation3 + $0x48] sm:$0xf] %vm1078, 1065369472
  %1082 = vst.msk [vmem:[#allocation3 + $0x4c] sm:$0xf] %vm1078, 1065369472
  %1083 = vst.msk [vmem:[#allocation3 + $0x50] sm:$0xf] %vm1078, 1065369472
  %1084 = vst.msk [vmem:[#allocation3 + $0x54] sm:$0xf] %vm1078, 1065369472
  %1085 = vst.msk [vmem:[#allocation3 + $0x58] sm:$0xf] %vm1078, 1065369472
  %1086 = vst.msk [vmem:[#allocation3 + $0x5c] sm:$0xf] %vm1078, 1065369472
  %1087 = vst.msk [vmem:[#allocation3 + $0x60] sm:$0xf] %vm1078, 1065369472
  %1088 = vst.msk [vmem:[#allocation3 + $0x64] sm:$0xf] %vm1078, 1065369472
  %1089 = vst.msk [vmem:[#allocation3 + $0x68] sm:$0xf] %vm1078, 1065369472
  %1090 = vst.msk [vmem:[#allocation3 + $0x6c] sm:$0xf] %vm1078, 1065369472
  %1091 = vst.msk [vmem:[#allocation3 + $0x70] sm:$0xf] %vm1078, 1065369472
  %1092 = vst.msk [vmem:[#allocation3 + $0x74] sm:$0xf] %vm1078, 1065369472
  %1093 = vst.msk [vmem:[#allocation3 + $0x78] sm:$0xf] %vm1078, 1065369472
  %1094 = vst.msk [vmem:[#allocation3 + $0x7c] sm:$0xf] %vm1078, 1065369472
  %1095 = vset.pattern.permute.xlu0 2
  %1096 = vperm.xlu0 %1095, %v345
  %v1097 = vpop.permute.xlu0 %1096
  %1099 = vset.pattern.permute.xlu0 2
  %1100 = vperm.xlu0 %1099, %v347
  %v1101 = vpop.permute.xlu0 %1100
  %1103 = vset.pattern.permute.xlu0 2
  %1104 = vperm.xlu0 %1103, %v350
  %v1105 = vpop.permute.xlu0 %1104
  %1107 = vset.pattern.permute.xlu0 2
  %1108 = vperm.xlu0 %1107, %v352
  %v1109 = vpop.permute.xlu0 %1108
  %1111 = vset.pattern.permute.xlu0 2
  %1112 = vperm.xlu0 %1111, %v355
  %v1113 = vpop.permute.xlu0 %1112
  %1115 = vset.pattern.permute.xlu0 2
  %1116 = vperm.xlu0 %1115, %v357
  %v1117 = vpop.permute.xlu0 %1116
  %1119 = vset.pattern.permute.xlu0 2
  %1120 = vperm.xlu0 %1119, %v360
  %v1121 = vpop.permute.xlu0 %1120
  %1123 = vset.pattern.permute.xlu0 2
  %1124 = vperm.xlu0 %1123, %v362
  %v1125 = vpop.permute.xlu0 %1124
  %1127 = vset.pattern.permute.xlu0 2
  %1128 = vperm.xlu0 %1127, %v365
  %v1129 = vpop.permute.xlu0 %1128
  %1131 = vset.pattern.permute.xlu0 2
  %1132 = vperm.xlu0 %1131, %v367
  %v1133 = vpop.permute.xlu0 %1132
  %1135 = vset.pattern.permute.xlu0 2
  %1136 = vperm.xlu0 %1135, %v370
  %v1137 = vpop.permute.xlu0 %1136
  %1139 = vset.pattern.permute.xlu0 2
  %1140 = vperm.xlu0 %1139, %v372
  %v1141 = vpop.permute.xlu0 %1140
  %1143 = vset.pattern.permute.xlu0 2
  %1144 = vperm.xlu0 %1143, %v375
  %v1145 = vpop.permute.xlu0 %1144
  %1147 = vset.pattern.permute.xlu0 2
  %1148 = vperm.xlu0 %1147, %v377
  %v1149 = vpop.permute.xlu0 %1148
  %1151 = vset.pattern.permute.xlu0 2
  %1152 = vperm.xlu0 %1151, %v380
  %v1153 = vpop.permute.xlu0 %1152
  %1155 = vset.pattern.permute.xlu0 2
  %1156 = vperm.xlu0 %1155, %v382
  %v1157 = vpop.permute.xlu0 %1156
  %v1159 = vperm.slane %v397, 2
  %v1160 = vadd.f32 %v1097, %v1159
  %v1161 = vadd.f32 %v1101, %v1159
  %v1162 = vadd.f32 %v1105, %v1159
  %v1163 = vadd.f32 %v1109, %v1159
  %v1164 = vadd.f32 %v1113, %v1159
  %v1165 = vadd.f32 %v1117, %v1159
  %v1166 = vadd.f32 %v1121, %v1159
  %v1167 = vadd.f32 %v1125, %v1159
  %v1168 = vadd.f32 %v1129, %v1159
  %v1169 = vadd.f32 %v1133, %v1159
  %v1170 = vadd.f32 %v1137, %v1159
  %v1171 = vadd.f32 %v1141, %v1159
  %v1172 = vadd.f32 %v1145, %v1159
  %v1173 = vadd.f32 %v1149, %v1159
  %v1174 = vadd.f32 %v1153, %v1159
  %v1175 = vadd.f32 %v1157, %v1159
  %v1176 = vmul.f32 %v1160, 0.2
  %v1177 = vmul.f32 %v1161, 0.2
  %v1178 = vmul.f32 %v1162, 0.2
  %v1179 = vmul.f32 %v1163, 0.2
  %v1180 = vmul.f32 %v1164, 0.2
  %v1181 = vmul.f32 %v1165, 0.2
  %v1182 = vmul.f32 %v1166, 0.2
  %v1183 = vmul.f32 %v1167, 0.2
  %v1184 = vmul.f32 %v1168, 0.2
  %v1185 = vmul.f32 %v1169, 0.2
  %v1186 = vmul.f32 %v1170, 0.2
  %v1187 = vmul.f32 %v1171, 0.2
  %v1188 = vmul.f32 %v1172, 0.2
  %v1189 = vmul.f32 %v1173, 0.2
  %v1190 = vmul.f32 %v1174, 0.2
  %v1191 = vmul.f32 %v1175, 0.2
  %v1192 = vmax.f32 %v1160, %v1176
  %v1193 = vmax.f32 %v1161, %v1177
  %v1194 = vmax.f32 %v1162, %v1178
  %v1195 = vmax.f32 %v1163, %v1179
  %v1196 = vmax.f32 %v1164, %v1180
  %v1197 = vmax.f32 %v1165, %v1181
  %v1198 = vmax.f32 %v1166, %v1182
  %v1199 = vmax.f32 %v1167, %v1183
  %v1200 = vmax.f32 %v1168, %v1184
  %v1201 = vmax.f32 %v1169, %v1185
  %v1202 = vmax.f32 %v1170, %v1186
  %v1203 = vmax.f32 %v1171, %v1187
  %v1204 = vmax.f32 %v1172, %v1188
  %v1205 = vmax.f32 %v1173, %v1189
  %v1206 = vmax.f32 %v1174, %v1190
  %v1207 = vmax.f32 %v1175, %v1191
  %v1208 = vadd.f32 %v1192, %v86
  %v1209 = vadd.f32 %v1193, %v87
  %v1210 = vadd.f32 %v1194, %v88
  %v1211 = vadd.f32 %v1195, %v89
  %v1212 = vadd.f32 %v1196, %v90
  %v1213 = vadd.f32 %v1197, %v91
  %v1214 = vadd.f32 %v1198, %v92
  %v1215 = vadd.f32 %v1199, %v93
  %v1216 = vadd.f32 %v1200, %v94
  %v1217 = vadd.f32 %v1201, %v95
  %v1218 = vadd.f32 %v1202, %v96
  %v1219 = vadd.f32 %v1203, %v97
  %v1220 = vadd.f32 %v1204, %v98
  %v1221 = vadd.f32 %v1205, %v99
  %v1222 = vadd.f32 %v1206, %v100
  %v1223 = vadd.f32 %v1207, %v101
  %1224 = vmax.xlane.f32.xlu0 %v1208
  %v1225 = vpop.xlane.xlu0 %1224
  %1226 = vmax.xlane.f32.xlu0 %v1209
  %v1227 = vpop.xlane.xlu0 %1226
  %1228 = vmax.xlane.f32.xlu0 %v1210
  %v1229 = vpop.xlane.xlu0 %1228
  %1230 = vmax.xlane.f32.xlu0 %v1211
  %v1231 = vpop.xlane.xlu0 %1230
  %1232 = vmax.xlane.f32.xlu0 %v1212
  %v1233 = vpop.xlane.xlu0 %1232
  %1234 = vmax.xlane.f32.xlu0 %v1213
  %v1235 = vpop.xlane.xlu0 %1234
  %1236 = vmax.xlane.f32.xlu0 %v1214
  %v1237 = vpop.xlane.xlu0 %1236
  %1238 = vmax.xlane.f32.xlu0 %v1215
  %v1239 = vpop.xlane.xlu0 %1238
  %1240 = vmax.xlane.f32.xlu0 %v1216
  %v1241 = vpop.xlane.xlu0 %1240
  %1242 = vmax.xlane.f32.xlu0 %v1217
  %v1243 = vpop.xlane.xlu0 %1242
  %1244 = vmax.xlane.f32.xlu0 %v1218
  %v1245 = vpop.xlane.xlu0 %1244
  %1246 = vmax.xlane.f32.xlu0 %v1219
  %v1247 = vpop.xlane.xlu0 %1246
  %1248 = vmax.xlane.f32.xlu0 %v1220
  %v1249 = vpop.xlane.xlu0 %1248
  %1250 = vmax.xlane.f32.xlu0 %v1221
  %v1251 = vpop.xlane.xlu0 %1250
  %1252 = vmax.xlane.f32.xlu0 %v1222
  %v1253 = vpop.xlane.xlu0 %1252
  %1254 = vmax.xlane.f32.xlu0 %v1223
  %v1255 = vpop.xlane.xlu0 %1254
  %v1256 = vsub.f32 %v1208, %v1225
  %v1257 = vsub.f32 %v1209, %v1227
  %v1258 = vsub.f32 %v1210, %v1229
  %v1259 = vsub.f32 %v1211, %v1231
  %v1260 = vsub.f32 %v1212, %v1233
  %v1261 = vsub.f32 %v1213, %v1235
  %v1262 = vsub.f32 %v1214, %v1237
  %v1263 = vsub.f32 %v1215, %v1239
  %v1264 = vsub.f32 %v1216, %v1241
  %v1265 = vsub.f32 %v1217, %v1243
  %v1266 = vsub.f32 %v1218, %v1245
  %v1267 = vsub.f32 %v1219, %v1247
  %v1268 = vsub.f32 %v1220, %v1249
  %v1269 = vsub.f32 %v1221, %v1251
  %v1270 = vsub.f32 %v1222, %v1253
  %v1271 = vsub.f32 %v1223, %v1255
  %v1272 = vmul.f32 %v1256, 1.442695
  %v1273 = vpow.pop %v1272
  %v1274 = vmul.f32 %v1257, 1.442695
  %v1275 = vpow.pop %v1274
  %v1276 = vmul.f32 %v1258, 1.442695
  %v1277 = vpow.pop %v1276
  %v1278 = vmul.f32 %v1259, 1.442695
  %v1279 = vpow.pop %v1278
  %v1280 = vmul.f32 %v1260, 1.442695
  %v1281 = vpow.pop %v1280
  %v1282 = vmul.f32 %v1261, 1.442695
  %v1283 = vpow.pop %v1282
  %v1284 = vmul.f32 %v1262, 1.442695
  %v1285 = vpow.pop %v1284
  %v1286 = vmul.f32 %v1263, 1.442695
  %v1287 = vpow.pop %v1286
  %v1288 = vmul.f32 %v1264, 1.442695
  %v1289 = vpow.pop %v1288
  %v1290 = vmul.f32 %v1265, 1.442695
  %v1291 = vpow.pop %v1290
  %v1292 = vmul.f32 %v1266, 1.442695
  %v1293 = vpow.pop %v1292
  %v1294 = vmul.f32 %v1267, 1.442695
  %v1295 = vpow.pop %v1294
  %v1296 = vmul.f32 %v1268, 1.442695
  %v1297 = vpow.pop %v1296
  %v1298 = vmul.f32 %v1269, 1.442695
  %v1299 = vpow.pop %v1298
  %v1300 = vmul.f32 %v1270, 1.442695
  %v1301 = vpow.pop %v1300
  %v1302 = vmul.f32 %v1271, 1.442695
  %v1303 = vpow.pop %v1302
  %v1304 = vpack.c.bf16 %v1273, %v1273
  %v1305 = vpack.c.bf16 %v1275, %v1275
  %v1306 = vpack.c.bf16 %v1277, %v1277
  %v1307 = vpack.c.bf16 %v1279, %v1279
  %v1308 = vpack.c.bf16 %v1281, %v1281
  %v1309 = vpack.c.bf16 %v1283, %v1283
  %v1310 = vpack.c.bf16 %v1285, %v1285
  %v1311 = vpack.c.bf16 %v1287, %v1287
  %v1312 = vpack.c.bf16 %v1289, %v1289
  %v1313 = vpack.c.bf16 %v1291, %v1291
  %v1314 = vpack.c.bf16 %v1293, %v1293
  %v1315 = vpack.c.bf16 %v1295, %v1295
  %v1316 = vpack.c.bf16 %v1297, %v1297
  %v1317 = vpack.c.bf16 %v1299, %v1299
  %v1318 = vpack.c.bf16 %v1301, %v1301
  %v1319 = vpack.c.bf16 %v1303, %v1303
  %1320 = vst [vmem:[#allocation2 + $0x8] sm:$0xf] %v1304
  %1321 = vst [vmem:[#allocation2 + $0x28] sm:$0xf] %v1305
  %1322 = vst [vmem:[#allocation2 + $0x48] sm:$0xf] %v1306
  %1323 = vst [vmem:[#allocation2 + $0x68] sm:$0xf] %v1307
  %1324 = vst [vmem:[#allocation2 + $0x88] sm:$0xf] %v1308
  %1325 = vst [vmem:[#allocation2 + $0xa8] sm:$0xf] %v1309
  %1326 = vst [vmem:[#allocation2 + $0xc8] sm:$0xf] %v1310
  %1327 = vst [vmem:[#allocation2 + $0xe8] sm:$0xf] %v1311
  %1328 = vst [vmem:[#allocation2 + $0x108] sm:$0xf] %v1312
  %1329 = vst [vmem:[#allocation2 + $0x128] sm:$0xf] %v1313
  %1330 = vst [vmem:[#allocation2 + $0x148] sm:$0xf] %v1314
  %1331 = vst [vmem:[#allocation2 + $0x168] sm:$0xf] %v1315
  %1332 = vst [vmem:[#allocation2 + $0x188] sm:$0xf] %v1316
  %1333 = vst [vmem:[#allocation2 + $0x1a8] sm:$0xf] %v1317
  %1334 = vst [vmem:[#allocation2 + $0x1c8] sm:$0xf] %v1318
  %1335 = vst [vmem:[#allocation2 + $0x1e8] sm:$0xf] %v1319
  %vm1336 = vcmask 191616
  %1337 = vst.msk [vmem:[#allocation3 + $0x80] sm:$0xf] %vm1336, %v251
  %1338 = vst.msk [vmem:[#allocation3 + $0x84] sm:$0xf] %vm1336, %v252
  %1339 = vst.msk [vmem:[#allocation3 + $0x88] sm:$0xf] %vm1336, %v253
  %1340 = vst.msk [vmem:[#allocation3 + $0x8c] sm:$0xf] %vm1336, %v254
  %1341 = vst.msk [vmem:[#allocation3 + $0x90] sm:$0xf] %vm1336, %v255
  %1342 = vst.msk [vmem:[#allocation3 + $0x94] sm:$0xf] %vm1336, %v256
  %1343 = vst.msk [vmem:[#allocation3 + $0x98] sm:$0xf] %vm1336, %v257
  %1344 = vst.msk [vmem:[#allocation3 + $0x9c] sm:$0xf] %vm1336, %v258
  %1345 = vst.msk [vmem:[#allocation3 + $0xa0] sm:$0xf] %vm1336, %v259
  %1346 = vst.msk [vmem:[#allocation3 + $0xa4] sm:$0xf] %vm1336, %v260
  %1347 = vst.msk [vmem:[#allocation3 + $0xa8] sm:$0xf] %vm1336, %v261
  %1348 = vst.msk [vmem:[#allocation3 + $0xac] sm:$0xf] %vm1336, %v262
  %1349 = vst.msk [vmem:[#allocation3 + $0xb0] sm:$0xf] %vm1336, %v263
  %1350 = vst.msk [vmem:[#allocation3 + $0xb4] sm:$0xf] %vm1336, %v264
  %1351 = vst.msk [vmem:[#allocation3 + $0xb8] sm:$0xf] %vm1336, %v265
  %1352 = vst.msk [vmem:[#allocation3 + $0xbc] sm:$0xf] %vm1336, %v266
  %vm1353 = vcmask 544272
  %1354 = vst.msk [vmem:[#allocation3 + $0x80] sm:$0xf] %vm1353, 1065369472
  %1355 = vst.msk [vmem:[#allocation3 + $0x84] sm:$0xf] %vm1353, 1065369472
  %1356 = vst.msk [vmem:[#allocation3 + $0x88] sm:$0xf] %vm1353, 1065369472
  %1357 = vst.msk [vmem:[#allocation3 + $0x8c] sm:$0xf] %vm1353, 1065369472
  %1358 = vst.msk [vmem:[#allocation3 + $0x90] sm:$0xf] %vm1353, 1065369472
  %1359 = vst.msk [vmem:[#allocation3 + $0x94] sm:$0xf] %vm1353, 1065369472
  %1360 = vst.msk [vmem:[#allocation3 + $0x98] sm:$0xf] %vm1353, 1065369472
  %1361 = vst.msk [vmem:[#allocation3 + $0x9c] sm:$0xf] %vm1353, 1065369472
  %1362 = vst.msk [vmem:[#allocation3 + $0xa0] sm:$0xf] %vm1353, 1065369472
  %1363 = vst.msk [vmem:[#allocation3 + $0xa4] sm:$0xf] %vm1353, 1065369472
  %1364 = vst.msk [vmem:[#allocation3 + $0xa8] sm:$0xf] %vm1353, 1065369472
  %1365 = vst.msk [vmem:[#allocation3 + $0xac] sm:$0xf] %vm1353, 1065369472
  %1366 = vst.msk [vmem:[#allocation3 + $0xb0] sm:$0xf] %vm1353, 1065369472
  %1367 = vst.msk [vmem:[#allocation3 + $0xb4] sm:$0xf] %vm1353, 1065369472
  %1368 = vst.msk [vmem:[#allocation3 + $0xb8] sm:$0xf] %vm1353, 1065369472
  %1369 = vst.msk [vmem:[#allocation3 + $0xbc] sm:$0xf] %vm1353, 1065369472
  %1370 = vset.pattern.permute.xlu0 3
  %1371 = vperm.xlu0 %1370, %v345
  %v1372 = vpop.permute.xlu0 %1371
  %1374 = vset.pattern.permute.xlu0 3
  %1375 = vperm.xlu0 %1374, %v347
  %v1376 = vpop.permute.xlu0 %1375
  %1378 = vset.pattern.permute.xlu0 3
  %1379 = vperm.xlu0 %1378, %v350
  %v1380 = vpop.permute.xlu0 %1379
  %1382 = vset.pattern.permute.xlu0 3
  %1383 = vperm.xlu0 %1382, %v352
  %v1384 = vpop.permute.xlu0 %1383
  %1386 = vset.pattern.permute.xlu0 3
  %1387 = vperm.xlu0 %1386, %v355
  %v1388 = vpop.permute.xlu0 %1387
  %1390 = vset.pattern.permute.xlu0 3
  %1391 = vperm.xlu0 %1390, %v357
  %v1392 = vpop.permute.xlu0 %1391
  %1394 = vset.pattern.permute.xlu0 3
  %1395 = vperm.xlu0 %1394, %v360
  %v1396 = vpop.permute.xlu0 %1395
  %1398 = vset.pattern.permute.xlu0 3
  %1399 = vperm.xlu0 %1398, %v362
  %v1400 = vpop.permute.xlu0 %1399
  %1402 = vset.pattern.permute.xlu0 3
  %1403 = vperm.xlu0 %1402, %v365
  %v1404 = vpop.permute.xlu0 %1403
  %1406 = vset.pattern.permute.xlu0 3
  %1407 = vperm.xlu0 %1406, %v367
  %v1408 = vpop.permute.xlu0 %1407
  %1410 = vset.pattern.permute.xlu0 3
  %1411 = vperm.xlu0 %1410, %v370
  %v1412 = vpop.permute.xlu0 %1411
  %1414 = vset.pattern.permute.xlu0 3
  %1415 = vperm.xlu0 %1414, %v372
  %v1416 = vpop.permute.xlu0 %1415
  %1418 = vset.pattern.permute.xlu0 3
  %1419 = vperm.xlu0 %1418, %v375
  %v1420 = vpop.permute.xlu0 %1419
  %1422 = vset.pattern.permute.xlu0 3
  %1423 = vperm.xlu0 %1422, %v377
  %v1424 = vpop.permute.xlu0 %1423
  %1426 = vset.pattern.permute.xlu0 3
  %1427 = vperm.xlu0 %1426, %v380
  %v1428 = vpop.permute.xlu0 %1427
  %1430 = vset.pattern.permute.xlu0 3
  %1431 = vperm.xlu0 %1430, %v382
  %v1432 = vpop.permute.xlu0 %1431
  %v1434 = vperm.slane %v397, 3
  %v1435 = vadd.f32 %v1372, %v1434
  %v1436 = vadd.f32 %v1376, %v1434
  %v1437 = vadd.f32 %v1380, %v1434
  %v1438 = vadd.f32 %v1384, %v1434
  %v1439 = vadd.f32 %v1388, %v1434
  %v1440 = vadd.f32 %v1392, %v1434
  %v1441 = vadd.f32 %v1396, %v1434
  %v1442 = vadd.f32 %v1400, %v1434
  %v1443 = vadd.f32 %v1404, %v1434
  %v1444 = vadd.f32 %v1408, %v1434
  %v1445 = vadd.f32 %v1412, %v1434
  %v1446 = vadd.f32 %v1416, %v1434
  %v1447 = vadd.f32 %v1420, %v1434
  %v1448 = vadd.f32 %v1424, %v1434
  %v1449 = vadd.f32 %v1428, %v1434
  %v1450 = vadd.f32 %v1432, %v1434
  %v1451 = vmul.f32 %v1435, 0.2
  %v1452 = vmul.f32 %v1436, 0.2
  %v1453 = vmul.f32 %v1437, 0.2
  %v1454 = vmul.f32 %v1438, 0.2
  %v1455 = vmul.f32 %v1439, 0.2
  %v1456 = vmul.f32 %v1440, 0.2
  %v1457 = vmul.f32 %v1441, 0.2
  %v1458 = vmul.f32 %v1442, 0.2
  %v1459 = vmul.f32 %v1443, 0.2
  %v1460 = vmul.f32 %v1444, 0.2
  %v1461 = vmul.f32 %v1445, 0.2
  %v1462 = vmul.f32 %v1446, 0.2
  %v1463 = vmul.f32 %v1447, 0.2
  %v1464 = vmul.f32 %v1448, 0.2
  %v1465 = vmul.f32 %v1449, 0.2
  %v1466 = vmul.f32 %v1450, 0.2
  %v1467 = vmax.f32 %v1435, %v1451
  %v1468 = vmax.f32 %v1436, %v1452
  %v1469 = vmax.f32 %v1437, %v1453
  %v1470 = vmax.f32 %v1438, %v1454
  %v1471 = vmax.f32 %v1439, %v1455
  %v1472 = vmax.f32 %v1440, %v1456
  %v1473 = vmax.f32 %v1441, %v1457
  %v1474 = vmax.f32 %v1442, %v1458
  %v1475 = vmax.f32 %v1443, %v1459
  %v1476 = vmax.f32 %v1444, %v1460
  %v1477 = vmax.f32 %v1445, %v1461
  %v1478 = vmax.f32 %v1446, %v1462
  %v1479 = vmax.f32 %v1447, %v1463
  %v1480 = vmax.f32 %v1448, %v1464
  %v1481 = vmax.f32 %v1449, %v1465
  %v1482 = vmax.f32 %v1450, %v1466
  %v1483 = vadd.f32 %v1467, %v86
  %v1484 = vadd.f32 %v1468, %v87
  %v1485 = vadd.f32 %v1469, %v88
  %v1486 = vadd.f32 %v1470, %v89
  %v1487 = vadd.f32 %v1471, %v90
  %v1488 = vadd.f32 %v1472, %v91
  %v1489 = vadd.f32 %v1473, %v92
  %v1490 = vadd.f32 %v1474, %v93
  %v1491 = vadd.f32 %v1475, %v94
  %v1492 = vadd.f32 %v1476, %v95
  %v1493 = vadd.f32 %v1477, %v96
  %v1494 = vadd.f32 %v1478, %v97
  %v1495 = vadd.f32 %v1479, %v98
  %v1496 = vadd.f32 %v1480, %v99
  %v1497 = vadd.f32 %v1481, %v100
  %v1498 = vadd.f32 %v1482, %v101
  %1499 = vmax.xlane.f32.xlu0 %v1483
  %v1500 = vpop.xlane.xlu0 %1499
  %1501 = vmax.xlane.f32.xlu0 %v1484
  %v1502 = vpop.xlane.xlu0 %1501
  %1503 = vmax.xlane.f32.xlu0 %v1485
  %v1504 = vpop.xlane.xlu0 %1503
  %1505 = vmax.xlane.f32.xlu0 %v1486
  %v1506 = vpop.xlane.xlu0 %1505
  %1507 = vmax.xlane.f32.xlu0 %v1487
  %v1508 = vpop.xlane.xlu0 %1507
  %1509 = vmax.xlane.f32.xlu0 %v1488
  %v1510 = vpop.xlane.xlu0 %1509
  %1511 = vmax.xlane.f32.xlu0 %v1489
  %v1512 = vpop.xlane.xlu0 %1511
  %1513 = vmax.xlane.f32.xlu0 %v1490
  %v1514 = vpop.xlane.xlu0 %1513
  %1515 = vmax.xlane.f32.xlu0 %v1491
  %v1516 = vpop.xlane.xlu0 %1515
  %1517 = vmax.xlane.f32.xlu0 %v1492
  %v1518 = vpop.xlane.xlu0 %1517
  %1519 = vmax.xlane.f32.xlu0 %v1493
  %v1520 = vpop.xlane.xlu0 %1519
  %1521 = vmax.xlane.f32.xlu0 %v1494
  %v1522 = vpop.xlane.xlu0 %1521
  %1523 = vmax.xlane.f32.xlu0 %v1495
  %v1524 = vpop.xlane.xlu0 %1523
  %1525 = vmax.xlane.f32.xlu0 %v1496
  %v1526 = vpop.xlane.xlu0 %1525
  %1527 = vmax.xlane.f32.xlu0 %v1497
  %v1528 = vpop.xlane.xlu0 %1527
  %1529 = vmax.xlane.f32.xlu0 %v1498
  %v1530 = vpop.xlane.xlu0 %1529
  %v1531 = vsub.f32 %v1483, %v1500
  %v1532 = vsub.f32 %v1484, %v1502
  %v1533 = vsub.f32 %v1485, %v1504
  %v1534 = vsub.f32 %v1486, %v1506
  %v1535 = vsub.f32 %v1487, %v1508
  %v1536 = vsub.f32 %v1488, %v1510
  %v1537 = vsub.f32 %v1489, %v1512
  %v1538 = vsub.f32 %v1490, %v1514
  %v1539 = vsub.f32 %v1491, %v1516
  %v1540 = vsub.f32 %v1492, %v1518
  %v1541 = vsub.f32 %v1493, %v1520
  %v1542 = vsub.f32 %v1494, %v1522
  %v1543 = vsub.f32 %v1495, %v1524
  %v1544 = vsub.f32 %v1496, %v1526
  %v1545 = vsub.f32 %v1497, %v1528
  %v1546 = vsub.f32 %v1498, %v1530
  %v1547 = vmul.f32 %v1531, 1.442695
  %v1548 = vpow.pop %v1547
  %v1549 = vmul.f32 %v1532, 1.442695
  %v1550 = vpow.pop %v1549
  %v1551 = vmul.f32 %v1533, 1.442695
  %v1552 = vpow.pop %v1551
  %v1553 = vmul.f32 %v1534, 1.442695
  %v1554 = vpow.pop %v1553
  %v1555 = vmul.f32 %v1535, 1.442695
  %v1556 = vpow.pop %v1555
  %v1557 = vmul.f32 %v1536, 1.442695
  %v1558 = vpow.pop %v1557
  %v1559 = vmul.f32 %v1537, 1.442695
  %v1560 = vpow.pop %v1559
  %v1561 = vmul.f32 %v1538, 1.442695
  %v1562 = vpow.pop %v1561
  %v1563 = vmul.f32 %v1539, 1.442695
  %v1564 = vpow.pop %v1563
  %v1565 = vmul.f32 %v1540, 1.442695
  %v1566 = vpow.pop %v1565
  %v1567 = vmul.f32 %v1541, 1.442695
  %v1568 = vpow.pop %v1567
  %v1569 = vmul.f32 %v1542, 1.442695
  %v1570 = vpow.pop %v1569
  %v1571 = vmul.f32 %v1543, 1.442695
  %v1572 = vpow.pop %v1571
  %v1573 = vmul.f32 %v1544, 1.442695
  %v1574 = vpow.pop %v1573
  %v1575 = vmul.f32 %v1545, 1.442695
  %v1576 = vpow.pop %v1575
  %v1577 = vmul.f32 %v1546, 1.442695
  %v1578 = vpow.pop %v1577
  %v1579 = vpack.c.bf16 %v1548, %v1548
  %v1580 = vpack.c.bf16 %v1550, %v1550
  %v1581 = vpack.c.bf16 %v1552, %v1552
  %v1582 = vpack.c.bf16 %v1554, %v1554
  %v1583 = vpack.c.bf16 %v1556, %v1556
  %v1584 = vpack.c.bf16 %v1558, %v1558
  %v1585 = vpack.c.bf16 %v1560, %v1560
  %v1586 = vpack.c.bf16 %v1562, %v1562
  %v1587 = vpack.c.bf16 %v1564, %v1564
  %v1588 = vpack.c.bf16 %v1566, %v1566
  %v1589 = vpack.c.bf16 %v1568, %v1568
  %v1590 = vpack.c.bf16 %v1570, %v1570
  %v1591 = vpack.c.bf16 %v1572, %v1572
  %v1592 = vpack.c.bf16 %v1574, %v1574
  %v1593 = vpack.c.bf16 %v1576, %v1576
  %v1594 = vpack.c.bf16 %v1578, %v1578
  %1595 = vst [vmem:[#allocation2 + $0xc] sm:$0xf] %v1579
  %1596 = vst [vmem:[#allocation2 + $0x2c] sm:$0xf] %v1580
  %1597 = vst [vmem:[#allocation2 + $0x4c] sm:$0xf] %v1581
  %1598 = vst [vmem:[#allocation2 + $0x6c] sm:$0xf] %v1582
  %1599 = vst [vmem:[#allocation2 + $0x8c] sm:$0xf] %v1583
  %1600 = vst [vmem:[#allocation2 + $0xac] sm:$0xf] %v1584
  %1601 = vst [vmem:[#allocation2 + $0xcc] sm:$0xf] %v1585
  %1602 = vst [vmem:[#allocation2 + $0xec] sm:$0xf] %v1586
  %1603 = vst [vmem:[#allocation2 + $0x10c] sm:$0xf] %v1587
  %1604 = vst [vmem:[#allocation2 + $0x12c] sm:$0xf] %v1588
  %1605 = vst [vmem:[#allocation2 + $0x14c] sm:$0xf] %v1589
  %1606 = vst [vmem:[#allocation2 + $0x16c] sm:$0xf] %v1590
  %1607 = vst [vmem:[#allocation2 + $0x18c] sm:$0xf] %v1591
  %1608 = vst [vmem:[#allocation2 + $0x1ac] sm:$0xf] %v1592
  %1609 = vst [vmem:[#allocation2 + $0x1cc] sm:$0xf] %v1593
  %1610 = vst [vmem:[#allocation2 + $0x1ec] sm:$0xf] %v1594
  %vm1611 = vcmask 257216
  %1612 = vst.msk [vmem:[#allocation3 + $0xc0] sm:$0xf] %vm1611, %v251
  %1613 = vst.msk [vmem:[#allocation3 + $0xc4] sm:$0xf] %vm1611, %v252
  %1614 = vst.msk [vmem:[#allocation3 + $0xc8] sm:$0xf] %vm1611, %v253
  %1615 = vst.msk [vmem:[#allocation3 + $0xcc] sm:$0xf] %vm1611, %v254
  %1616 = vst.msk [vmem:[#allocation3 + $0xd0] sm:$0xf] %vm1611, %v255
  %1617 = vst.msk [vmem:[#allocation3 + $0xd4] sm:$0xf] %vm1611, %v256
  %1618 = vst.msk [vmem:[#allocation3 + $0xd8] sm:$0xf] %vm1611, %v257
  %1619 = vst.msk [vmem:[#allocation3 + $0xdc] sm:$0xf] %vm1611, %v258
  %1620 = vst.msk [vmem:[#allocation3 + $0xe0] sm:$0xf] %vm1611, %v259
  %1621 = vst.msk [vmem:[#allocation3 + $0xe4] sm:$0xf] %vm1611, %v260
  %1622 = vst.msk [vmem:[#allocation3 + $0xe8] sm:$0xf] %vm1611, %v261
  %1623 = vst.msk [vmem:[#allocation3 + $0xec] sm:$0xf] %vm1611, %v262
  %1624 = vst.msk [vmem:[#allocation3 + $0xf0] sm:$0xf] %vm1611, %v263
  %1625 = vst.msk [vmem:[#allocation3 + $0xf4] sm:$0xf] %vm1611, %v264
  %1626 = vst.msk [vmem:[#allocation3 + $0xf8] sm:$0xf] %vm1611, %v265
  %1627 = vst.msk [vmem:[#allocation3 + $0xfc] sm:$0xf] %vm1611, %v266
  %vm1628 = vcmask 552472
  %1629 = vst.msk [vmem:[#allocation3 + $0xc0] sm:$0xf] %vm1628, 1065369472
  %1630 = vst.msk [vmem:[#allocation3 + $0xc4] sm:$0xf] %vm1628, 1065369472
  %1631 = vst.msk [vmem:[#allocation3 + $0xc8] sm:$0xf] %vm1628, 1065369472
  %1632 = vst.msk [vmem:[#allocation3 + $0xcc] sm:$0xf] %vm1628, 1065369472
  %1633 = vst.msk [vmem:[#allocation3 + $0xd0] sm:$0xf] %vm1628, 1065369472
  %1634 = vst.msk [vmem:[#allocation3 + $0xd4] sm:$0xf] %vm1628, 1065369472
  %1635 = vst.msk [vmem:[#allocation3 + $0xd8] sm:$0xf] %vm1628, 1065369472
  %1636 = vst.msk [vmem:[#allocation3 + $0xdc] sm:$0xf] %vm1628, 1065369472
  %1637 = vst.msk [vmem:[#allocation3 + $0xe0] sm:$0xf] %vm1628, 1065369472
  %1638 = vst.msk [vmem:[#allocation3 + $0xe4] sm:$0xf] %vm1628, 1065369472
  %1639 = vst.msk [vmem:[#allocation3 + $0xe8] sm:$0xf] %vm1628, 1065369472
  %1640 = vst.msk [vmem:[#allocation3 + $0xec] sm:$0xf] %vm1628, 1065369472
  %1641 = vst.msk [vmem:[#allocation3 + $0xf0] sm:$0xf] %vm1628, 1065369472
  %1642 = vst.msk [vmem:[#allocation3 + $0xf4] sm:$0xf] %vm1628, 1065369472
  %1643 = vst.msk [vmem:[#allocation3 + $0xf8] sm:$0xf] %vm1628, 1065369472
  %1644 = vst.msk [vmem:[#allocation3 + $0xfc] sm:$0xf] %vm1628, 1065369472
  %1645 = vset.pattern.permute.xlu0 4
  %1646 = vperm.xlu0 %1645, %v345
  %v1647 = vpop.permute.xlu0 %1646
  %1649 = vset.pattern.permute.xlu0 4
  %1650 = vperm.xlu0 %1649, %v347
  %v1651 = vpop.permute.xlu0 %1650
  %1653 = vset.pattern.permute.xlu0 4
  %1654 = vperm.xlu0 %1653, %v350
  %v1655 = vpop.permute.xlu0 %1654
  %1657 = vset.pattern.permute.xlu0 4
  %1658 = vperm.xlu0 %1657, %v352
  %v1659 = vpop.permute.xlu0 %1658
  %1661 = vset.pattern.permute.xlu0 4
  %1662 = vperm.xlu0 %1661, %v355
  %v1663 = vpop.permute.xlu0 %1662
  %1665 = vset.pattern.permute.xlu0 4
  %1666 = vperm.xlu0 %1665, %v357
  %v1667 = vpop.permute.xlu0 %1666
  %1669 = vset.pattern.permute.xlu0 4
  %1670 = vperm.xlu0 %1669, %v360
  %v1671 = vpop.permute.xlu0 %1670
  %1673 = vset.pattern.permute.xlu0 4
  %1674 = vperm.xlu0 %1673, %v362
  %v1675 = vpop.permute.xlu0 %1674
  %1677 = vset.pattern.permute.xlu0 4
  %1678 = vperm.xlu0 %1677, %v365
  %v1679 = vpop.permute.xlu0 %1678
  %1681 = vset.pattern.permute.xlu0 4
  %1682 = vperm.xlu0 %1681, %v367
  %v1683 = vpop.permute.xlu0 %1682
  %1685 = vset.pattern.permute.xlu0 4
  %1686 = vperm.xlu0 %1685, %v370
  %v1687 = vpop.permute.xlu0 %1686
  %1689 = vset.pattern.permute.xlu0 4
  %1690 = vperm.xlu0 %1689, %v372
  %v1691 = vpop.permute.xlu0 %1690
  %1693 = vset.pattern.permute.xlu0 4
  %1694 = vperm.xlu0 %1693, %v375
  %v1695 = vpop.permute.xlu0 %1694
  %1697 = vset.pattern.permute.xlu0 4
  %1698 = vperm.xlu0 %1697, %v377
  %v1699 = vpop.permute.xlu0 %1698
  %1701 = vset.pattern.permute.xlu0 4
  %1702 = vperm.xlu0 %1701, %v380
  %v1703 = vpop.permute.xlu0 %1702
  %1705 = vset.pattern.permute.xlu0 4
  %1706 = vperm.xlu0 %1705, %v382
  %v1707 = vpop.permute.xlu0 %1706
  %v1709 = vperm.slane %v397, 4
  %v1710 = vadd.f32 %v1647, %v1709
  %v1711 = vadd.f32 %v1651, %v1709
  %v1712 = vadd.f32 %v1655, %v1709
  %v1713 = vadd.f32 %v1659, %v1709
  %v1714 = vadd.f32 %v1663, %v1709
  %v1715 = vadd.f32 %v1667, %v1709
  %v1716 = vadd.f32 %v1671, %v1709
  %v1717 = vadd.f32 %v1675, %v1709
  %v1718 = vadd.f32 %v1679, %v1709
  %v1719 = vadd.f32 %v1683, %v1709
  %v1720 = vadd.f32 %v1687, %v1709
  %v1721 = vadd.f32 %v1691, %v1709
  %v1722 = vadd.f32 %v1695, %v1709
  %v1723 = vadd.f32 %v1699, %v1709
  %v1724 = vadd.f32 %v1703, %v1709
  %v1725 = vadd.f32 %v1707, %v1709
  %v1726 = vmul.f32 %v1710, 0.2
  %v1727 = vmul.f32 %v1711, 0.2
  %v1728 = vmul.f32 %v1712, 0.2
  %v1729 = vmul.f32 %v1713, 0.2
  %v1730 = vmul.f32 %v1714, 0.2
  %v1731 = vmul.f32 %v1715, 0.2
  %v1732 = vmul.f32 %v1716, 0.2
  %v1733 = vmul.f32 %v1717, 0.2
  %v1734 = vmul.f32 %v1718, 0.2
  %v1735 = vmul.f32 %v1719, 0.2
  %v1736 = vmul.f32 %v1720, 0.2
  %v1737 = vmul.f32 %v1721, 0.2
  %v1738 = vmul.f32 %v1722, 0.2
  %v1739 = vmul.f32 %v1723, 0.2
  %v1740 = vmul.f32 %v1724, 0.2
  %v1741 = vmul.f32 %v1725, 0.2
  %v1742 = vmax.f32 %v1710, %v1726
  %v1743 = vmax.f32 %v1711, %v1727
  %v1744 = vmax.f32 %v1712, %v1728
  %v1745 = vmax.f32 %v1713, %v1729
  %v1746 = vmax.f32 %v1714, %v1730
  %v1747 = vmax.f32 %v1715, %v1731
  %v1748 = vmax.f32 %v1716, %v1732
  %v1749 = vmax.f32 %v1717, %v1733
  %v1750 = vmax.f32 %v1718, %v1734
  %v1751 = vmax.f32 %v1719, %v1735
  %v1752 = vmax.f32 %v1720, %v1736
  %v1753 = vmax.f32 %v1721, %v1737
  %v1754 = vmax.f32 %v1722, %v1738
  %v1755 = vmax.f32 %v1723, %v1739
  %v1756 = vmax.f32 %v1724, %v1740
  %v1757 = vmax.f32 %v1725, %v1741
  %v1758 = vadd.f32 %v1742, %v86
  %v1759 = vadd.f32 %v1743, %v87
  %v1760 = vadd.f32 %v1744, %v88
  %v1761 = vadd.f32 %v1745, %v89
  %v1762 = vadd.f32 %v1746, %v90
  %v1763 = vadd.f32 %v1747, %v91
  %v1764 = vadd.f32 %v1748, %v92
  %v1765 = vadd.f32 %v1749, %v93
  %v1766 = vadd.f32 %v1750, %v94
  %v1767 = vadd.f32 %v1751, %v95
  %v1768 = vadd.f32 %v1752, %v96
  %v1769 = vadd.f32 %v1753, %v97
  %v1770 = vadd.f32 %v1754, %v98
  %v1771 = vadd.f32 %v1755, %v99
  %v1772 = vadd.f32 %v1756, %v100
  %v1773 = vadd.f32 %v1757, %v101
  %1774 = vmax.xlane.f32.xlu0 %v1758
  %v1775 = vpop.xlane.xlu0 %1774
  %1776 = vmax.xlane.f32.xlu0 %v1759
  %v1777 = vpop.xlane.xlu0 %1776
  %1778 = vmax.xlane.f32.xlu0 %v1760
  %v1779 = vpop.xlane.xlu0 %1778
  %1780 = vmax.xlane.f32.xlu0 %v1761
  %v1781 = vpop.xlane.xlu0 %1780
  %1782 = vmax.xlane.f32.xlu0 %v1762
  %v1783 = vpop.xlane.xlu0 %1782
  %1784 = vmax.xlane.f32.xlu0 %v1763
  %v1785 = vpop.xlane.xlu0 %1784
  %1786 = vmax.xlane.f32.xlu0 %v1764
  %v1787 = vpop.xlane.xlu0 %1786
  %1788 = vmax.xlane.f32.xlu0 %v1765
  %v1789 = vpop.xlane.xlu0 %1788
  %1790 = vmax.xlane.f32.xlu0 %v1766
  %v1791 = vpop.xlane.xlu0 %1790
  %1792 = vmax.xlane.f32.xlu0 %v1767
  %v1793 = vpop.xlane.xlu0 %1792
  %1794 = vmax.xlane.f32.xlu0 %v1768
  %v1795 = vpop.xlane.xlu0 %1794
  %1796 = vmax.xlane.f32.xlu0 %v1769
  %v1797 = vpop.xlane.xlu0 %1796
  %1798 = vmax.xlane.f32.xlu0 %v1770
  %v1799 = vpop.xlane.xlu0 %1798
  %1800 = vmax.xlane.f32.xlu0 %v1771
  %v1801 = vpop.xlane.xlu0 %1800
  %1802 = vmax.xlane.f32.xlu0 %v1772
  %v1803 = vpop.xlane.xlu0 %1802
  %1804 = vmax.xlane.f32.xlu0 %v1773
  %v1805 = vpop.xlane.xlu0 %1804
  %v1806 = vsub.f32 %v1758, %v1775
  %v1807 = vsub.f32 %v1759, %v1777
  %v1808 = vsub.f32 %v1760, %v1779
  %v1809 = vsub.f32 %v1761, %v1781
  %v1810 = vsub.f32 %v1762, %v1783
  %v1811 = vsub.f32 %v1763, %v1785
  %v1812 = vsub.f32 %v1764, %v1787
  %v1813 = vsub.f32 %v1765, %v1789
  %v1814 = vsub.f32 %v1766, %v1791
  %v1815 = vsub.f32 %v1767, %v1793
  %v1816 = vsub.f32 %v1768, %v1795
  %v1817 = vsub.f32 %v1769, %v1797
  %v1818 = vsub.f32 %v1770, %v1799
  %v1819 = vsub.f32 %v1771, %v1801
  %v1820 = vsub.f32 %v1772, %v1803
  %v1821 = vsub.f32 %v1773, %v1805
  %v1822 = vmul.f32 %v1806, 1.442695
  %v1823 = vpow.pop %v1822
  %v1824 = vmul.f32 %v1807, 1.442695
  %v1825 = vpow.pop %v1824
  %v1826 = vmul.f32 %v1808, 1.442695
  %v1827 = vpow.pop %v1826
  %v1828 = vmul.f32 %v1809, 1.442695
  %v1829 = vpow.pop %v1828
  %v1830 = vmul.f32 %v1810, 1.442695
  %v1831 = vpow.pop %v1830
  %v1832 = vmul.f32 %v1811, 1.442695
  %v1833 = vpow.pop %v1832
  %v1834 = vmul.f32 %v1812, 1.442695
  %v1835 = vpow.pop %v1834
  %v1836 = vmul.f32 %v1813, 1.442695
  %v1837 = vpow.pop %v1836
  %v1838 = vmul.f32 %v1814, 1.442695
  %v1839 = vpow.pop %v1838
  %v1840 = vmul.f32 %v1815, 1.442695
  %v1841 = vpow.pop %v1840
  %v1842 = vmul.f32 %v1816, 1.442695
  %v1843 = vpow.pop %v1842
  %v1844 = vmul.f32 %v1817, 1.442695
  %v1845 = vpow.pop %v1844
  %v1846 = vmul.f32 %v1818, 1.442695
  %v1847 = vpow.pop %v1846
  %v1848 = vmul.f32 %v1819, 1.442695
  %v1849 = vpow.pop %v1848
  %v1850 = vmul.f32 %v1820, 1.442695
  %v1851 = vpow.pop %v1850
  %v1852 = vmul.f32 %v1821, 1.442695
  %v1853 = vpow.pop %v1852
  %v1854 = vpack.c.bf16 %v1823, %v1823
  %v1855 = vpack.c.bf16 %v1825, %v1825
  %v1856 = vpack.c.bf16 %v1827, %v1827
  %v1857 = vpack.c.bf16 %v1829, %v1829
  %v1858 = vpack.c.bf16 %v1831, %v1831
  %v1859 = vpack.c.bf16 %v1833, %v1833
  %v1860 = vpack.c.bf16 %v1835, %v1835
  %v1861 = vpack.c.bf16 %v1837, %v1837
  %v1862 = vpack.c.bf16 %v1839, %v1839
  %v1863 = vpack.c.bf16 %v1841, %v1841
  %v1864 = vpack.c.bf16 %v1843, %v1843
  %v1865 = vpack.c.bf16 %v1845, %v1845
  %v1866 = vpack.c.bf16 %v1847, %v1847
  %v1867 = vpack.c.bf16 %v1849, %v1849
  %v1868 = vpack.c.bf16 %v1851, %v1851
  %v1869 = vpack.c.bf16 %v1853, %v1853
  %1870 = vst [vmem:[#allocation2 + $0x10] sm:$0xf] %v1854
  %1871 = vst [vmem:[#allocation2 + $0x30] sm:$0xf] %v1855
  %1872 = vst [vmem:[#allocation2 + $0x50] sm:$0xf] %v1856
  %1873 = vst [vmem:[#allocation2 + $0x70] sm:$0xf] %v1857
  %1874 = vst [vmem:[#allocation2 + $0x90] sm:$0xf] %v1858
  %1875 = vst [vmem:[#allocation2 + $0xb0] sm:$0xf] %v1859
  %1876 = vst [vmem:[#allocation2 + $0xd0] sm:$0xf] %v1860
  %1877 = vst [vmem:[#allocation2 + $0xf0] sm:$0xf] %v1861
  %1878 = vst [vmem:[#allocation2 + $0x110] sm:$0xf] %v1862
  %1879 = vst [vmem:[#allocation2 + $0x130] sm:$0xf] %v1863
  %1880 = vst [vmem:[#allocation2 + $0x150] sm:$0xf] %v1864
  %1881 = vst [vmem:[#allocation2 + $0x170] sm:$0xf] %v1865
  %1882 = vst [vmem:[#allocation2 + $0x190] sm:$0xf] %v1866
  %1883 = vst [vmem:[#allocation2 + $0x1b0] sm:$0xf] %v1867
  %1884 = vst [vmem:[#allocation2 + $0x1d0] sm:$0xf] %v1868
  %1885 = vst [vmem:[#allocation2 + $0x1f0] sm:$0xf] %v1869
  %vm1886 = vcmask 322816
  %1887 = vst.msk [vmem:[#allocation3 + $0x100] sm:$0xf] %vm1886, %v251
  %1888 = vst.msk [vmem:[#allocation3 + $0x104] sm:$0xf] %vm1886, %v252
  %1889 = vst.msk [vmem:[#allocation3 + $0x108] sm:$0xf] %vm1886, %v253
  %1890 = vst.msk [vmem:[#allocation3 + $0x10c] sm:$0xf] %vm1886, %v254
  %1891 = vst.msk [vmem:[#allocation3 + $0x110] sm:$0xf] %vm1886, %v255
  %1892 = vst.msk [vmem:[#allocation3 + $0x114] sm:$0xf] %vm1886, %v256
  %1893 = vst.msk [vmem:[#allocation3 + $0x118] sm:$0xf] %vm1886, %v257
  %1894 = vst.msk [vmem:[#allocation3 + $0x11c] sm:$0xf] %vm1886, %v258
  %1895 = vst.msk [vmem:[#allocation3 + $0x120] sm:$0xf] %vm1886, %v259
  %1896 = vst.msk [vmem:[#allocation3 + $0x124] sm:$0xf] %vm1886, %v260
  %1897 = vst.msk [vmem:[#allocation3 + $0x128] sm:$0xf] %vm1886, %v261
  %1898 = vst.msk [vmem:[#allocation3 + $0x12c] sm:$0xf] %vm1886, %v262
  %1899 = vst.msk [vmem:[#allocation3 + $0x130] sm:$0xf] %vm1886, %v263
  %1900 = vst.msk [vmem:[#allocation3 + $0x134] sm:$0xf] %vm1886, %v264
  %1901 = vst.msk [vmem:[#allocation3 + $0x138] sm:$0xf] %vm1886, %v265
  %1902 = vst.msk [vmem:[#allocation3 + $0x13c] sm:$0xf] %vm1886, %v266
  %vm1903 = vcmask 560672
  %1904 = vst.msk [vmem:[#allocation3 + $0x100] sm:$0xf] %vm1903, 1065369472
  %1905 = vst.msk [vmem:[#allocation3 + $0x104] sm:$0xf] %vm1903, 1065369472
  %1906 = vst.msk [vmem:[#allocation3 + $0x108] sm:$0xf] %vm1903, 1065369472
  %1907 = vst.msk [vmem:[#allocation3 + $0x10c] sm:$0xf] %vm1903, 1065369472
  %1908 = vst.msk [vmem:[#allocation3 + $0x110] sm:$0xf] %vm1903, 1065369472
  %1909 = vst.msk [vmem:[#allocation3 + $0x114] sm:$0xf] %vm1903, 1065369472
  %1910 = vst.msk [vmem:[#allocation3 + $0x118] sm:$0xf] %vm1903, 1065369472
  %1911 = vst.msk [vmem:[#allocation3 + $0x11c] sm:$0xf] %vm1903, 1065369472
  %1912 = vst.msk [vmem:[#allocation3 + $0x120] sm:$0xf] %vm1903, 1065369472
  %1913 = vst.msk [vmem:[#allocation3 + $0x124] sm:$0xf] %vm1903, 1065369472
  %1914 = vst.msk [vmem:[#allocation3 + $0x128] sm:$0xf] %vm1903, 1065369472
  %1915 = vst.msk [vmem:[#allocation3 + $0x12c] sm:$0xf] %vm1903, 1065369472
  %1916 = vst.msk [vmem:[#allocation3 + $0x130] sm:$0xf] %vm1903, 1065369472
  %1917 = vst.msk [vmem:[#allocation3 + $0x134] sm:$0xf] %vm1903, 1065369472
  %1918 = vst.msk [vmem:[#allocation3 + $0x138] sm:$0xf] %vm1903, 1065369472
  %1919 = vst.msk [vmem:[#allocation3 + $0x13c] sm:$0xf] %vm1903, 1065369472
  %1920 = vset.pattern.permute.xlu0 5
  %1921 = vperm.xlu0 %1920, %v345
  %v1922 = vpop.permute.xlu0 %1921
  %1924 = vset.pattern.permute.xlu0 5
  %1925 = vperm.xlu0 %1924, %v347
  %v1926 = vpop.permute.xlu0 %1925
  %1928 = vset.pattern.permute.xlu0 5
  %1929 = vperm.xlu0 %1928, %v350
  %v1930 = vpop.permute.xlu0 %1929
  %1932 = vset.pattern.permute.xlu0 5
  %1933 = vperm.xlu0 %1932, %v352
  %v1934 = vpop.permute.xlu0 %1933
  %1936 = vset.pattern.permute.xlu0 5
  %1937 = vperm.xlu0 %1936, %v355
  %v1938 = vpop.permute.xlu0 %1937
  %1940 = vset.pattern.permute.xlu0 5
  %1941 = vperm.xlu0 %1940, %v357
  %v1942 = vpop.permute.xlu0 %1941
  %1944 = vset.pattern.permute.xlu0 5
  %1945 = vperm.xlu0 %1944, %v360
  %v1946 = vpop.permute.xlu0 %1945
  %1948 = vset.pattern.permute.xlu0 5
  %1949 = vperm.xlu0 %1948, %v362
  %v1950 = vpop.permute.xlu0 %1949
  %1952 = vset.pattern.permute.xlu0 5
  %1953 = vperm.xlu0 %1952, %v365
  %v1954 = vpop.permute.xlu0 %1953
  %1956 = vset.pattern.permute.xlu0 5
  %1957 = vperm.xlu0 %1956, %v367
  %v1958 = vpop.permute.xlu0 %1957
  %1960 = vset.pattern.permute.xlu0 5
  %1961 = vperm.xlu0 %1960, %v370
  %v1962 = vpop.permute.xlu0 %1961
  %1964 = vset.pattern.permute.xlu0 5
  %1965 = vperm.xlu0 %1964, %v372
  %v1966 = vpop.permute.xlu0 %1965
  %1968 = vset.pattern.permute.xlu0 5
  %1969 = vperm.xlu0 %1968, %v375
  %v1970 = vpop.permute.xlu0 %1969
  %1972 = vset.pattern.permute.xlu0 5
  %1973 = vperm.xlu0 %1972, %v377
  %v1974 = vpop.permute.xlu0 %1973
  %1976 = vset.pattern.permute.xlu0 5
  %1977 = vperm.xlu0 %1976, %v380
  %v1978 = vpop.permute.xlu0 %1977
  %1980 = vset.pattern.permute.xlu0 5
  %1981 = vperm.xlu0 %1980, %v382
  %v1982 = vpop.permute.xlu0 %1981
  %v1984 = vperm.slane %v397, 5
  %v1985 = vadd.f32 %v1922, %v1984
  %v1986 = vadd.f32 %v1926, %v1984
  %v1987 = vadd.f32 %v1930, %v1984
  %v1988 = vadd.f32 %v1934, %v1984
  %v1989 = vadd.f32 %v1938, %v1984
  %v1990 = vadd.f32 %v1942, %v1984
  %v1991 = vadd.f32 %v1946, %v1984
  %v1992 = vadd.f32 %v1950, %v1984
  %v1993 = vadd.f32 %v1954, %v1984
  %v1994 = vadd.f32 %v1958, %v1984
  %v1995 = vadd.f32 %v1962, %v1984
  %v1996 = vadd.f32 %v1966, %v1984
  %v1997 = vadd.f32 %v1970, %v1984
  %v1998 = vadd.f32 %v1974, %v1984
  %v1999 = vadd.f32 %v1978, %v1984
  %v2000 = vadd.f32 %v1982, %v1984
  %v2001 = vmul.f32 %v1985, 0.2
  %v2002 = vmul.f32 %v1986, 0.2
  %v2003 = vmul.f32 %v1987, 0.2
  %v2004 = vmul.f32 %v1988, 0.2
  %v2005 = vmul.f32 %v1989, 0.2
  %v2006 = vmul.f32 %v1990, 0.2
  %v2007 = vmul.f32 %v1991, 0.2
  %v2008 = vmul.f32 %v1992, 0.2
  %v2009 = vmul.f32 %v1993, 0.2
  %v2010 = vmul.f32 %v1994, 0.2
  %v2011 = vmul.f32 %v1995, 0.2
  %v2012 = vmul.f32 %v1996, 0.2
  %v2013 = vmul.f32 %v1997, 0.2
  %v2014 = vmul.f32 %v1998, 0.2
  %v2015 = vmul.f32 %v1999, 0.2
  %v2016 = vmul.f32 %v2000, 0.2
  %v2017 = vmax.f32 %v1985, %v2001
  %v2018 = vmax.f32 %v1986, %v2002
  %v2019 = vmax.f32 %v1987, %v2003
  %v2020 = vmax.f32 %v1988, %v2004
  %v2021 = vmax.f32 %v1989, %v2005
  %v2022 = vmax.f32 %v1990, %v2006
  %v2023 = vmax.f32 %v1991, %v2007
  %v2024 = vmax.f32 %v1992, %v2008
  %v2025 = vmax.f32 %v1993, %v2009
  %v2026 = vmax.f32 %v1994, %v2010
  %v2027 = vmax.f32 %v1995, %v2011
  %v2028 = vmax.f32 %v1996, %v2012
  %v2029 = vmax.f32 %v1997, %v2013
  %v2030 = vmax.f32 %v1998, %v2014
  %v2031 = vmax.f32 %v1999, %v2015
  %v2032 = vmax.f32 %v2000, %v2016
  %v2033 = vadd.f32 %v2017, %v86
  %v2034 = vadd.f32 %v2018, %v87
  %v2035 = vadd.f32 %v2019, %v88
  %v2036 = vadd.f32 %v2020, %v89
  %v2037 = vadd.f32 %v2021, %v90
  %v2038 = vadd.f32 %v2022, %v91
  %v2039 = vadd.f32 %v2023, %v92
  %v2040 = vadd.f32 %v2024, %v93
  %v2041 = vadd.f32 %v2025, %v94
  %v2042 = vadd.f32 %v2026, %v95
  %v2043 = vadd.f32 %v2027, %v96
  %v2044 = vadd.f32 %v2028, %v97
  %v2045 = vadd.f32 %v2029, %v98
  %v2046 = vadd.f32 %v2030, %v99
  %v2047 = vadd.f32 %v2031, %v100
  %v2048 = vadd.f32 %v2032, %v101
  %2049 = vmax.xlane.f32.xlu0 %v2033
  %v2050 = vpop.xlane.xlu0 %2049
  %2051 = vmax.xlane.f32.xlu0 %v2034
  %v2052 = vpop.xlane.xlu0 %2051
  %2053 = vmax.xlane.f32.xlu0 %v2035
  %v2054 = vpop.xlane.xlu0 %2053
  %2055 = vmax.xlane.f32.xlu0 %v2036
  %v2056 = vpop.xlane.xlu0 %2055
  %2057 = vmax.xlane.f32.xlu0 %v2037
  %v2058 = vpop.xlane.xlu0 %2057
  %2059 = vmax.xlane.f32.xlu0 %v2038
  %v2060 = vpop.xlane.xlu0 %2059
  %2061 = vmax.xlane.f32.xlu0 %v2039
  %v2062 = vpop.xlane.xlu0 %2061
  %2063 = vmax.xlane.f32.xlu0 %v2040
  %v2064 = vpop.xlane.xlu0 %2063
  %2065 = vmax.xlane.f32.xlu0 %v2041
  %v2066 = vpop.xlane.xlu0 %2065
  %2067 = vmax.xlane.f32.xlu0 %v2042
  %v2068 = vpop.xlane.xlu0 %2067
  %2069 = vmax.xlane.f32.xlu0 %v2043
  %v2070 = vpop.xlane.xlu0 %2069
  %2071 = vmax.xlane.f32.xlu0 %v2044
  %v2072 = vpop.xlane.xlu0 %2071
  %2073 = vmax.xlane.f32.xlu0 %v2045
  %v2074 = vpop.xlane.xlu0 %2073
  %2075 = vmax.xlane.f32.xlu0 %v2046
  %v2076 = vpop.xlane.xlu0 %2075
  %2077 = vmax.xlane.f32.xlu0 %v2047
  %v2078 = vpop.xlane.xlu0 %2077
  %2079 = vmax.xlane.f32.xlu0 %v2048
  %v2080 = vpop.xlane.xlu0 %2079
  %v2081 = vsub.f32 %v2033, %v2050
  %v2082 = vsub.f32 %v2034, %v2052
  %v2083 = vsub.f32 %v2035, %v2054
  %v2084 = vsub.f32 %v2036, %v2056
  %v2085 = vsub.f32 %v2037, %v2058
  %v2086 = vsub.f32 %v2038, %v2060
  %v2087 = vsub.f32 %v2039, %v2062
  %v2088 = vsub.f32 %v2040, %v2064
  %v2089 = vsub.f32 %v2041, %v2066
  %v2090 = vsub.f32 %v2042, %v2068
  %v2091 = vsub.f32 %v2043, %v2070
  %v2092 = vsub.f32 %v2044, %v2072
  %v2093 = vsub.f32 %v2045, %v2074
  %v2094 = vsub.f32 %v2046, %v2076
  %v2095 = vsub.f32 %v2047, %v2078
  %v2096 = vsub.f32 %v2048, %v2080
  %v2097 = vmul.f32 %v2081, 1.442695
  %v2098 = vpow.pop %v2097
  %v2099 = vmul.f32 %v2082, 1.442695
  %v2100 = vpow.pop %v2099
  %v2101 = vmul.f32 %v2083, 1.442695
  %v2102 = vpow.pop %v2101
  %v2103 = vmul.f32 %v2084, 1.442695
  %v2104 = vpow.pop %v2103
  %v2105 = vmul.f32 %v2085, 1.442695
  %v2106 = vpow.pop %v2105
  %v2107 = vmul.f32 %v2086, 1.442695
  %v2108 = vpow.pop %v2107
  %v2109 = vmul.f32 %v2087, 1.442695
  %v2110 = vpow.pop %v2109
  %v2111 = vmul.f32 %v2088, 1.442695
  %v2112 = vpow.pop %v2111
  %v2113 = vmul.f32 %v2089, 1.442695
  %v2114 = vpow.pop %v2113
  %v2115 = vmul.f32 %v2090, 1.442695
  %v2116 = vpow.pop %v2115
  %v2117 = vmul.f32 %v2091, 1.442695
  %v2118 = vpow.pop %v2117
  %v2119 = vmul.f32 %v2092, 1.442695
  %v2120 = vpow.pop %v2119
  %v2121 = vmul.f32 %v2093, 1.442695
  %v2122 = vpow.pop %v2121
  %v2123 = vmul.f32 %v2094, 1.442695
  %v2124 = vpow.pop %v2123
  %v2125 = vmul.f32 %v2095, 1.442695
  %v2126 = vpow.pop %v2125
  %v2127 = vmul.f32 %v2096, 1.442695
  %v2128 = vpow.pop %v2127
  %v2129 = vpack.c.bf16 %v2098, %v2098
  %v2130 = vpack.c.bf16 %v2100, %v2100
  %v2131 = vpack.c.bf16 %v2102, %v2102
  %v2132 = vpack.c.bf16 %v2104, %v2104
  %v2133 = vpack.c.bf16 %v2106, %v2106
  %v2134 = vpack.c.bf16 %v2108, %v2108
  %v2135 = vpack.c.bf16 %v2110, %v2110
  %v2136 = vpack.c.bf16 %v2112, %v2112
  %v2137 = vpack.c.bf16 %v2114, %v2114
  %v2138 = vpack.c.bf16 %v2116, %v2116
  %v2139 = vpack.c.bf16 %v2118, %v2118
  %v2140 = vpack.c.bf16 %v2120, %v2120
  %v2141 = vpack.c.bf16 %v2122, %v2122
  %v2142 = vpack.c.bf16 %v2124, %v2124
  %v2143 = vpack.c.bf16 %v2126, %v2126
  %v2144 = vpack.c.bf16 %v2128, %v2128
  %2145 = vst [vmem:[#allocation2 + $0x14] sm:$0xf] %v2129
  %2146 = vst [vmem:[#allocation2 + $0x34] sm:$0xf] %v2130
  %2147 = vst [vmem:[#allocation2 + $0x54] sm:$0xf] %v2131
  %2148 = vst [vmem:[#allocation2 + $0x74] sm:$0xf] %v2132
  %2149 = vst [vmem:[#allocation2 + $0x94] sm:$0xf] %v2133
  %2150 = vst [vmem:[#allocation2 + $0xb4] sm:$0xf] %v2134
  %2151 = vst [vmem:[#allocation2 + $0xd4] sm:$0xf] %v2135
  %2152 = vst [vmem:[#allocation2 + $0xf4] sm:$0xf] %v2136
  %2153 = vst [vmem:[#allocation2 + $0x114] sm:$0xf] %v2137
  %2154 = vst [vmem:[#allocation2 + $0x134] sm:$0xf] %v2138
  %2155 = vst [vmem:[#allocation2 + $0x154] sm:$0xf] %v2139
  %2156 = vst [vmem:[#allocation2 + $0x174] sm:$0xf] %v2140
  %2157 = vst [vmem:[#allocation2 + $0x194] sm:$0xf] %v2141
  %2158 = vst [vmem:[#allocation2 + $0x1b4] sm:$0xf] %v2142
  %2159 = vst [vmem:[#allocation2 + $0x1d4] sm:$0xf] %v2143
  %2160 = vst [vmem:[#allocation2 + $0x1f4] sm:$0xf] %v2144
  %vm2161 = vcmask 388416
  %2162 = vst.msk [vmem:[#allocation3 + $0x140] sm:$0xf] %vm2161, %v251
  %2163 = vst.msk [vmem:[#allocation3 + $0x144] sm:$0xf] %vm2161, %v252
  %2164 = vst.msk [vmem:[#allocation3 + $0x148] sm:$0xf] %vm2161, %v253
  %2165 = vst.msk [vmem:[#allocation3 + $0x14c] sm:$0xf] %vm2161, %v254
  %2166 = vst.msk [vmem:[#allocation3 + $0x150] sm:$0xf] %vm2161, %v255
  %2167 = vst.msk [vmem:[#allocation3 + $0x154] sm:$0xf] %vm2161, %v256
  %2168 = vst.msk [vmem:[#allocation3 + $0x158] sm:$0xf] %vm2161, %v257
  %2169 = vst.msk [vmem:[#allocation3 + $0x15c] sm:$0xf] %vm2161, %v258
  %2170 = vst.msk [vmem:[#allocation3 + $0x160] sm:$0xf] %vm2161, %v259
  %2171 = vst.msk [vmem:[#allocation3 + $0x164] sm:$0xf] %vm2161, %v260
  %2172 = vst.msk [vmem:[#allocation3 + $0x168] sm:$0xf] %vm2161, %v261
  %2173 = vst.msk [vmem:[#allocation3 + $0x16c] sm:$0xf] %vm2161, %v262
  %2174 = vst.msk [vmem:[#allocation3 + $0x170] sm:$0xf] %vm2161, %v263
  %2175 = vst.msk [vmem:[#allocation3 + $0x174] sm:$0xf] %vm2161, %v264
  %2176 = vst.msk [vmem:[#allocation3 + $0x178] sm:$0xf] %vm2161, %v265
  %2177 = vst.msk [vmem:[#allocation3 + $0x17c] sm:$0xf] %vm2161, %v266
  %vm2178 = vcmask 568872
  %2179 = vst.msk [vmem:[#allocation3 + $0x140] sm:$0xf] %vm2178, 1065369472
  %2180 = vst.msk [vmem:[#allocation3 + $0x144] sm:$0xf] %vm2178, 1065369472
  %2181 = vst.msk [vmem:[#allocation3 + $0x148] sm:$0xf] %vm2178, 1065369472
  %2182 = vst.msk [vmem:[#allocation3 + $0x14c] sm:$0xf] %vm2178, 1065369472
  %2183 = vst.msk [vmem:[#allocation3 + $0x150] sm:$0xf] %vm2178, 1065369472
  %2184 = vst.msk [vmem:[#allocation3 + $0x154] sm:$0xf] %vm2178, 1065369472
  %2185 = vst.msk [vmem:[#allocation3 + $0x158] sm:$0xf] %vm2178, 1065369472
  %2186 = vst.msk [vmem:[#allocation3 + $0x15c] sm:$0xf] %vm2178, 1065369472
  %2187 = vst.msk [vmem:[#allocation3 + $0x160] sm:$0xf] %vm2178, 1065369472
  %2188 = vst.msk [vmem:[#allocation3 + $0x164] sm:$0xf] %vm2178, 1065369472
  %2189 = vst.msk [vmem:[#allocation3 + $0x168] sm:$0xf] %vm2178, 1065369472
  %2190 = vst.msk [vmem:[#allocation3 + $0x16c] sm:$0xf] %vm2178, 1065369472
  %2191 = vst.msk [vmem:[#allocation3 + $0x170] sm:$0xf] %vm2178, 1065369472
  %2192 = vst.msk [vmem:[#allocation3 + $0x174] sm:$0xf] %vm2178, 1065369472
  %2193 = vst.msk [vmem:[#allocation3 + $0x178] sm:$0xf] %vm2178, 1065369472
  %2194 = vst.msk [vmem:[#allocation3 + $0x17c] sm:$0xf] %vm2178, 1065369472
  %2195 = vset.pattern.permute.xlu0 6
  %2196 = vperm.xlu0 %2195, %v345
  %v2197 = vpop.permute.xlu0 %2196
  %2199 = vset.pattern.permute.xlu0 6
  %2200 = vperm.xlu0 %2199, %v347
  %v2201 = vpop.permute.xlu0 %2200
  %2203 = vset.pattern.permute.xlu0 6
  %2204 = vperm.xlu0 %2203, %v350
  %v2205 = vpop.permute.xlu0 %2204
  %2207 = vset.pattern.permute.xlu0 6
  %2208 = vperm.xlu0 %2207, %v352
  %v2209 = vpop.permute.xlu0 %2208
  %2211 = vset.pattern.permute.xlu0 6
  %2212 = vperm.xlu0 %2211, %v355
  %v2213 = vpop.permute.xlu0 %2212
  %2215 = vset.pattern.permute.xlu0 6
  %2216 = vperm.xlu0 %2215, %v357
  %v2217 = vpop.permute.xlu0 %2216
  %2219 = vset.pattern.permute.xlu0 6
  %2220 = vperm.xlu0 %2219, %v360
  %v2221 = vpop.permute.xlu0 %2220
  %2223 = vset.pattern.permute.xlu0 6
  %2224 = vperm.xlu0 %2223, %v362
  %v2225 = vpop.permute.xlu0 %2224
  %2227 = vset.pattern.permute.xlu0 6
  %2228 = vperm.xlu0 %2227, %v365
  %v2229 = vpop.permute.xlu0 %2228
  %2231 = vset.pattern.permute.xlu0 6
  %2232 = vperm.xlu0 %2231, %v367
  %v2233 = vpop.permute.xlu0 %2232
  %2235 = vset.pattern.permute.xlu0 6
  %2236 = vperm.xlu0 %2235, %v370
  %v2237 = vpop.permute.xlu0 %2236
  %2239 = vset.pattern.permute.xlu0 6
  %2240 = vperm.xlu0 %2239, %v372
  %v2241 = vpop.permute.xlu0 %2240
  %2243 = vset.pattern.permute.xlu0 6
  %2244 = vperm.xlu0 %2243, %v375
  %v2245 = vpop.permute.xlu0 %2244
  %2247 = vset.pattern.permute.xlu0 6
  %2248 = vperm.xlu0 %2247, %v377
  %v2249 = vpop.permute.xlu0 %2248
  %2251 = vset.pattern.permute.xlu0 6
  %2252 = vperm.xlu0 %2251, %v380
  %v2253 = vpop.permute.xlu0 %2252
  %2255 = vset.pattern.permute.xlu0 6
  %2256 = vperm.xlu0 %2255, %v382
  %v2257 = vpop.permute.xlu0 %2256
  %v2259 = vperm.slane %v397, 6
  %v2260 = vadd.f32 %v2197, %v2259
  %v2261 = vadd.f32 %v2201, %v2259
  %v2262 = vadd.f32 %v2205, %v2259
  %v2263 = vadd.f32 %v2209, %v2259
  %v2264 = vadd.f32 %v2213, %v2259
  %v2265 = vadd.f32 %v2217, %v2259
  %v2266 = vadd.f32 %v2221, %v2259
  %v2267 = vadd.f32 %v2225, %v2259
  %v2268 = vadd.f32 %v2229, %v2259
  %v2269 = vadd.f32 %v2233, %v2259
  %v2270 = vadd.f32 %v2237, %v2259
  %v2271 = vadd.f32 %v2241, %v2259
  %v2272 = vadd.f32 %v2245, %v2259
  %v2273 = vadd.f32 %v2249, %v2259
  %v2274 = vadd.f32 %v2253, %v2259
  %v2275 = vadd.f32 %v2257, %v2259
  %v2276 = vmul.f32 %v2260, 0.2
  %v2277 = vmul.f32 %v2261, 0.2
  %v2278 = vmul.f32 %v2262, 0.2
  %v2279 = vmul.f32 %v2263, 0.2
  %v2280 = vmul.f32 %v2264, 0.2
  %v2281 = vmul.f32 %v2265, 0.2
  %v2282 = vmul.f32 %v2266, 0.2
  %v2283 = vmul.f32 %v2267, 0.2
  %v2284 = vmul.f32 %v2268, 0.2
  %v2285 = vmul.f32 %v2269, 0.2
  %v2286 = vmul.f32 %v2270, 0.2
  %v2287 = vmul.f32 %v2271, 0.2
  %v2288 = vmul.f32 %v2272, 0.2
  %v2289 = vmul.f32 %v2273, 0.2
  %v2290 = vmul.f32 %v2274, 0.2
  %v2291 = vmul.f32 %v2275, 0.2
  %v2292 = vmax.f32 %v2260, %v2276
  %v2293 = vmax.f32 %v2261, %v2277
  %v2294 = vmax.f32 %v2262, %v2278
  %v2295 = vmax.f32 %v2263, %v2279
  %v2296 = vmax.f32 %v2264, %v2280
  %v2297 = vmax.f32 %v2265, %v2281
  %v2298 = vmax.f32 %v2266, %v2282
  %v2299 = vmax.f32 %v2267, %v2283
  %v2300 = vmax.f32 %v2268, %v2284
  %v2301 = vmax.f32 %v2269, %v2285
  %v2302 = vmax.f32 %v2270, %v2286
  %v2303 = vmax.f32 %v2271, %v2287
  %v2304 = vmax.f32 %v2272, %v2288
  %v2305 = vmax.f32 %v2273, %v2289
  %v2306 = vmax.f32 %v2274, %v2290
  %v2307 = vmax.f32 %v2275, %v2291
  %v2308 = vadd.f32 %v2292, %v86
  %v2309 = vadd.f32 %v2293, %v87
  %v2310 = vadd.f32 %v2294, %v88
  %v2311 = vadd.f32 %v2295, %v89
  %v2312 = vadd.f32 %v2296, %v90
  %v2313 = vadd.f32 %v2297, %v91
  %v2314 = vadd.f32 %v2298, %v92
  %v2315 = vadd.f32 %v2299, %v93
  %v2316 = vadd.f32 %v2300, %v94
  %v2317 = vadd.f32 %v2301, %v95
  %v2318 = vadd.f32 %v2302, %v96
  %v2319 = vadd.f32 %v2303, %v97
  %v2320 = vadd.f32 %v2304, %v98
  %v2321 = vadd.f32 %v2305, %v99
  %v2322 = vadd.f32 %v2306, %v100
  %v2323 = vadd.f32 %v2307, %v101
  %2324 = vmax.xlane.f32.xlu0 %v2308
  %v2325 = vpop.xlane.xlu0 %2324
  %2326 = vmax.xlane.f32.xlu0 %v2309
  %v2327 = vpop.xlane.xlu0 %2326
  %2328 = vmax.xlane.f32.xlu0 %v2310
  %v2329 = vpop.xlane.xlu0 %2328
  %2330 = vmax.xlane.f32.xlu0 %v2311
  %v2331 = vpop.xlane.xlu0 %2330
  %2332 = vmax.xlane.f32.xlu0 %v2312
  %v2333 = vpop.xlane.xlu0 %2332
  %2334 = vmax.xlane.f32.xlu0 %v2313
  %v2335 = vpop.xlane.xlu0 %2334
  %2336 = vmax.xlane.f32.xlu0 %v2314
  %v2337 = vpop.xlane.xlu0 %2336
  %2338 = vmax.xlane.f32.xlu0 %v2315
  %v2339 = vpop.xlane.xlu0 %2338
  %2340 = vmax.xlane.f32.xlu0 %v2316
  %v2341 = vpop.xlane.xlu0 %2340
  %2342 = vmax.xlane.f32.xlu0 %v2317
  %v2343 = vpop.xlane.xlu0 %2342
  %2344 = vmax.xlane.f32.xlu0 %v2318
  %v2345 = vpop.xlane.xlu0 %2344
  %2346 = vmax.xlane.f32.xlu0 %v2319
  %v2347 = vpop.xlane.xlu0 %2346
  %2348 = vmax.xlane.f32.xlu0 %v2320
  %v2349 = vpop.xlane.xlu0 %2348
  %2350 = vmax.xlane.f32.xlu0 %v2321
  %v2351 = vpop.xlane.xlu0 %2350
  %2352 = vmax.xlane.f32.xlu0 %v2322
  %v2353 = vpop.xlane.xlu0 %2352
  %2354 = vmax.xlane.f32.xlu0 %v2323
  %v2355 = vpop.xlane.xlu0 %2354
  %v2356 = vsub.f32 %v2308, %v2325
  %v2357 = vsub.f32 %v2309, %v2327
  %v2358 = vsub.f32 %v2310, %v2329
  %v2359 = vsub.f32 %v2311, %v2331
  %v2360 = vsub.f32 %v2312, %v2333
  %v2361 = vsub.f32 %v2313, %v2335
  %v2362 = vsub.f32 %v2314, %v2337
  %v2363 = vsub.f32 %v2315, %v2339
  %v2364 = vsub.f32 %v2316, %v2341
  %v2365 = vsub.f32 %v2317, %v2343
  %v2366 = vsub.f32 %v2318, %v2345
  %v2367 = vsub.f32 %v2319, %v2347
  %v2368 = vsub.f32 %v2320, %v2349
  %v2369 = vsub.f32 %v2321, %v2351
  %v2370 = vsub.f32 %v2322, %v2353
  %v2371 = vsub.f32 %v2323, %v2355
  %v2372 = vmul.f32 %v2356, 1.442695
  %v2373 = vpow.pop %v2372
  %v2374 = vmul.f32 %v2357, 1.442695
  %v2375 = vpow.pop %v2374
  %v2376 = vmul.f32 %v2358, 1.442695
  %v2377 = vpow.pop %v2376
  %v2378 = vmul.f32 %v2359, 1.442695
  %v2379 = vpow.pop %v2378
  %v2380 = vmul.f32 %v2360, 1.442695
  %v2381 = vpow.pop %v2380
  %v2382 = vmul.f32 %v2361, 1.442695
  %v2383 = vpow.pop %v2382
  %v2384 = vmul.f32 %v2362, 1.442695
  %v2385 = vpow.pop %v2384
  %v2386 = vmul.f32 %v2363, 1.442695
  %v2387 = vpow.pop %v2386
  %v2388 = vmul.f32 %v2364, 1.442695
  %v2389 = vpow.pop %v2388
  %v2390 = vmul.f32 %v2365, 1.442695
  %v2391 = vpow.pop %v2390
  %v2392 = vmul.f32 %v2366, 1.442695
  %v2393 = vpow.pop %v2392
  %v2394 = vmul.f32 %v2367, 1.442695
  %v2395 = vpow.pop %v2394
  %v2396 = vmul.f32 %v2368, 1.442695
  %v2397 = vpow.pop %v2396
  %v2398 = vmul.f32 %v2369, 1.442695
  %v2399 = vpow.pop %v2398
  %v2400 = vmul.f32 %v2370, 1.442695
  %v2401 = vpow.pop %v2400
  %v2402 = vmul.f32 %v2371, 1.442695
  %v2403 = vpow.pop %v2402
  %v2404 = vpack.c.bf16 %v2373, %v2373
  %v2405 = vpack.c.bf16 %v2375, %v2375
  %v2406 = vpack.c.bf16 %v2377, %v2377
  %v2407 = vpack.c.bf16 %v2379, %v2379
  %v2408 = vpack.c.bf16 %v2381, %v2381
  %v2409 = vpack.c.bf16 %v2383, %v2383
  %v2410 = vpack.c.bf16 %v2385, %v2385
  %v2411 = vpack.c.bf16 %v2387, %v2387
  %v2412 = vpack.c.bf16 %v2389, %v2389
  %v2413 = vpack.c.bf16 %v2391, %v2391
  %v2414 = vpack.c.bf16 %v2393, %v2393
  %v2415 = vpack.c.bf16 %v2395, %v2395
  %v2416 = vpack.c.bf16 %v2397, %v2397
  %v2417 = vpack.c.bf16 %v2399, %v2399
  %v2418 = vpack.c.bf16 %v2401, %v2401
  %v2419 = vpack.c.bf16 %v2403, %v2403
  %2420 = vst [vmem:[#allocation2 + $0x18] sm:$0xf] %v2404
  %2421 = vst [vmem:[#allocation2 + $0x38] sm:$0xf] %v2405
  %2422 = vst [vmem:[#allocation2 + $0x58] sm:$0xf] %v2406
  %2423 = vst [vmem:[#allocation2 + $0x78] sm:$0xf] %v2407
  %2424 = vst [vmem:[#allocation2 + $0x98] sm:$0xf] %v2408
  %2425 = vst [vmem:[#allocation2 + $0xb8] sm:$0xf] %v2409
  %2426 = vst [vmem:[#allocation2 + $0xd8] sm:$0xf] %v2410
  %2427 = vst [vmem:[#allocation2 + $0xf8] sm:$0xf] %v2411
  %2428 = vst [vmem:[#allocation2 + $0x118] sm:$0xf] %v2412
  %2429 = vst [vmem:[#allocation2 + $0x138] sm:$0xf] %v2413
  %2430 = vst [vmem:[#allocation2 + $0x158] sm:$0xf] %v2414
  %2431 = vst [vmem:[#allocation2 + $0x178] sm:$0xf] %v2415
  %2432 = vst [vmem:[#allocation2 + $0x198] sm:$0xf] %v2416
  %2433 = vst [vmem:[#allocation2 + $0x1b8] sm:$0xf] %v2417
  %2434 = vst [vmem:[#allocation2 + $0x1d8] sm:$0xf] %v2418
  %2435 = vst [vmem:[#allocation2 + $0x1f8] sm:$0xf] %v2419
  %vm2436 = vcmask 454016
  %2437 = vst.msk [vmem:[#allocation3 + $0x180] sm:$0xf] %vm2436, %v251
  %2438 = vst.msk [vmem:[#allocation3 + $0x184] sm:$0xf] %vm2436, %v252
  %2439 = vst.msk [vmem:[#allocation3 + $0x188] sm:$0xf] %vm2436, %v253
  %2440 = vst.msk [vmem:[#allocation3 + $0x18c] sm:$0xf] %vm2436, %v254
  %2441 = vst.msk [vmem:[#allocation3 + $0x190] sm:$0xf] %vm2436, %v255
  %2442 = vst.msk [vmem:[#allocation3 + $0x194] sm:$0xf] %vm2436, %v256
  %2443 = vst.msk [vmem:[#allocation3 + $0x198] sm:$0xf] %vm2436, %v257
  %2444 = vst.msk [vmem:[#allocation3 + $0x19c] sm:$0xf] %vm2436, %v258
  %2445 = vst.msk [vmem:[#allocation3 + $0x1a0] sm:$0xf] %vm2436, %v259
  %2446 = vst.msk [vmem:[#allocation3 + $0x1a4] sm:$0xf] %vm2436, %v260
  %2447 = vst.msk [vmem:[#allocation3 + $0x1a8] sm:$0xf] %vm2436, %v261
  %2448 = vst.msk [vmem:[#allocation3 + $0x1ac] sm:$0xf] %vm2436, %v262
  %2449 = vst.msk [vmem:[#allocation3 + $0x1b0] sm:$0xf] %vm2436, %v263
  %2450 = vst.msk [vmem:[#allocation3 + $0x1b4] sm:$0xf] %vm2436, %v264
  %2451 = vst.msk [vmem:[#allocation3 + $0x1b8] sm:$0xf] %vm2436, %v265
  %2452 = vst.msk [vmem:[#allocation3 + $0x1bc] sm:$0xf] %vm2436, %v266
  %vm2453 = vcmask 577072
  %2454 = vst.msk [vmem:[#allocation3 + $0x180] sm:$0xf] %vm2453, 1065369472
  %2455 = vst.msk [vmem:[#allocation3 + $0x184] sm:$0xf] %vm2453, 1065369472
  %2456 = vst.msk [vmem:[#allocation3 + $0x188] sm:$0xf] %vm2453, 1065369472
  %2457 = vst.msk [vmem:[#allocation3 + $0x18c] sm:$0xf] %vm2453, 1065369472
  %2458 = vst.msk [vmem:[#allocation3 + $0x190] sm:$0xf] %vm2453, 1065369472
  %2459 = vst.msk [vmem:[#allocation3 + $0x194] sm:$0xf] %vm2453, 1065369472
  %2460 = vst.msk [vmem:[#allocation3 + $0x198] sm:$0xf] %vm2453, 1065369472
  %2461 = vst.msk [vmem:[#allocation3 + $0x19c] sm:$0xf] %vm2453, 1065369472
  %2462 = vst.msk [vmem:[#allocation3 + $0x1a0] sm:$0xf] %vm2453, 1065369472
  %2463 = vst.msk [vmem:[#allocation3 + $0x1a4] sm:$0xf] %vm2453, 1065369472
  %2464 = vst.msk [vmem:[#allocation3 + $0x1a8] sm:$0xf] %vm2453, 1065369472
  %2465 = vst.msk [vmem:[#allocation3 + $0x1ac] sm:$0xf] %vm2453, 1065369472
  %2466 = vst.msk [vmem:[#allocation3 + $0x1b0] sm:$0xf] %vm2453, 1065369472
  %2467 = vst.msk [vmem:[#allocation3 + $0x1b4] sm:$0xf] %vm2453, 1065369472
  %2468 = vst.msk [vmem:[#allocation3 + $0x1b8] sm:$0xf] %vm2453, 1065369472
  %2469 = vst.msk [vmem:[#allocation3 + $0x1bc] sm:$0xf] %vm2453, 1065369472
  %2470 = vset.pattern.permute.xlu0 7
  %2471 = vperm.xlu0 %2470, %v345
  %v2472 = vpop.permute.xlu0 %2471
  %2474 = vset.pattern.permute.xlu0 7
  %2475 = vperm.xlu0 %2474, %v347
  %v2476 = vpop.permute.xlu0 %2475
  %2478 = vset.pattern.permute.xlu0 7
  %2479 = vperm.xlu0 %2478, %v350
  %v2480 = vpop.permute.xlu0 %2479
  %2482 = vset.pattern.permute.xlu0 7
  %2483 = vperm.xlu0 %2482, %v352
  %v2484 = vpop.permute.xlu0 %2483
  %2486 = vset.pattern.permute.xlu0 7
  %2487 = vperm.xlu0 %2486, %v355
  %v2488 = vpop.permute.xlu0 %2487
  %2490 = vset.pattern.permute.xlu0 7
  %2491 = vperm.xlu0 %2490, %v357
  %v2492 = vpop.permute.xlu0 %2491
  %2494 = vset.pattern.permute.xlu0 7
  %2495 = vperm.xlu0 %2494, %v360
  %v2496 = vpop.permute.xlu0 %2495
  %2498 = vset.pattern.permute.xlu0 7
  %2499 = vperm.xlu0 %2498, %v362
  %v2500 = vpop.permute.xlu0 %2499
  %2502 = vset.pattern.permute.xlu0 7
  %2503 = vperm.xlu0 %2502, %v365
  %v2504 = vpop.permute.xlu0 %2503
  %2506 = vset.pattern.permute.xlu0 7
  %2507 = vperm.xlu0 %2506, %v367
  %v2508 = vpop.permute.xlu0 %2507
  %2510 = vset.pattern.permute.xlu0 7
  %2511 = vperm.xlu0 %2510, %v370
  %v2512 = vpop.permute.xlu0 %2511
  %2514 = vset.pattern.permute.xlu0 7
  %2515 = vperm.xlu0 %2514, %v372
  %v2516 = vpop.permute.xlu0 %2515
  %2518 = vset.pattern.permute.xlu0 7
  %2519 = vperm.xlu0 %2518, %v375
  %v2520 = vpop.permute.xlu0 %2519
  %2522 = vset.pattern.permute.xlu0 7
  %2523 = vperm.xlu0 %2522, %v377
  %v2524 = vpop.permute.xlu0 %2523
  %2526 = vset.pattern.permute.xlu0 7
  %2527 = vperm.xlu0 %2526, %v380
  %v2528 = vpop.permute.xlu0 %2527
  %2530 = vset.pattern.permute.xlu0 7
  %2531 = vperm.xlu0 %2530, %v382
  %v2532 = vpop.permute.xlu0 %2531
  %v2534 = vperm.slane %v397, 7
  %v2535 = vadd.f32 %v2472, %v2534
  %v2536 = vadd.f32 %v2476, %v2534
  %v2537 = vadd.f32 %v2480, %v2534
  %v2538 = vadd.f32 %v2484, %v2534
  %v2539 = vadd.f32 %v2488, %v2534
  %v2540 = vadd.f32 %v2492, %v2534
  %v2541 = vadd.f32 %v2496, %v2534
  %v2542 = vadd.f32 %v2500, %v2534
  %v2543 = vadd.f32 %v2504, %v2534
  %v2544 = vadd.f32 %v2508, %v2534
  %v2545 = vadd.f32 %v2512, %v2534
  %v2546 = vadd.f32 %v2516, %v2534
  %v2547 = vadd.f32 %v2520, %v2534
  %v2548 = vadd.f32 %v2524, %v2534
  %v2549 = vadd.f32 %v2528, %v2534
  %v2550 = vadd.f32 %v2532, %v2534
  %v2551 = vmul.f32 %v2535, 0.2
  %v2552 = vmul.f32 %v2536, 0.2
  %v2553 = vmul.f32 %v2537, 0.2
  %v2554 = vmul.f32 %v2538, 0.2
  %v2555 = vmul.f32 %v2539, 0.2
  %v2556 = vmul.f32 %v2540, 0.2
  %v2557 = vmul.f32 %v2541, 0.2
  %v2558 = vmul.f32 %v2542, 0.2
  %v2559 = vmul.f32 %v2543, 0.2
  %v2560 = vmul.f32 %v2544, 0.2
  %v2561 = vmul.f32 %v2545, 0.2
  %v2562 = vmul.f32 %v2546, 0.2
  %v2563 = vmul.f32 %v2547, 0.2
  %v2564 = vmul.f32 %v2548, 0.2
  %v2565 = vmul.f32 %v2549, 0.2
  %v2566 = vmul.f32 %v2550, 0.2
  %v2567 = vmax.f32 %v2535, %v2551
  %v2568 = vmax.f32 %v2536, %v2552
  %v2569 = vmax.f32 %v2537, %v2553
  %v2570 = vmax.f32 %v2538, %v2554
  %v2571 = vmax.f32 %v2539, %v2555
  %v2572 = vmax.f32 %v2540, %v2556
  %v2573 = vmax.f32 %v2541, %v2557
  %v2574 = vmax.f32 %v2542, %v2558
  %v2575 = vmax.f32 %v2543, %v2559
  %v2576 = vmax.f32 %v2544, %v2560
  %v2577 = vmax.f32 %v2545, %v2561
  %v2578 = vmax.f32 %v2546, %v2562
  %v2579 = vmax.f32 %v2547, %v2563
  %v2580 = vmax.f32 %v2548, %v2564
  %v2581 = vmax.f32 %v2549, %v2565
  %v2582 = vmax.f32 %v2550, %v2566
  %v2583 = vadd.f32 %v2567, %v86
  %v2584 = vadd.f32 %v2568, %v87
  %v2585 = vadd.f32 %v2569, %v88
  %v2586 = vadd.f32 %v2570, %v89
  %v2587 = vadd.f32 %v2571, %v90
  %v2588 = vadd.f32 %v2572, %v91
  %v2589 = vadd.f32 %v2573, %v92
  %v2590 = vadd.f32 %v2574, %v93
  %v2591 = vadd.f32 %v2575, %v94
  %v2592 = vadd.f32 %v2576, %v95
  %v2593 = vadd.f32 %v2577, %v96
  %v2594 = vadd.f32 %v2578, %v97
  %v2595 = vadd.f32 %v2579, %v98
  %v2596 = vadd.f32 %v2580, %v99
  %v2597 = vadd.f32 %v2581, %v100
  %v2598 = vadd.f32 %v2582, %v101
  %2599 = vmax.xlane.f32.xlu0 %v2583
  %v2600 = vpop.xlane.xlu0 %2599
  %2601 = vmax.xlane.f32.xlu0 %v2584
  %v2602 = vpop.xlane.xlu0 %2601
  %2603 = vmax.xlane.f32.xlu0 %v2585
  %v2604 = vpop.xlane.xlu0 %2603
  %2605 = vmax.xlane.f32.xlu0 %v2586
  %v2606 = vpop.xlane.xlu0 %2605
  %2607 = vmax.xlane.f32.xlu0 %v2587
  %v2608 = vpop.xlane.xlu0 %2607
  %2609 = vmax.xlane.f32.xlu0 %v2588
  %v2610 = vpop.xlane.xlu0 %2609
  %2611 = vmax.xlane.f32.xlu0 %v2589
  %v2612 = vpop.xlane.xlu0 %2611
  %2613 = vmax.xlane.f32.xlu0 %v2590
  %v2614 = vpop.xlane.xlu0 %2613
  %2615 = vmax.xlane.f32.xlu0 %v2591
  %v2616 = vpop.xlane.xlu0 %2615
  %2617 = vmax.xlane.f32.xlu0 %v2592
  %v2618 = vpop.xlane.xlu0 %2617
  %2619 = vmax.xlane.f32.xlu0 %v2593
  %v2620 = vpop.xlane.xlu0 %2619
  %2621 = vmax.xlane.f32.xlu0 %v2594
  %v2622 = vpop.xlane.xlu0 %2621
  %2623 = vmax.xlane.f32.xlu0 %v2595
  %v2624 = vpop.xlane.xlu0 %2623
  %2625 = vmax.xlane.f32.xlu0 %v2596
  %v2626 = vpop.xlane.xlu0 %2625
  %2627 = vmax.xlane.f32.xlu0 %v2597
  %v2628 = vpop.xlane.xlu0 %2627
  %2629 = vmax.xlane.f32.xlu0 %v2598
  %v2630 = vpop.xlane.xlu0 %2629
  %v2631 = vsub.f32 %v2583, %v2600
  %v2632 = vsub.f32 %v2584, %v2602
  %v2633 = vsub.f32 %v2585, %v2604
  %v2634 = vsub.f32 %v2586, %v2606
  %v2635 = vsub.f32 %v2587, %v2608
  %v2636 = vsub.f32 %v2588, %v2610
  %v2637 = vsub.f32 %v2589, %v2612
  %v2638 = vsub.f32 %v2590, %v2614
  %v2639 = vsub.f32 %v2591, %v2616
  %v2640 = vsub.f32 %v2592, %v2618
  %v2641 = vsub.f32 %v2593, %v2620
  %v2642 = vsub.f32 %v2594, %v2622
  %v2643 = vsub.f32 %v2595, %v2624
  %v2644 = vsub.f32 %v2596, %v2626
  %v2645 = vsub.f32 %v2597, %v2628
  %v2646 = vsub.f32 %v2598, %v2630
  %v2647 = vmul.f32 %v2631, 1.442695
  %v2648 = vpow.pop %v2647
  %v2649 = vmul.f32 %v2632, 1.442695
  %v2650 = vpow.pop %v2649
  %v2651 = vmul.f32 %v2633, 1.442695
  %v2652 = vpow.pop %v2651
  %v2653 = vmul.f32 %v2634, 1.442695
  %v2654 = vpow.pop %v2653
  %v2655 = vmul.f32 %v2635, 1.442695
  %v2656 = vpow.pop %v2655
  %v2657 = vmul.f32 %v2636, 1.442695
  %v2658 = vpow.pop %v2657
  %v2659 = vmul.f32 %v2637, 1.442695
  %v2660 = vpow.pop %v2659
  %v2661 = vmul.f32 %v2638, 1.442695
  %v2662 = vpow.pop %v2661
  %v2663 = vmul.f32 %v2639, 1.442695
  %v2664 = vpow.pop %v2663
  %v2665 = vmul.f32 %v2640, 1.442695
  %v2666 = vpow.pop %v2665
  %v2667 = vmul.f32 %v2641, 1.442695
  %v2668 = vpow.pop %v2667
  %v2669 = vmul.f32 %v2642, 1.442695
  %v2670 = vpow.pop %v2669
  %v2671 = vmul.f32 %v2643, 1.442695
  %v2672 = vpow.pop %v2671
  %v2673 = vmul.f32 %v2644, 1.442695
  %v2674 = vpow.pop %v2673
  %v2675 = vmul.f32 %v2645, 1.442695
  %v2676 = vpow.pop %v2675
  %v2677 = vmul.f32 %v2646, 1.442695
  %v2678 = vpow.pop %v2677
  %v2679 = vpack.c.bf16 %v2648, %v2648
  %v2680 = vpack.c.bf16 %v2650, %v2650
  %v2681 = vpack.c.bf16 %v2652, %v2652
  %v2682 = vpack.c.bf16 %v2654, %v2654
  %v2683 = vpack.c.bf16 %v2656, %v2656
  %v2684 = vpack.c.bf16 %v2658, %v2658
  %v2685 = vpack.c.bf16 %v2660, %v2660
  %v2686 = vpack.c.bf16 %v2662, %v2662
  %v2687 = vpack.c.bf16 %v2664, %v2664
  %v2688 = vpack.c.bf16 %v2666, %v2666
  %v2689 = vpack.c.bf16 %v2668, %v2668
  %v2690 = vpack.c.bf16 %v2670, %v2670
  %v2691 = vpack.c.bf16 %v2672, %v2672
  %v2692 = vpack.c.bf16 %v2674, %v2674
  %v2693 = vpack.c.bf16 %v2676, %v2676
  %v2694 = vpack.c.bf16 %v2678, %v2678
  %2695 = vst [vmem:[#allocation2 + $0x1c] sm:$0xf] %v2679
  %2696 = vst [vmem:[#allocation2 + $0x3c] sm:$0xf] %v2680
  %2697 = vst [vmem:[#allocation2 + $0x5c] sm:$0xf] %v2681
  %2698 = vst [vmem:[#allocation2 + $0x7c] sm:$0xf] %v2682
  %2699 = vst [vmem:[#allocation2 + $0x9c] sm:$0xf] %v2683
  %2700 = vst [vmem:[#allocation2 + $0xbc] sm:$0xf] %v2684
  %2701 = vst [vmem:[#allocation2 + $0xdc] sm:$0xf] %v2685
  %2702 = vst [vmem:[#allocation2 + $0xfc] sm:$0xf] %v2686
  %2703 = vst [vmem:[#allocation2 + $0x11c] sm:$0xf] %v2687
  %2704 = vst [vmem:[#allocation2 + $0x13c] sm:$0xf] %v2688
  %2705 = vst [vmem:[#allocation2 + $0x15c] sm:$0xf] %v2689
  %2706 = vst [vmem:[#allocation2 + $0x17c] sm:$0xf] %v2690
  %2707 = vst [vmem:[#allocation2 + $0x19c] sm:$0xf] %v2691
  %2708 = vst [vmem:[#allocation2 + $0x1bc] sm:$0xf] %v2692
  %2709 = vst [vmem:[#allocation2 + $0x1dc] sm:$0xf] %v2693
  %2710 = vst [vmem:[#allocation2 + $0x1fc] sm:$0xf] %v2694
  %vm2711 = vcmask 519616
  %2712 = vst.msk [vmem:[#allocation3 + $0x1c0] sm:$0xf] %vm2711, %v251
  %2713 = vst.msk [vmem:[#allocation3 + $0x1c4] sm:$0xf] %vm2711, %v252
  %2714 = vst.msk [vmem:[#allocation3 + $0x1c8] sm:$0xf] %vm2711, %v253
  %2715 = vst.msk [vmem:[#allocation3 + $0x1cc] sm:$0xf] %vm2711, %v254
  %2716 = vst.msk [vmem:[#allocation3 + $0x1d0] sm:$0xf] %vm2711, %v255
  %2717 = vst.msk [vmem:[#allocation3 + $0x1d4] sm:$0xf] %vm2711, %v256
  %2718 = vst.msk [vmem:[#allocation3 + $0x1d8] sm:$0xf] %vm2711, %v257
  %2719 = vst.msk [vmem:[#allocation3 + $0x1dc] sm:$0xf] %vm2711, %v258
  %2720 = vst.msk [vmem:[#allocation3 + $0x1e0] sm:$0xf] %vm2711, %v259
  %2721 = vst.msk [vmem:[#allocation3 + $0x1e4] sm:$0xf] %vm2711, %v260
  %2722 = vst.msk [vmem:[#allocation3 + $0x1e8] sm:$0xf] %vm2711, %v261
  %2723 = vst.msk [vmem:[#allocation3 + $0x1ec] sm:$0xf] %vm2711, %v262
  %2724 = vst.msk [vmem:[#allocation3 + $0x1f0] sm:$0xf] %vm2711, %v263
  %2725 = vst.msk [vmem:[#allocation3 + $0x1f4] sm:$0xf] %vm2711, %v264
  %2726 = vst.msk [vmem:[#allocation3 + $0x1f8] sm:$0xf] %vm2711, %v265
  %2727 = vst.msk [vmem:[#allocation3 + $0x1fc] sm:$0xf] %vm2711, %v266
  %vm2728 = vcmask 585272
  %2729 = vst.msk [vmem:[#allocation3 + $0x1c0] sm:$0xf] %vm2728, 1065369472
  %2730 = vst.msk [vmem:[#allocation3 + $0x1c4] sm:$0xf] %vm2728, 1065369472
  %2731 = vst.msk [vmem:[#allocation3 + $0x1c8] sm:$0xf] %vm2728, 1065369472
  %2732 = vst.msk [vmem:[#allocation3 + $0x1cc] sm:$0xf] %vm2728, 1065369472
  %2733 = vst.msk [vmem:[#allocation3 + $0x1d0] sm:$0xf] %vm2728, 1065369472
  %2734 = vst.msk [vmem:[#allocation3 + $0x1d4] sm:$0xf] %vm2728, 1065369472
  %2735 = vst.msk [vmem:[#allocation3 + $0x1d8] sm:$0xf] %vm2728, 1065369472
  %2736 = vst.msk [vmem:[#allocation3 + $0x1dc] sm:$0xf] %vm2728, 1065369472
  %2737 = vst.msk [vmem:[#allocation3 + $0x1e0] sm:$0xf] %vm2728, 1065369472
  %2738 = vst.msk [vmem:[#allocation3 + $0x1e4] sm:$0xf] %vm2728, 1065369472
  %2739 = vst.msk [vmem:[#allocation3 + $0x1e8] sm:$0xf] %vm2728, 1065369472
  %2740 = vst.msk [vmem:[#allocation3 + $0x1ec] sm:$0xf] %vm2728, 1065369472
  %2741 = vst.msk [vmem:[#allocation3 + $0x1f0] sm:$0xf] %vm2728, 1065369472
  %2742 = vst.msk [vmem:[#allocation3 + $0x1f4] sm:$0xf] %vm2728, 1065369472
  %2743 = vst.msk [vmem:[#allocation3 + $0x1f8] sm:$0xf] %vm2728, 1065369472
  %2744 = vst.msk [vmem:[#allocation3 + $0x1fc] sm:$0xf] %vm2728, 1065369472
  %v2745 = vld [vmem:[#allocation2] sm:$0xff]
  %v2746 = vld [vmem:[#allocation2 + $0x8] sm:$0xff]
  %v2747 = vld [vmem:[#allocation2 + $0x10] sm:$0xff]
  %v2748 = vld [vmem:[#allocation2 + $0x18] sm:$0xff]
  %v2749 = vld [vmem:[#allocation2 + $0x20] sm:$0xff]
  %v2750 = vld [vmem:[#allocation2 + $0x28] sm:$0xff]
  %v2751 = vld [vmem:[#allocation2 + $0x30] sm:$0xff]
  %v2752 = vld [vmem:[#allocation2 + $0x38] sm:$0xff]
  %v2753 = vld [vmem:[#allocation2 + $0x40] sm:$0xff]
  %v2754 = vld [vmem:[#allocation2 + $0x48] sm:$0xff]
  %v2755 = vld [vmem:[#allocation2 + $0x50] sm:$0xff]
  %v2756 = vld [vmem:[#allocation2 + $0x58] sm:$0xff]
  %v2757 = vld [vmem:[#allocation2 + $0x60] sm:$0xff]
  %v2758 = vld [vmem:[#allocation2 + $0x68] sm:$0xff]
  %v2759 = vld [vmem:[#allocation2 + $0x70] sm:$0xff]
  %v2760 = vld [vmem:[#allocation2 + $0x78] sm:$0xff]
  %v2761 = vld [vmem:[#allocation2 + $0x80] sm:$0xff]
  %v2762 = vld [vmem:[#allocation2 + $0x88] sm:$0xff]
  %v2763 = vld [vmem:[#allocation2 + $0x90] sm:$0xff]
  %v2764 = vld [vmem:[#allocation2 + $0x98] sm:$0xff]
  %v2765 = vld [vmem:[#allocation2 + $0xa0] sm:$0xff]
  %v2766 = vld [vmem:[#allocation2 + $0xa8] sm:$0xff]
  %v2767 = vld [vmem:[#allocation2 + $0xb0] sm:$0xff]
  %v2768 = vld [vmem:[#allocation2 + $0xb8] sm:$0xff]
  %v2769 = vld [vmem:[#allocation2 + $0xc0] sm:$0xff]
  %v2770 = vld [vmem:[#allocation2 + $0xc8] sm:$0xff]
  %v2771 = vld [vmem:[#allocation2 + $0xd0] sm:$0xff]
  %v2772 = vld [vmem:[#allocation2 + $0xd8] sm:$0xff]
  %v2773 = vld [vmem:[#allocation2 + $0xe0] sm:$0xff]
  %v2774 = vld [vmem:[#allocation2 + $0xe8] sm:$0xff]
  %v2775 = vld [vmem:[#allocation2 + $0xf0] sm:$0xff]
  %v2776 = vld [vmem:[#allocation2 + $0xf8] sm:$0xff]
  %v2777 = vld [vmem:[#allocation2 + $0x100] sm:$0xff]
  %v2778 = vld [vmem:[#allocation2 + $0x108] sm:$0xff]
  %v2779 = vld [vmem:[#allocation2 + $0x110] sm:$0xff]
  %v2780 = vld [vmem:[#allocation2 + $0x118] sm:$0xff]
  %v2781 = vld [vmem:[#allocation2 + $0x120] sm:$0xff]
  %v2782 = vld [vmem:[#allocation2 + $0x128] sm:$0xff]
  %v2783 = vld [vmem:[#allocation2 + $0x130] sm:$0xff]
  %v2784 = vld [vmem:[#allocation2 + $0x138] sm:$0xff]
  %v2785 = vld [vmem:[#allocation2 + $0x140] sm:$0xff]
  %v2786 = vld [vmem:[#allocation2 + $0x148] sm:$0xff]
  %v2787 = vld [vmem:[#allocation2 + $0x150] sm:$0xff]
  %v2788 = vld [vmem:[#allocation2 + $0x158] sm:$0xff]
  %v2789 = vld [vmem:[#allocation2 + $0x160] sm:$0xff]
  %v2790 = vld [vmem:[#allocation2 + $0x168] sm:$0xff]
  %v2791 = vld [vmem:[#allocation2 + $0x170] sm:$0xff]
  %v2792 = vld [vmem:[#allocation2 + $0x178] sm:$0xff]
  %v2793 = vld [vmem:[#allocation2 + $0x180] sm:$0xff]
  %v2794 = vld [vmem:[#allocation2 + $0x188] sm:$0xff]
  %v2795 = vld [vmem:[#allocation2 + $0x190] sm:$0xff]
  %v2796 = vld [vmem:[#allocation2 + $0x198] sm:$0xff]
  %v2797 = vld [vmem:[#allocation2 + $0x1a0] sm:$0xff]
  %v2798 = vld [vmem:[#allocation2 + $0x1a8] sm:$0xff]
  %v2799 = vld [vmem:[#allocation2 + $0x1b0] sm:$0xff]
  %v2800 = vld [vmem:[#allocation2 + $0x1b8] sm:$0xff]
  %v2801 = vld [vmem:[#allocation2 + $0x1c0] sm:$0xff]
  %v2802 = vld [vmem:[#allocation2 + $0x1c8] sm:$0xff]
  %v2803 = vld [vmem:[#allocation2 + $0x1d0] sm:$0xff]
  %v2804 = vld [vmem:[#allocation2 + $0x1d8] sm:$0xff]
  %v2805 = vld [vmem:[#allocation2 + $0x1e0] sm:$0xff]
  %v2806 = vld [vmem:[#allocation2 + $0x1e8] sm:$0xff]
  %v2807 = vld [vmem:[#allocation2 + $0x1f0] sm:$0xff]
  %v2808 = vld [vmem:[#allocation2 + $0x1f8] sm:$0xff]
  %v2809 = vld [vmem:[#allocation3] sm:$0xf]
  %v2810 = vld [vmem:[#allocation3 + $0x4] sm:$0xf]
  %v2811 = vld [vmem:[#allocation3 + $0x8] sm:$0xf]
  %v2812 = vld [vmem:[#allocation3 + $0xc] sm:$0xf]
  %v2813 = vld [vmem:[#allocation3 + $0x10] sm:$0xf]
  %v2814 = vld [vmem:[#allocation3 + $0x14] sm:$0xf]
  %v2815 = vld [vmem:[#allocation3 + $0x18] sm:$0xf]
  %v2816 = vld [vmem:[#allocation3 + $0x1c] sm:$0xf]
  %v2817 = vld [vmem:[#allocation3 + $0x20] sm:$0xf]
  %v2818 = vld [vmem:[#allocation3 + $0x24] sm:$0xf]
  %v2819 = vld [vmem:[#allocation3 + $0x28] sm:$0xf]
  %v2820 = vld [vmem:[#allocation3 + $0x2c] sm:$0xf]
  %v2821 = vld [vmem:[#allocation3 + $0x30] sm:$0xf]
  %v2822 = vld [vmem:[#allocation3 + $0x34] sm:$0xf]
  %v2823 = vld [vmem:[#allocation3 + $0x38] sm:$0xf]
  %v2824 = vld [vmem:[#allocation3 + $0x3c] sm:$0xf]
  %v2825 = vld [vmem:[#allocation3 + $0x40] sm:$0xf]
  %v2826 = vld [vmem:[#allocation3 + $0x44] sm:$0xf]
  %v2827 = vld [vmem:[#allocation3 + $0x48] sm:$0xf]
  %v2828 = vld [vmem:[#allocation3 + $0x4c] sm:$0xf]
  %v2829 = vld [vmem:[#allocation3 + $0x50] sm:$0xf]
  %v2830 = vld [vmem:[#allocation3 + $0x54] sm:$0xf]
  %v2831 = vld [vmem:[#allocation3 + $0x58] sm:$0xf]
  %v2832 = vld [vmem:[#allocation3 + $0x5c] sm:$0xf]
  %v2833 = vld [vmem:[#allocation3 + $0x60] sm:$0xf]
  %v2834 = vld [vmem:[#allocation3 + $0x64] sm:$0xf]
  %v2835 = vld [vmem:[#allocation3 + $0x68] sm:$0xf]
  %v2836 = vld [vmem:[#allocation3 + $0x6c] sm:$0xf]
  %v2837 = vld [vmem:[#allocation3 + $0x70] sm:$0xf]
  %v2838 = vld [vmem:[#allocation3 + $0x74] sm:$0xf]
  %v2839 = vld [vmem:[#allocation3 + $0x78] sm:$0xf]
  %v2840 = vld [vmem:[#allocation3 + $0x7c] sm:$0xf]
  %v2841 = vld [vmem:[#allocation3 + $0x80] sm:$0xf]
  %v2842 = vld [vmem:[#allocation3 + $0x84] sm:$0xf]
  %v2843 = vld [vmem:[#allocation3 + $0x88] sm:$0xf]
  %v2844 = vld [vmem:[#allocation3 + $0x8c] sm:$0xf]
  %v2845 = vld [vmem:[#allocation3 + $0x90] sm:$0xf]
  %v2846 = vld [vmem:[#allocation3 + $0x94] sm:$0xf]
  %v2847 = vld [vmem:[#allocation3 + $0x98] sm:$0xf]
  %v2848 = vld [vmem:[#allocation3 + $0x9c] sm:$0xf]
  %v2849 = vld [vmem:[#allocation3 + $0xa0] sm:$0xf]
  %v2850 = vld [vmem:[#allocation3 + $0xa4] sm:$0xf]
  %v2851 = vld [vmem:[#allocation3 + $0xa8] sm:$0xf]
  %v2852 = vld [vmem:[#allocation3 + $0xac] sm:$0xf]
  %v2853 = vld [vmem:[#allocation3 + $0xb0] sm:$0xf]
  %v2854 = vld [vmem:[#allocation3 + $0xb4] sm:$0xf]
  %v2855 = vld [vmem:[#allocation3 + $0xb8] sm:$0xf]
  %v2856 = vld [vmem:[#allocation3 + $0xbc] sm:$0xf]
  %v2857 = vld [vmem:[#allocation3 + $0xc0] sm:$0xf]
  %v2858 = vld [vmem:[#allocation3 + $0xc4] sm:$0xf]
  %v2859 = vld [vmem:[#allocation3 + $0xc8] sm:$0xf]
  %v2860 = vld [vmem:[#allocation3 + $0xcc] sm:$0xf]
  %v2861 = vld [vmem:[#allocation3 + $0xd0] sm:$0xf]
  %v2862 = vld [vmem:[#allocation3 + $0xd4] sm:$0xf]
  %v2863 = vld [vmem:[#allocation3 + $0xd8] sm:$0xf]
  %v2864 = vld [vmem:[#allocation3 + $0xdc] sm:$0xf]
  %v2865 = vld [vmem:[#allocation3 + $0xe0] sm:$0xf]
  %v2866 = vld [vmem:[#allocation3 + $0xe4] sm:$0xf]
  %v2867 = vld [vmem:[#allocation3 + $0xe8] sm:$0xf]
  %v2868 = vld [vmem:[#allocation3 + $0xec] sm:$0xf]
  %v2869 = vld [vmem:[#allocation3 + $0xf0] sm:$0xf]
  %v2870 = vld [vmem:[#allocation3 + $0xf4] sm:$0xf]
  %v2871 = vld [vmem:[#allocation3 + $0xf8] sm:$0xf]
  %v2872 = vld [vmem:[#allocation3 + $0xfc] sm:$0xf]
  %v2873 = vld [vmem:[#allocation3 + $0x100] sm:$0xf]
  %v2874 = vld [vmem:[#allocation3 + $0x104] sm:$0xf]
  %v2875 = vld [vmem:[#allocation3 + $0x108] sm:$0xf]
  %v2876 = vld [vmem:[#allocation3 + $0x10c] sm:$0xf]
  %v2877 = vld [vmem:[#allocation3 + $0x110] sm:$0xf]
  %v2878 = vld [vmem:[#allocation3 + $0x114] sm:$0xf]
  %v2879 = vld [vmem:[#allocation3 + $0x118] sm:$0xf]
  %v2880 = vld [vmem:[#allocation3 + $0x11c] sm:$0xf]
  %v2881 = vld [vmem:[#allocation3 + $0x120] sm:$0xf]
  %v2882 = vld [vmem:[#allocation3 + $0x124] sm:$0xf]
  %v2883 = vld [vmem:[#allocation3 + $0x128] sm:$0xf]
  %v2884 = vld [vmem:[#allocation3 + $0x12c] sm:$0xf]
  %v2885 = vld [vmem:[#allocation3 + $0x130] sm:$0xf]
  %v2886 = vld [vmem:[#allocation3 + $0x134] sm:$0xf]
  %v2887 = vld [vmem:[#allocation3 + $0x138] sm:$0xf]
  %v2888 = vld [vmem:[#allocation3 + $0x13c] sm:$0xf]
  %v2889 = vld [vmem:[#allocation3 + $0x140] sm:$0xf]
  %v2890 = vld [vmem:[#allocation3 + $0x144] sm:$0xf]
  %v2891 = vld [vmem:[#allocation3 + $0x148] sm:$0xf]
  %v2892 = vld [vmem:[#allocation3 + $0x14c] sm:$0xf]
  %v2893 = vld [vmem:[#allocation3 + $0x150] sm:$0xf]
  %v2894 = vld [vmem:[#allocation3 + $0x154] sm:$0xf]
  %v2895 = vld [vmem:[#allocation3 + $0x158] sm:$0xf]
  %v2896 = vld [vmem:[#allocation3 + $0x15c] sm:$0xf]
  %v2897 = vld [vmem:[#allocation3 + $0x160] sm:$0xf]
  %v2898 = vld [vmem:[#allocation3 + $0x164] sm:$0xf]
  %v2899 = vld [vmem:[#allocation3 + $0x168] sm:$0xf]
  %v2900 = vld [vmem:[#allocation3 + $0x16c] sm:$0xf]
  %v2901 = vld [vmem:[#allocation3 + $0x170] sm:$0xf]
  %v2902 = vld [vmem:[#allocation3 + $0x174] sm:$0xf]
  %v2903 = vld [vmem:[#allocation3 + $0x178] sm:$0xf]
  %v2904 = vld [vmem:[#allocation3 + $0x17c] sm:$0xf]
  %v2905 = vld [vmem:[#allocation3 + $0x180] sm:$0xf]
  %v2906 = vld [vmem:[#allocation3 + $0x184] sm:$0xf]
  %v2907 = vld [vmem:[#allocation3 + $0x188] sm:$0xf]
  %v2908 = vld [vmem:[#allocation3 + $0x18c] sm:$0xf]
  %v2909 = vld [vmem:[#allocation3 + $0x190] sm:$0xf]
  %v2910 = vld [vmem:[#allocation3 + $0x194] sm:$0xf]
  %v2911 = vld [vmem:[#allocation3 + $0x198] sm:$0xf]
  %v2912 = vld [vmem:[#allocation3 + $0x19c] sm:$0xf]
  %v2913 = vld [vmem:[#allocation3 + $0x1a0] sm:$0xf]
  %v2914 = vld [vmem:[#allocation3 + $0x1a4] sm:$0xf]
  %v2915 = vld [vmem:[#allocation3 + $0x1a8] sm:$0xf]
  %v2916 = vld [vmem:[#allocation3 + $0x1ac] sm:$0xf]
  %v2917 = vld [vmem:[#allocation3 + $0x1b0] sm:$0xf]
  %v2918 = vld [vmem:[#allocation3 + $0x1b4] sm:$0xf]
  %v2919 = vld [vmem:[#allocation3 + $0x1b8] sm:$0xf]
  %v2920 = vld [vmem:[#allocation3 + $0x1bc] sm:$0xf]
  %v2921 = vld [vmem:[#allocation3 + $0x1c0] sm:$0xf]
  %v2922 = vld [vmem:[#allocation3 + $0x1c4] sm:$0xf]
  %v2923 = vld [vmem:[#allocation3 + $0x1c8] sm:$0xf]
  %v2924 = vld [vmem:[#allocation3 + $0x1cc] sm:$0xf]
  %v2925 = vld [vmem:[#allocation3 + $0x1d0] sm:$0xf]
  %v2926 = vld [vmem:[#allocation3 + $0x1d4] sm:$0xf]
  %v2927 = vld [vmem:[#allocation3 + $0x1d8] sm:$0xf]
  %v2928 = vld [vmem:[#allocation3 + $0x1dc] sm:$0xf]
  %v2929 = vld [vmem:[#allocation3 + $0x1e0] sm:$0xf]
  %v2930 = vld [vmem:[#allocation3 + $0x1e4] sm:$0xf]
  %v2931 = vld [vmem:[#allocation3 + $0x1e8] sm:$0xf]
  %v2932 = vld [vmem:[#allocation3 + $0x1ec] sm:$0xf]
  %v2933 = vld [vmem:[#allocation3 + $0x1f0] sm:$0xf]
  %v2934 = vld [vmem:[#allocation3 + $0x1f4] sm:$0xf]
  %v2935 = vld [vmem:[#allocation3 + $0x1f8] sm:$0xf]
  %v2936 = vld [vmem:[#allocation3 + $0x1fc] sm:$0xf]
  %v3001 = vunpack.c.l.b16 %v2745
  %v3002 = vunpack.c.h.b16 %v2745
  %v3003 = vunpack.c.l.b16 %v2746
  %v3004 = vunpack.c.h.b16 %v2746
  %v3005 = vunpack.c.l.b16 %v2747
  %v3006 = vunpack.c.h.b16 %v2747
  %v3007 = vunpack.c.l.b16 %v2748
  %v3008 = vunpack.c.h.b16 %v2748
  %v3009 = vunpack.c.l.b16 %v2749
  %v3010 = vunpack.c.h.b16 %v2749
  %v3011 = vunpack.c.l.b16 %v2750
  %v3012 = vunpack.c.h.b16 %v2750
  %v3013 = vunpack.c.l.b16 %v2751
  %v3014 = vunpack.c.h.b16 %v2751
  %v3015 = vunpack.c.l.b16 %v2752
  %v3016 = vunpack.c.h.b16 %v2752
  %v3017 = vunpack.c.l.b16 %v2753
  %v3018 = vunpack.c.h.b16 %v2753
  %v3019 = vunpack.c.l.b16 %v2754
  %v3020 = vunpack.c.h.b16 %v2754
  %v3021 = vunpack.c.l.b16 %v2755
  %v3022 = vunpack.c.h.b16 %v2755
  %v3023 = vunpack.c.l.b16 %v2756
  %v3024 = vunpack.c.h.b16 %v2756
  %v3025 = vunpack.c.l.b16 %v2757
  %v3026 = vunpack.c.h.b16 %v2757
  %v3027 = vunpack.c.l.b16 %v2758
  %v3028 = vunpack.c.h.b16 %v2758
  %v3029 = vunpack.c.l.b16 %v2759
  %v3030 = vunpack.c.h.b16 %v2759
  %v3031 = vunpack.c.l.b16 %v2760
  %v3032 = vunpack.c.h.b16 %v2760
  %v3033 = vunpack.c.l.b16 %v2761
  %v3034 = vunpack.c.h.b16 %v2761
  %v3035 = vunpack.c.l.b16 %v2762
  %v3036 = vunpack.c.h.b16 %v2762
  %v3037 = vunpack.c.l.b16 %v2763
  %v3038 = vunpack.c.h.b16 %v2763
  %v3039 = vunpack.c.l.b16 %v2764
  %v3040 = vunpack.c.h.b16 %v2764
  %v3041 = vunpack.c.l.b16 %v2765
  %v3042 = vunpack.c.h.b16 %v2765
  %v3043 = vunpack.c.l.b16 %v2766
  %v3044 = vunpack.c.h.b16 %v2766
  %v3045 = vunpack.c.l.b16 %v2767
  %v3046 = vunpack.c.h.b16 %v2767
  %v3047 = vunpack.c.l.b16 %v2768
  %v3048 = vunpack.c.h.b16 %v2768
  %v3049 = vunpack.c.l.b16 %v2769
  %v3050 = vunpack.c.h.b16 %v2769
  %v3051 = vunpack.c.l.b16 %v2770
  %v3052 = vunpack.c.h.b16 %v2770
  %v3053 = vunpack.c.l.b16 %v2771
  %v3054 = vunpack.c.h.b16 %v2771
  %v3055 = vunpack.c.l.b16 %v2772
  %v3056 = vunpack.c.h.b16 %v2772
  %v3057 = vunpack.c.l.b16 %v2773
  %v3058 = vunpack.c.h.b16 %v2773
  %v3059 = vunpack.c.l.b16 %v2774
  %v3060 = vunpack.c.h.b16 %v2774
  %v3061 = vunpack.c.l.b16 %v2775
  %v3062 = vunpack.c.h.b16 %v2775
  %v3063 = vunpack.c.l.b16 %v2776
  %v3064 = vunpack.c.h.b16 %v2776
  %v3065 = vunpack.c.l.b16 %v2777
  %v3066 = vunpack.c.h.b16 %v2777
  %v3067 = vunpack.c.l.b16 %v2778
  %v3068 = vunpack.c.h.b16 %v2778
  %v3069 = vunpack.c.l.b16 %v2779
  %v3070 = vunpack.c.h.b16 %v2779
  %v3071 = vunpack.c.l.b16 %v2780
  %v3072 = vunpack.c.h.b16 %v2780
  %v3073 = vunpack.c.l.b16 %v2781
  %v3074 = vunpack.c.h.b16 %v2781
  %v3075 = vunpack.c.l.b16 %v2782
  %v3076 = vunpack.c.h.b16 %v2782
  %v3077 = vunpack.c.l.b16 %v2783
  %v3078 = vunpack.c.h.b16 %v2783
  %v3079 = vunpack.c.l.b16 %v2784
  %v3080 = vunpack.c.h.b16 %v2784
  %v3081 = vunpack.c.l.b16 %v2785
  %v3082 = vunpack.c.h.b16 %v2785
  %v3083 = vunpack.c.l.b16 %v2786
  %v3084 = vunpack.c.h.b16 %v2786
  %v3085 = vunpack.c.l.b16 %v2787
  %v3086 = vunpack.c.h.b16 %v2787
  %v3087 = vunpack.c.l.b16 %v2788
  %v3088 = vunpack.c.h.b16 %v2788
  %v3089 = vunpack.c.l.b16 %v2789
  %v3090 = vunpack.c.h.b16 %v2789
  %v3091 = vunpack.c.l.b16 %v2790
  %v3092 = vunpack.c.h.b16 %v2790
  %v3093 = vunpack.c.l.b16 %v2791
  %v3094 = vunpack.c.h.b16 %v2791
  %v3095 = vunpack.c.l.b16 %v2792
  %v3096 = vunpack.c.h.b16 %v2792
  %v3097 = vunpack.c.l.b16 %v2793
  %v3098 = vunpack.c.h.b16 %v2793
  %v3099 = vunpack.c.l.b16 %v2794
  %v3100 = vunpack.c.h.b16 %v2794
  %v3101 = vunpack.c.l.b16 %v2795
  %v3102 = vunpack.c.h.b16 %v2795
  %v3103 = vunpack.c.l.b16 %v2796
  %v3104 = vunpack.c.h.b16 %v2796
  %v3105 = vunpack.c.l.b16 %v2797
  %v3106 = vunpack.c.h.b16 %v2797
  %v3107 = vunpack.c.l.b16 %v2798
  %v3108 = vunpack.c.h.b16 %v2798
  %v3109 = vunpack.c.l.b16 %v2799
  %v3110 = vunpack.c.h.b16 %v2799
  %v3111 = vunpack.c.l.b16 %v2800
  %v3112 = vunpack.c.h.b16 %v2800
  %v3113 = vunpack.c.l.b16 %v2801
  %v3114 = vunpack.c.h.b16 %v2801
  %v3115 = vunpack.c.l.b16 %v2802
  %v3116 = vunpack.c.h.b16 %v2802
  %v3117 = vunpack.c.l.b16 %v2803
  %v3118 = vunpack.c.h.b16 %v2803
  %v3119 = vunpack.c.l.b16 %v2804
  %v3120 = vunpack.c.h.b16 %v2804
  %v3121 = vunpack.c.l.b16 %v2805
  %v3122 = vunpack.c.h.b16 %v2805
  %v3123 = vunpack.c.l.b16 %v2806
  %v3124 = vunpack.c.h.b16 %v2806
  %v3125 = vunpack.c.l.b16 %v2807
  %v3126 = vunpack.c.h.b16 %v2807
  %v3127 = vunpack.c.l.b16 %v2808
  %v3128 = vunpack.c.h.b16 %v2808
  %v3129 = vpack.c.b16 %v3009, %v3001
  %v3130 = vpack.c.b16 %v3010, %v3002
  %v3131 = vpack.c.b16 %v3011, %v3003
  %v3132 = vpack.c.b16 %v3012, %v3004
  %v3133 = vpack.c.b16 %v3013, %v3005
  %v3134 = vpack.c.b16 %v3014, %v3006
  %v3135 = vpack.c.b16 %v3015, %v3007
  %v3136 = vpack.c.b16 %v3016, %v3008
  %v3137 = vpack.c.b16 %v3025, %v3017
  %v3138 = vpack.c.b16 %v3026, %v3018
  %v3139 = vpack.c.b16 %v3027, %v3019
  %v3140 = vpack.c.b16 %v3028, %v3020
  %v3141 = vpack.c.b16 %v3029, %v3021
  %v3142 = vpack.c.b16 %v3030, %v3022
  %v3143 = vpack.c.b16 %v3031, %v3023
  %v3144 = vpack.c.b16 %v3032, %v3024
  %v3145 = vpack.c.b16 %v3041, %v3033
  %v3146 = vpack.c.b16 %v3042, %v3034
  %v3147 = vpack.c.b16 %v3043, %v3035
  %v3148 = vpack.c.b16 %v3044, %v3036
  %v3149 = vpack.c.b16 %v3045, %v3037
  %v3150 = vpack.c.b16 %v3046, %v3038
  %v3151 = vpack.c.b16 %v3047, %v3039
  %v3152 = vpack.c.b16 %v3048, %v3040
  %v3153 = vpack.c.b16 %v3057, %v3049
  %v3154 = vpack.c.b16 %v3058, %v3050
  %v3155 = vpack.c.b16 %v3059, %v3051
  %v3156 = vpack.c.b16 %v3060, %v3052
  %v3157 = vpack.c.b16 %v3061, %v3053
  %v3158 = vpack.c.b16 %v3062, %v3054
  %v3159 = vpack.c.b16 %v3063, %v3055
  %v3160 = vpack.c.b16 %v3064, %v3056
  %v3161 = vpack.c.b16 %v3073, %v3065
  %v3162 = vpack.c.b16 %v3074, %v3066
  %v3163 = vpack.c.b16 %v3075, %v3067
  %v3164 = vpack.c.b16 %v3076, %v3068
  %v3165 = vpack.c.b16 %v3077, %v3069
  %v3166 = vpack.c.b16 %v3078, %v3070
  %v3167 = vpack.c.b16 %v3079, %v3071
  %v3168 = vpack.c.b16 %v3080, %v3072
  %v3169 = vpack.c.b16 %v3089, %v3081
  %v3170 = vpack.c.b16 %v3090, %v3082
  %v3171 = vpack.c.b16 %v3091, %v3083
  %v3172 = vpack.c.b16 %v3092, %v3084
  %v3173 = vpack.c.b16 %v3093, %v3085
  %v3174 = vpack.c.b16 %v3094, %v3086
  %v3175 = vpack.c.b16 %v3095, %v3087
  %v3176 = vpack.c.b16 %v3096, %v3088
  %v3177 = vpack.c.b16 %v3105, %v3097
  %v3178 = vpack.c.b16 %v3106, %v3098
  %v3179 = vpack.c.b16 %v3107, %v3099
  %v3180 = vpack.c.b16 %v3108, %v3100
  %v3181 = vpack.c.b16 %v3109, %v3101
  %v3182 = vpack.c.b16 %v3110, %v3102
  %v3183 = vpack.c.b16 %v3111, %v3103
  %v3184 = vpack.c.b16 %v3112, %v3104
  %v3185 = vpack.c.b16 %v3121, %v3113
  %v3186 = vpack.c.b16 %v3122, %v3114
  %v3187 = vpack.c.b16 %v3123, %v3115
  %v3188 = vpack.c.b16 %v3124, %v3116
  %v3189 = vpack.c.b16 %v3125, %v3117
  %v3190 = vpack.c.b16 %v3126, %v3118
  %v3191 = vpack.c.b16 %v3127, %v3119
  %v3192 = vpack.c.b16 %v3128, %v3120
  %v3385 = vunpack.c.l.b16 %v2809
  %v3386 = vunpack.c.l.b16 %v2810
  %v3387 = vunpack.c.l.b16 %v2811
  %v3388 = vunpack.c.l.b16 %v2812
  %v3389 = vunpack.c.l.b16 %v2813
  %v3390 = vunpack.c.l.b16 %v2814
  %v3391 = vunpack.c.l.b16 %v2815
  %v3392 = vunpack.c.l.b16 %v2816
  %v3393 = vunpack.c.l.b16 %v2817
  %v3394 = vunpack.c.l.b16 %v2818
  %v3395 = vunpack.c.l.b16 %v2819
  %v3396 = vunpack.c.l.b16 %v2820
  %v3397 = vunpack.c.l.b16 %v2821
  %v3398 = vunpack.c.l.b16 %v2822
  %v3399 = vunpack.c.l.b16 %v2823
  %v3400 = vunpack.c.l.b16 %v2824
  %v3401 = vunpack.c.l.b16 %v2825
  %v3402 = vunpack.c.l.b16 %v2826
  %v3403 = vunpack.c.l.b16 %v2827
  %v3404 = vunpack.c.l.b16 %v2828
  %v3405 = vunpack.c.l.b16 %v2829
  %v3406 = vunpack.c.l.b16 %v2830
  %v3407 = vunpack.c.l.b16 %v2831
  %v3408 = vunpack.c.l.b16 %v2832
  %v3409 = vunpack.c.l.b16 %v2833
  %v3410 = vunpack.c.l.b16 %v2834
  %v3411 = vunpack.c.l.b16 %v2835
  %v3412 = vunpack.c.l.b16 %v2836
  %v3413 = vunpack.c.l.b16 %v2837
  %v3414 = vunpack.c.l.b16 %v2838
  %v3415 = vunpack.c.l.b16 %v2839
  %v3416 = vunpack.c.l.b16 %v2840
  %v3417 = vunpack.c.l.b16 %v2841
  %v3418 = vunpack.c.l.b16 %v2842
  %v3419 = vunpack.c.l.b16 %v2843
  %v3420 = vunpack.c.l.b16 %v2844
  %v3421 = vunpack.c.l.b16 %v2845
  %v3422 = vunpack.c.l.b16 %v2846
  %v3423 = vunpack.c.l.b16 %v2847
  %v3424 = vunpack.c.l.b16 %v2848
  %v3425 = vunpack.c.l.b16 %v2849
  %v3426 = vunpack.c.l.b16 %v2850
  %v3427 = vunpack.c.l.b16 %v2851
  %v3428 = vunpack.c.l.b16 %v2852
  %v3429 = vunpack.c.l.b16 %v2853
  %v3430 = vunpack.c.l.b16 %v2854
  %v3431 = vunpack.c.l.b16 %v2855
  %v3432 = vunpack.c.l.b16 %v2856
  %v3433 = vunpack.c.l.b16 %v2857
  %v3434 = vunpack.c.l.b16 %v2858
  %v3435 = vunpack.c.l.b16 %v2859
  %v3436 = vunpack.c.l.b16 %v2860
  %v3437 = vunpack.c.l.b16 %v2861
  %v3438 = vunpack.c.l.b16 %v2862
  %v3439 = vunpack.c.l.b16 %v2863
  %v3440 = vunpack.c.l.b16 %v2864
  %v3441 = vunpack.c.l.b16 %v2865
  %v3442 = vunpack.c.l.b16 %v2866
  %v3443 = vunpack.c.l.b16 %v2867
  %v3444 = vunpack.c.l.b16 %v2868
  %v3445 = vunpack.c.l.b16 %v2869
  %v3446 = vunpack.c.l.b16 %v2870
  %v3447 = vunpack.c.l.b16 %v2871
  %v3448 = vunpack.c.l.b16 %v2872
  %v3449 = vunpack.c.l.b16 %v2873
  %v3450 = vunpack.c.l.b16 %v2874
  %v3451 = vunpack.c.l.b16 %v2875
  %v3452 = vunpack.c.l.b16 %v2876
  %v3453 = vunpack.c.l.b16 %v2877
  %v3454 = vunpack.c.l.b16 %v2878
  %v3455 = vunpack.c.l.b16 %v2879
  %v3456 = vunpack.c.l.b16 %v2880
  %v3457 = vunpack.c.l.b16 %v2881
  %v3458 = vunpack.c.l.b16 %v2882
  %v3459 = vunpack.c.l.b16 %v2883
  %v3460 = vunpack.c.l.b16 %v2884
  %v3461 = vunpack.c.l.b16 %v2885
  %v3462 = vunpack.c.l.b16 %v2886
  %v3463 = vunpack.c.l.b16 %v2887
  %v3464 = vunpack.c.l.b16 %v2888
  %v3465 = vunpack.c.l.b16 %v2889
  %v3466 = vunpack.c.l.b16 %v2890
  %v3467 = vunpack.c.l.b16 %v2891
  %v3468 = vunpack.c.l.b16 %v2892
  %v3469 = vunpack.c.l.b16 %v2893
  %v3470 = vunpack.c.l.b16 %v2894
  %v3471 = vunpack.c.l.b16 %v2895
  %v3472 = vunpack.c.l.b16 %v2896
  %v3473 = vunpack.c.l.b16 %v2897
  %v3474 = vunpack.c.l.b16 %v2898
  %v3475 = vunpack.c.l.b16 %v2899
  %v3476 = vunpack.c.l.b16 %v2900
  %v3477 = vunpack.c.l.b16 %v2901
  %v3478 = vunpack.c.l.b16 %v2902
  %v3479 = vunpack.c.l.b16 %v2903
  %v3480 = vunpack.c.l.b16 %v2904
  %v3481 = vunpack.c.l.b16 %v2905
  %v3482 = vunpack.c.l.b16 %v2906
  %v3483 = vunpack.c.l.b16 %v2907
  %v3484 = vunpack.c.l.b16 %v2908
  %v3485 = vunpack.c.l.b16 %v2909
  %v3486 = vunpack.c.l.b16 %v2910
  %v3487 = vunpack.c.l.b16 %v2911
  %v3488 = vunpack.c.l.b16 %v2912
  %v3489 = vunpack.c.l.b16 %v2913
  %v3490 = vunpack.c.l.b16 %v2914
  %v3491 = vunpack.c.l.b16 %v2915
  %v3492 = vunpack.c.l.b16 %v2916
  %v3493 = vunpack.c.l.b16 %v2917
  %v3494 = vunpack.c.l.b16 %v2918
  %v3495 = vunpack.c.l.b16 %v2919
  %v3496 = vunpack.c.l.b16 %v2920
  %v3497 = vunpack.c.l.b16 %v2921
  %v3498 = vunpack.c.l.b16 %v2922
  %v3499 = vunpack.c.l.b16 %v2923
  %v3500 = vunpack.c.l.b16 %v2924
  %v3501 = vunpack.c.l.b16 %v2925
  %v3502 = vunpack.c.l.b16 %v2926
  %v3503 = vunpack.c.l.b16 %v2927
  %v3504 = vunpack.c.l.b16 %v2928
  %v3505 = vunpack.c.l.b16 %v2929
  %v3506 = vunpack.c.l.b16 %v2930
  %v3507 = vunpack.c.l.b16 %v2931
  %v3508 = vunpack.c.l.b16 %v2932
  %v3509 = vunpack.c.l.b16 %v2933
  %v3510 = vunpack.c.l.b16 %v2934
  %v3511 = vunpack.c.l.b16 %v2935
  %v3512 = vunpack.c.l.b16 %v2936
  %v3513 = vpack.c.b16 %v3386, %v3385
  %v3514 = vpack.c.b16 %v3388, %v3387
  %v3515 = vpack.c.b16 %v3390, %v3389
  %v3516 = vpack.c.b16 %v3392, %v3391
  %v3517 = vpack.c.b16 %v3394, %v3393
  %v3518 = vpack.c.b16 %v3396, %v3395
  %v3519 = vpack.c.b16 %v3398, %v3397
  %v3520 = vpack.c.b16 %v3400, %v3399
  %v3521 = vpack.c.b16 %v3402, %v3401
  %v3522 = vpack.c.b16 %v3404, %v3403
  %v3523 = vpack.c.b16 %v3406, %v3405
  %v3524 = vpack.c.b16 %v3408, %v3407
  %v3525 = vpack.c.b16 %v3410, %v3409
  %v3526 = vpack.c.b16 %v3412, %v3411
  %v3527 = vpack.c.b16 %v3414, %v3413
  %v3528 = vpack.c.b16 %v3416, %v3415
  %v3529 = vpack.c.b16 %v3418, %v3417
  %v3530 = vpack.c.b16 %v3420, %v3419
  %v3531 = vpack.c.b16 %v3422, %v3421
  %v3532 = vpack.c.b16 %v3424, %v3423
  %v3533 = vpack.c.b16 %v3426, %v3425
  %v3534 = vpack.c.b16 %v3428, %v3427
  %v3535 = vpack.c.b16 %v3430, %v3429
  %v3536 = vpack.c.b16 %v3432, %v3431
  %v3537 = vpack.c.b16 %v3434, %v3433
  %v3538 = vpack.c.b16 %v3436, %v3435
  %v3539 = vpack.c.b16 %v3438, %v3437
  %v3540 = vpack.c.b16 %v3440, %v3439
  %v3541 = vpack.c.b16 %v3442, %v3441
  %v3542 = vpack.c.b16 %v3444, %v3443
  %v3543 = vpack.c.b16 %v3446, %v3445
  %v3544 = vpack.c.b16 %v3448, %v3447
  %v3545 = vpack.c.b16 %v3450, %v3449
  %v3546 = vpack.c.b16 %v3452, %v3451
  %v3547 = vpack.c.b16 %v3454, %v3453
  %v3548 = vpack.c.b16 %v3456, %v3455
  %v3549 = vpack.c.b16 %v3458, %v3457
  %v3550 = vpack.c.b16 %v3460, %v3459
  %v3551 = vpack.c.b16 %v3462, %v3461
  %v3552 = vpack.c.b16 %v3464, %v3463
  %v3553 = vpack.c.b16 %v3466, %v3465
  %v3554 = vpack.c.b16 %v3468, %v3467
  %v3555 = vpack.c.b16 %v3470, %v3469
  %v3556 = vpack.c.b16 %v3472, %v3471
  %v3557 = vpack.c.b16 %v3474, %v3473
  %v3558 = vpack.c.b16 %v3476, %v3475
  %v3559 = vpack.c.b16 %v3478, %v3477
  %v3560 = vpack.c.b16 %v3480, %v3479
  %v3561 = vpack.c.b16 %v3482, %v3481
  %v3562 = vpack.c.b16 %v3484, %v3483
  %v3563 = vpack.c.b16 %v3486, %v3485
  %v3564 = vpack.c.b16 %v3488, %v3487
  %v3565 = vpack.c.b16 %v3490, %v3489
  %v3566 = vpack.c.b16 %v3492, %v3491
  %v3567 = vpack.c.b16 %v3494, %v3493
  %v3568 = vpack.c.b16 %v3496, %v3495
  %v3569 = vpack.c.b16 %v3498, %v3497
  %v3570 = vpack.c.b16 %v3500, %v3499
  %v3571 = vpack.c.b16 %v3502, %v3501
  %v3572 = vpack.c.b16 %v3504, %v3503
  %v3573 = vpack.c.b16 %v3506, %v3505
  %v3574 = vpack.c.b16 %v3508, %v3507
  %v3575 = vpack.c.b16 %v3510, %v3509
  %v3576 = vpack.c.b16 %v3512, %v3511
  %3641 = vmatpush.bf16.msra.mxu0 %v3520
  %3642 = vmatpush.bf16.msra.mxu0 %v3519
  %3643 = vmatpush.bf16.msra.mxu0 %v3518
  %3644 = vmatpush.bf16.msra.mxu0 %v3517
  %3645 = vmatpush.bf16.msra.mxu0 %v3516
  %3646 = vmatpush.bf16.msra.mxu0 %v3515
  %3647 = vmatpush.bf16.msra.mxu0 %v3514
  %3648 = vmatpush.bf16.msra.mxu0 %v3513
  %3649 = vmatmul.bf16.gmra.mxu0 %v3129
  %v3650 = vpop.f32.mrf.mxu0
  %v3651 = vadd.f32 0.0, %v3650
  %v3652 = vpop.f32.mrf.mxu0
  %v3653 = vadd.f32 0.0, %v3652
  %3654 = vmatmul.bf16.gmra.mxu0 %v3137
  %v3655 = vpop.f32.mrf.mxu0
  %v3656 = vadd.f32 0.0, %v3655
  %v3657 = vpop.f32.mrf.mxu0
  %v3658 = vadd.f32 0.0, %v3657
  %3659 = vmatmul.bf16.gmra.mxu0 %v3145
  %v3660 = vpop.f32.mrf.mxu0
  %v3661 = vadd.f32 0.0, %v3660
  %v3662 = vpop.f32.mrf.mxu0
  %v3663 = vadd.f32 0.0, %v3662
  %3664 = vmatmul.bf16.gmra.mxu0 %v3153
  %v3665 = vpop.f32.mrf.mxu0
  %v3666 = vadd.f32 0.0, %v3665
  %v3667 = vpop.f32.mrf.mxu0
  %v3668 = vadd.f32 0.0, %v3667
  %3669 = vmatmul.bf16.gmra.mxu0 %v3161
  %v3670 = vpop.f32.mrf.mxu0
  %v3671 = vadd.f32 0.0, %v3670
  %v3672 = vpop.f32.mrf.mxu0
  %v3673 = vadd.f32 0.0, %v3672
  %3674 = vmatmul.bf16.gmra.mxu0 %v3169
  %v3675 = vpop.f32.mrf.mxu0
  %v3676 = vadd.f32 0.0, %v3675
  %v3677 = vpop.f32.mrf.mxu0
  %v3678 = vadd.f32 0.0, %v3677
  %3679 = vmatmul.bf16.gmra.mxu0 %v3177
  %v3680 = vpop.f32.mrf.mxu0
  %v3681 = vadd.f32 0.0, %v3680
  %v3682 = vpop.f32.mrf.mxu0
  %v3683 = vadd.f32 0.0, %v3682
  %3684 = vmatmul.bf16.gmra.mxu0 %v3185
  %v3685 = vpop.f32.mrf.mxu0
  %v3686 = vadd.f32 0.0, %v3685
  %v3687 = vpop.f32.mrf.mxu0
  %v3688 = vadd.f32 0.0, %v3687
  %3689 = vdwg.mxu0
  %3690 = vmatpush.bf16.msra.mxu0 %v3528
  %3691 = vmatpush.bf16.msra.mxu0 %v3527
  %3692 = vmatpush.bf16.msra.mxu0 %v3526
  %3693 = vmatpush.bf16.msra.mxu0 %v3525
  %3694 = vmatpush.bf16.msra.mxu0 %v3524
  %3695 = vmatpush.bf16.msra.mxu0 %v3523
  %3696 = vmatpush.bf16.msra.mxu0 %v3522
  %3697 = vmatpush.bf16.msra.mxu0 %v3521
  %3698 = vmatmul.bf16.gmra.mxu0 %v3130
  %v3699 = vpop.f32.mrf.mxu0
  %v3700 = vadd.f32 %v3651, %v3699
  %v3701 = vpop.f32.mrf.mxu0
  %v3702 = vadd.f32 %v3653, %v3701
  %3703 = vmatmul.bf16.gmra.mxu0 %v3138
  %v3704 = vpop.f32.mrf.mxu0
  %v3705 = vadd.f32 %v3656, %v3704
  %v3706 = vpop.f32.mrf.mxu0
  %v3707 = vadd.f32 %v3658, %v3706
  %3708 = vmatmul.bf16.gmra.mxu0 %v3146
  %v3709 = vpop.f32.mrf.mxu0
  %v3710 = vadd.f32 %v3661, %v3709
  %v3711 = vpop.f32.mrf.mxu0
  %v3712 = vadd.f32 %v3663, %v3711
  %3713 = vmatmul.bf16.gmra.mxu0 %v3154
  %v3714 = vpop.f32.mrf.mxu0
  %v3715 = vadd.f32 %v3666, %v3714
  %v3716 = vpop.f32.mrf.mxu0
  %v3717 = vadd.f32 %v3668, %v3716
  %3718 = vmatmul.bf16.gmra.mxu0 %v3162
  %v3719 = vpop.f32.mrf.mxu0
  %v3720 = vadd.f32 %v3671, %v3719
  %v3721 = vpop.f32.mrf.mxu0
  %v3722 = vadd.f32 %v3673, %v3721
  %3723 = vmatmul.bf16.gmra.mxu0 %v3170
  %v3724 = vpop.f32.mrf.mxu0
  %v3725 = vadd.f32 %v3676, %v3724
  %v3726 = vpop.f32.mrf.mxu0
  %v3727 = vadd.f32 %v3678, %v3726
  %3728 = vmatmul.bf16.gmra.mxu0 %v3178
  %v3729 = vpop.f32.mrf.mxu0
  %v3730 = vadd.f32 %v3681, %v3729
  %v3731 = vpop.f32.mrf.mxu0
  %v3732 = vadd.f32 %v3683, %v3731
  %3733 = vmatmul.bf16.gmra.mxu0 %v3186
  %v3734 = vpop.f32.mrf.mxu0
  %v3735 = vadd.f32 %v3686, %v3734
  %v3736 = vpop.f32.mrf.mxu0
  %v3737 = vadd.f32 %v3688, %v3736
  %3738 = vdwg.mxu0
  %3739 = vmatpush.bf16.msra.mxu0 %v3536
  %3740 = vmatpush.bf16.msra.mxu0 %v3535
  %3741 = vmatpush.bf16.msra.mxu0 %v3534
  %3742 = vmatpush.bf16.msra.mxu0 %v3533
  %3743 = vmatpush.bf16.msra.mxu0 %v3532
  %3744 = vmatpush.bf16.msra.mxu0 %v3531
  %3745 = vmatpush.bf16.msra.mxu0 %v3530
  %3746 = vmatpush.bf16.msra.mxu0 %v3529
  %3747 = vmatmul.bf16.gmra.mxu0 %v3131
  %v3748 = vpop.f32.mrf.mxu0
  %v3749 = vadd.f32 %v3700, %v3748
  %v3750 = vpop.f32.mrf.mxu0
  %v3751 = vadd.f32 %v3702, %v3750
  %3752 = vmatmul.bf16.gmra.mxu0 %v3139
  %v3753 = vpop.f32.mrf.mxu0
  %v3754 = vadd.f32 %v3705, %v3753
  %v3755 = vpop.f32.mrf.mxu0
  %v3756 = vadd.f32 %v3707, %v3755
  %3757 = vmatmul.bf16.gmra.mxu0 %v3147
  %v3758 = vpop.f32.mrf.mxu0
  %v3759 = vadd.f32 %v3710, %v3758
  %v3760 = vpop.f32.mrf.mxu0
  %v3761 = vadd.f32 %v3712, %v3760
  %3762 = vmatmul.bf16.gmra.mxu0 %v3155
  %v3763 = vpop.f32.mrf.mxu0
  %v3764 = vadd.f32 %v3715, %v3763
  %v3765 = vpop.f32.mrf.mxu0
  %v3766 = vadd.f32 %v3717, %v3765
  %3767 = vmatmul.bf16.gmra.mxu0 %v3163
  %v3768 = vpop.f32.mrf.mxu0
  %v3769 = vadd.f32 %v3720, %v3768
  %v3770 = vpop.f32.mrf.mxu0
  %v3771 = vadd.f32 %v3722, %v3770
  %3772 = vmatmul.bf16.gmra.mxu0 %v3171
  %v3773 = vpop.f32.mrf.mxu0
  %v3774 = vadd.f32 %v3725, %v3773
  %v3775 = vpop.f32.mrf.mxu0
  %v3776 = vadd.f32 %v3727, %v3775
  %3777 = vmatmul.bf16.gmra.mxu0 %v3179
  %v3778 = vpop.f32.mrf.mxu0
  %v3779 = vadd.f32 %v3730, %v3778
  %v3780 = vpop.f32.mrf.mxu0
  %v3781 = vadd.f32 %v3732, %v3780
  %3782 = vmatmul.bf16.gmra.mxu0 %v3187
  %v3783 = vpop.f32.mrf.mxu0
  %v3784 = vadd.f32 %v3735, %v3783
  %v3785 = vpop.f32.mrf.mxu0
  %v3786 = vadd.f32 %v3737, %v3785
  %3787 = vdwg.mxu0
  %3788 = vmatpush.bf16.msra.mxu0 %v3544
  %3789 = vmatpush.bf16.msra.mxu0 %v3543
  %3790 = vmatpush.bf16.msra.mxu0 %v3542
  %3791 = vmatpush.bf16.msra.mxu0 %v3541
  %3792 = vmatpush.bf16.msra.mxu0 %v3540
  %3793 = vmatpush.bf16.msra.mxu0 %v3539
  %3794 = vmatpush.bf16.msra.mxu0 %v3538
  %3795 = vmatpush.bf16.msra.mxu0 %v3537
  %3796 = vmatmul.bf16.gmra.mxu0 %v3132
  %v3797 = vpop.f32.mrf.mxu0
  %v3798 = vadd.f32 %v3749, %v3797
  %v3799 = vpop.f32.mrf.mxu0
  %v3800 = vadd.f32 %v3751, %v3799
  %3801 = vmatmul.bf16.gmra.mxu0 %v3140
  %v3802 = vpop.f32.mrf.mxu0
  %v3803 = vadd.f32 %v3754, %v3802
  %v3804 = vpop.f32.mrf.mxu0
  %v3805 = vadd.f32 %v3756, %v3804
  %3806 = vmatmul.bf16.gmra.mxu0 %v3148
  %v3807 = vpop.f32.mrf.mxu0
  %v3808 = vadd.f32 %v3759, %v3807
  %v3809 = vpop.f32.mrf.mxu0
  %v3810 = vadd.f32 %v3761, %v3809
  %3811 = vmatmul.bf16.gmra.mxu0 %v3156
  %v3812 = vpop.f32.mrf.mxu0
  %v3813 = vadd.f32 %v3764, %v3812
  %v3814 = vpop.f32.mrf.mxu0
  %v3815 = vadd.f32 %v3766, %v3814
  %3816 = vmatmul.bf16.gmra.mxu0 %v3164
  %v3817 = vpop.f32.mrf.mxu0
  %v3818 = vadd.f32 %v3769, %v3817
  %v3819 = vpop.f32.mrf.mxu0
  %v3820 = vadd.f32 %v3771, %v3819
  %3821 = vmatmul.bf16.gmra.mxu0 %v3172
  %v3822 = vpop.f32.mrf.mxu0
  %v3823 = vadd.f32 %v3774, %v3822
  %v3824 = vpop.f32.mrf.mxu0
  %v3825 = vadd.f32 %v3776, %v3824
  %3826 = vmatmul.bf16.gmra.mxu0 %v3180
  %v3827 = vpop.f32.mrf.mxu0
  %v3828 = vadd.f32 %v3779, %v3827
  %v3829 = vpop.f32.mrf.mxu0
  %v3830 = vadd.f32 %v3781, %v3829
  %3831 = vmatmul.bf16.gmra.mxu0 %v3188
  %v3832 = vpop.f32.mrf.mxu0
  %v3833 = vadd.f32 %v3784, %v3832
  %v3834 = vpop.f32.mrf.mxu0
  %v3835 = vadd.f32 %v3786, %v3834
  %3836 = vdwg.mxu0
  %3837 = vmatpush.bf16.msra.mxu0 %v3552
  %3838 = vmatpush.bf16.msra.mxu0 %v3551
  %3839 = vmatpush.bf16.msra.mxu0 %v3550
  %3840 = vmatpush.bf16.msra.mxu0 %v3549
  %3841 = vmatpush.bf16.msra.mxu0 %v3548
  %3842 = vmatpush.bf16.msra.mxu0 %v3547
  %3843 = vmatpush.bf16.msra.mxu0 %v3546
  %3844 = vmatpush.bf16.msra.mxu0 %v3545
  %3845 = vmatmul.bf16.gmra.mxu0 %v3133
  %v3846 = vpop.f32.mrf.mxu0
  %v3847 = vadd.f32 %v3798, %v3846
  %v3848 = vpop.f32.mrf.mxu0
  %v3849 = vadd.f32 %v3800, %v3848
  %3850 = vmatmul.bf16.gmra.mxu0 %v3141
  %v3851 = vpop.f32.mrf.mxu0
  %v3852 = vadd.f32 %v3803, %v3851
  %v3853 = vpop.f32.mrf.mxu0
  %v3854 = vadd.f32 %v3805, %v3853
  %3855 = vmatmul.bf16.gmra.mxu0 %v3149
  %v3856 = vpop.f32.mrf.mxu0
  %v3857 = vadd.f32 %v3808, %v3856
  %v3858 = vpop.f32.mrf.mxu0
  %v3859 = vadd.f32 %v3810, %v3858
  %3860 = vmatmul.bf16.gmra.mxu0 %v3157
  %v3861 = vpop.f32.mrf.mxu0
  %v3862 = vadd.f32 %v3813, %v3861
  %v3863 = vpop.f32.mrf.mxu0
  %v3864 = vadd.f32 %v3815, %v3863
  %3865 = vmatmul.bf16.gmra.mxu0 %v3165
  %v3866 = vpop.f32.mrf.mxu0
  %v3867 = vadd.f32 %v3818, %v3866
  %v3868 = vpop.f32.mrf.mxu0
  %v3869 = vadd.f32 %v3820, %v3868
  %3870 = vmatmul.bf16.gmra.mxu0 %v3173
  %v3871 = vpop.f32.mrf.mxu0
  %v3872 = vadd.f32 %v3823, %v3871
  %v3873 = vpop.f32.mrf.mxu0
  %v3874 = vadd.f32 %v3825, %v3873
  %3875 = vmatmul.bf16.gmra.mxu0 %v3181
  %v3876 = vpop.f32.mrf.mxu0
  %v3877 = vadd.f32 %v3828, %v3876
  %v3878 = vpop.f32.mrf.mxu0
  %v3879 = vadd.f32 %v3830, %v3878
  %3880 = vmatmul.bf16.gmra.mxu0 %v3189
  %v3881 = vpop.f32.mrf.mxu0
  %v3882 = vadd.f32 %v3833, %v3881
  %v3883 = vpop.f32.mrf.mxu0
  %v3884 = vadd.f32 %v3835, %v3883
  %3885 = vdwg.mxu0
  %3886 = vmatpush.bf16.msra.mxu0 %v3560
  %3887 = vmatpush.bf16.msra.mxu0 %v3559
  %3888 = vmatpush.bf16.msra.mxu0 %v3558
  %3889 = vmatpush.bf16.msra.mxu0 %v3557
  %3890 = vmatpush.bf16.msra.mxu0 %v3556
  %3891 = vmatpush.bf16.msra.mxu0 %v3555
  %3892 = vmatpush.bf16.msra.mxu0 %v3554
  %3893 = vmatpush.bf16.msra.mxu0 %v3553
  %3894 = vmatmul.bf16.gmra.mxu0 %v3134
  %v3895 = vpop.f32.mrf.mxu0
  %v3896 = vadd.f32 %v3847, %v3895
  %v3897 = vpop.f32.mrf.mxu0
  %v3898 = vadd.f32 %v3849, %v3897
  %3899 = vmatmul.bf16.gmra.mxu0 %v3142
  %v3900 = vpop.f32.mrf.mxu0
  %v3901 = vadd.f32 %v3852, %v3900
  %v3902 = vpop.f32.mrf.mxu0
  %v3903 = vadd.f32 %v3854, %v3902
  %3904 = vmatmul.bf16.gmra.mxu0 %v3150
  %v3905 = vpop.f32.mrf.mxu0
  %v3906 = vadd.f32 %v3857, %v3905
  %v3907 = vpop.f32.mrf.mxu0
  %v3908 = vadd.f32 %v3859, %v3907
  %3909 = vmatmul.bf16.gmra.mxu0 %v3158
  %v3910 = vpop.f32.mrf.mxu0
  %v3911 = vadd.f32 %v3862, %v3910
  %v3912 = vpop.f32.mrf.mxu0
  %v3913 = vadd.f32 %v3864, %v3912
  %3914 = vmatmul.bf16.gmra.mxu0 %v3166
  %v3915 = vpop.f32.mrf.mxu0
  %v3916 = vadd.f32 %v3867, %v3915
  %v3917 = vpop.f32.mrf.mxu0
  %v3918 = vadd.f32 %v3869, %v3917
  %3919 = vmatmul.bf16.gmra.mxu0 %v3174
  %v3920 = vpop.f32.mrf.mxu0
  %v3921 = vadd.f32 %v3872, %v3920
  %v3922 = vpop.f32.mrf.mxu0
  %v3923 = vadd.f32 %v3874, %v3922
  %3924 = vmatmul.bf16.gmra.mxu0 %v3182
  %v3925 = vpop.f32.mrf.mxu0
  %v3926 = vadd.f32 %v3877, %v3925
  %v3927 = vpop.f32.mrf.mxu0
  %v3928 = vadd.f32 %v3879, %v3927
  %3929 = vmatmul.bf16.gmra.mxu0 %v3190
  %v3930 = vpop.f32.mrf.mxu0
  %v3931 = vadd.f32 %v3882, %v3930
  %v3932 = vpop.f32.mrf.mxu0
  %v3933 = vadd.f32 %v3884, %v3932
  %3934 = vdwg.mxu0
  %3935 = vmatpush.bf16.msra.mxu0 %v3568
  %3936 = vmatpush.bf16.msra.mxu0 %v3567
  %3937 = vmatpush.bf16.msra.mxu0 %v3566
  %3938 = vmatpush.bf16.msra.mxu0 %v3565
  %3939 = vmatpush.bf16.msra.mxu0 %v3564
  %3940 = vmatpush.bf16.msra.mxu0 %v3563
  %3941 = vmatpush.bf16.msra.mxu0 %v3562
  %3942 = vmatpush.bf16.msra.mxu0 %v3561
  %3943 = vmatmul.bf16.gmra.mxu0 %v3135
  %v3944 = vpop.f32.mrf.mxu0
  %v3945 = vadd.f32 %v3896, %v3944
  %v3946 = vpop.f32.mrf.mxu0
  %v3947 = vadd.f32 %v3898, %v3946
  %3948 = vmatmul.bf16.gmra.mxu0 %v3143
  %v3949 = vpop.f32.mrf.mxu0
  %v3950 = vadd.f32 %v3901, %v3949
  %v3951 = vpop.f32.mrf.mxu0
  %v3952 = vadd.f32 %v3903, %v3951
  %3953 = vmatmul.bf16.gmra.mxu0 %v3151
  %v3954 = vpop.f32.mrf.mxu0
  %v3955 = vadd.f32 %v3906, %v3954
  %v3956 = vpop.f32.mrf.mxu0
  %v3957 = vadd.f32 %v3908, %v3956
  %3958 = vmatmul.bf16.gmra.mxu0 %v3159
  %v3959 = vpop.f32.mrf.mxu0
  %v3960 = vadd.f32 %v3911, %v3959
  %v3961 = vpop.f32.mrf.mxu0
  %v3962 = vadd.f32 %v3913, %v3961
  %3963 = vmatmul.bf16.gmra.mxu0 %v3167
  %v3964 = vpop.f32.mrf.mxu0
  %v3965 = vadd.f32 %v3916, %v3964
  %v3966 = vpop.f32.mrf.mxu0
  %v3967 = vadd.f32 %v3918, %v3966
  %3968 = vmatmul.bf16.gmra.mxu0 %v3175
  %v3969 = vpop.f32.mrf.mxu0
  %v3970 = vadd.f32 %v3921, %v3969
  %v3971 = vpop.f32.mrf.mxu0
  %v3972 = vadd.f32 %v3923, %v3971
  %3973 = vmatmul.bf16.gmra.mxu0 %v3183
  %v3974 = vpop.f32.mrf.mxu0
  %v3975 = vadd.f32 %v3926, %v3974
  %v3976 = vpop.f32.mrf.mxu0
  %v3977 = vadd.f32 %v3928, %v3976
  %3978 = vmatmul.bf16.gmra.mxu0 %v3191
  %v3979 = vpop.f32.mrf.mxu0
  %v3980 = vadd.f32 %v3931, %v3979
  %v3981 = vpop.f32.mrf.mxu0
  %v3982 = vadd.f32 %v3933, %v3981
  %3983 = vdwg.mxu0
  %3984 = vmatpush.bf16.msra.mxu0 %v3576
  %3985 = vmatpush.bf16.msra.mxu0 %v3575
  %3986 = vmatpush.bf16.msra.mxu0 %v3574
  %3987 = vmatpush.bf16.msra.mxu0 %v3573
  %3988 = vmatpush.bf16.msra.mxu0 %v3572
  %3989 = vmatpush.bf16.msra.mxu0 %v3571
  %3990 = vmatpush.bf16.msra.mxu0 %v3570
  %3991 = vmatpush.bf16.msra.mxu0 %v3569
  %3992 = vmatmul.bf16.gmra.mxu0 %v3136
  %v3993 = vpop.f32.mrf.mxu0
  %v3994 = vadd.f32 %v3945, %v3993
  %v3995 = vpop.f32.mrf.mxu0
  %v3996 = vadd.f32 %v3947, %v3995
  %3997 = vmatmul.bf16.gmra.mxu0 %v3144
  %v3998 = vpop.f32.mrf.mxu0
  %v3999 = vadd.f32 %v3950, %v3998
  %v4000 = vpop.f32.mrf.mxu0
  %v4001 = vadd.f32 %v3952, %v4000
  %4002 = vmatmul.bf16.gmra.mxu0 %v3152
  %v4003 = vpop.f32.mrf.mxu0
  %v4004 = vadd.f32 %v3955, %v4003
  %v4005 = vpop.f32.mrf.mxu0
  %v4006 = vadd.f32 %v3957, %v4005
  %4007 = vmatmul.bf16.gmra.mxu0 %v3160
  %v4008 = vpop.f32.mrf.mxu0
  %v4009 = vadd.f32 %v3960, %v4008
  %v4010 = vpop.f32.mrf.mxu0
  %v4011 = vadd.f32 %v3962, %v4010
  %4012 = vmatmul.bf16.gmra.mxu0 %v3168
  %v4013 = vpop.f32.mrf.mxu0
  %v4014 = vadd.f32 %v3965, %v4013
  %v4015 = vpop.f32.mrf.mxu0
  %v4016 = vadd.f32 %v3967, %v4015
  %4017 = vmatmul.bf16.gmra.mxu0 %v3176
  %v4018 = vpop.f32.mrf.mxu0
  %v4019 = vadd.f32 %v3970, %v4018
  %v4020 = vpop.f32.mrf.mxu0
  %v4021 = vadd.f32 %v3972, %v4020
  %4022 = vmatmul.bf16.gmra.mxu0 %v3184
  %v4023 = vpop.f32.mrf.mxu0
  %v4024 = vadd.f32 %v3975, %v4023
  %v4025 = vpop.f32.mrf.mxu0
  %v4026 = vadd.f32 %v3977, %v4025
  %4027 = vmatmul.bf16.gmra.mxu0 %v3192
  %v4028 = vpop.f32.mrf.mxu0
  %v4029 = vadd.f32 %v3980, %v4028
  %v4030 = vpop.f32.mrf.mxu0
  %v4031 = vadd.f32 %v3982, %v4030
  %4032 = vdwg.mxu0
  %v4033 = vrcp.pop %v3994
  %v4034 = vrcp.pop %v3996
  %v4035 = vrcp.pop %v3999
  %v4036 = vrcp.pop %v4001
  %v4037 = vrcp.pop %v4004
  %v4038 = vrcp.pop %v4006
  %v4039 = vrcp.pop %v4009
  %v4040 = vrcp.pop %v4011
  %v4041 = vrcp.pop %v4014
  %v4042 = vrcp.pop %v4016
  %v4043 = vrcp.pop %v4019
  %v4044 = vrcp.pop %v4021
  %v4045 = vrcp.pop %v4024
  %v4046 = vrcp.pop %v4026
  %v4047 = vrcp.pop %v4029
  %v4048 = vrcp.pop %v4031
  %4065 = vrot.lane.b32.xlu0 %v4033, 64
  %v4066 = vpop.permute.xlu0 %4065
  %4067 = vrot.lane.b32.xlu0 %v4034, 64
  %v4068 = vpop.permute.xlu0 %4067
  %4069 = vrot.lane.b32.xlu0 %v4035, 64
  %v4070 = vpop.permute.xlu0 %4069
  %4071 = vrot.lane.b32.xlu0 %v4036, 64
  %v4072 = vpop.permute.xlu0 %4071
  %4073 = vrot.lane.b32.xlu0 %v4037, 64
  %v4074 = vpop.permute.xlu0 %4073
  %4075 = vrot.lane.b32.xlu0 %v4038, 64
  %v4076 = vpop.permute.xlu0 %4075
  %4077 = vrot.lane.b32.xlu0 %v4039, 64
  %v4078 = vpop.permute.xlu0 %4077
  %4079 = vrot.lane.b32.xlu0 %v4040, 64
  %v4080 = vpop.permute.xlu0 %4079
  %4081 = vrot.lane.b32.xlu0 %v4041, 64
  %v4082 = vpop.permute.xlu0 %4081
  %4083 = vrot.lane.b32.xlu0 %v4042, 64
  %v4084 = vpop.permute.xlu0 %4083
  %4085 = vrot.lane.b32.xlu0 %v4043, 64
  %v4086 = vpop.permute.xlu0 %4085
  %4087 = vrot.lane.b32.xlu0 %v4044, 64
  %v4088 = vpop.permute.xlu0 %4087
  %4089 = vrot.lane.b32.xlu0 %v4045, 64
  %v4090 = vpop.permute.xlu0 %4089
  %4091 = vrot.lane.b32.xlu0 %v4046, 64
  %v4092 = vpop.permute.xlu0 %4091
  %4093 = vrot.lane.b32.xlu0 %v4047, 64
  %v4094 = vpop.permute.xlu0 %4093
  %4095 = vrot.lane.b32.xlu0 %v4048, 64
  %v4096 = vpop.permute.xlu0 %4095
  %vm4097 = vcmask 64512
  %v4098 = vsel %vm4097, %v4066, 0
  %v4100 = vsel %vm4097, %v4068, 0
  %v4102 = vsel %vm4097, %v4070, 0
  %v4104 = vsel %vm4097, %v4072, 0
  %v4106 = vsel %vm4097, %v4074, 0
  %v4108 = vsel %vm4097, %v4076, 0
  %v4110 = vsel %vm4097, %v4078, 0
  %v4112 = vsel %vm4097, %v4080, 0
  %v4114 = vsel %vm4097, %v4082, 0
  %v4116 = vsel %vm4097, %v4084, 0
  %v4118 = vsel %vm4097, %v4086, 0
  %v4120 = vsel %vm4097, %v4088, 0
  %v4122 = vsel %vm4097, %v4090, 0
  %v4124 = vsel %vm4097, %v4092, 0
  %v4126 = vsel %vm4097, %v4094, 0
  %v4128 = vsel %vm4097, %v4096, 0
  %4130 = vmatpush.msra.mxu0 0.0
  %4131 = vmatpush.msra.mxu0 0.0
  %4132 = vmatpush.msra.mxu0 0.0
  %4133 = vmatpush.msra.mxu0 0.0
  %4134 = vmatpush.msra.mxu0 0.0
  %4135 = vmatpush.msra.mxu0 0.0
  %4136 = vmatpush.msra.mxu0 0.0
  %4137 = vmatpush.msra.mxu0 0.0
  %4138 = vmatpush.msra.mxu0 0.0
  %4139 = vmatpush.msra.mxu0 0.0
  %4140 = vmatpush.msra.mxu0 0.0
  %4141 = vmatpush.msra.mxu0 0.0
  %4142 = vmatpush.msra.mxu0 0.0
  %4143 = vmatpush.msra.mxu0 0.0
  %4144 = vmatpush.msra.mxu0 0.0
  %4145 = vmatpush.msra.mxu0 %v124
  %4146 = vmatmul.f32.gmra.mxu0 %v4098
  %v4147 = vpop.f32.mrf.mxu0
  %v4148 = vadd.f32 0.0, %v4147
  %4149 = vmatmul.f32.gmra.mxu0 %v4100
  %v4150 = vpop.f32.mrf.mxu0
  %v4151 = vadd.f32 0.0, %v4150
  %4152 = vmatmul.f32.gmra.mxu0 %v4102
  %v4153 = vpop.f32.mrf.mxu0
  %v4154 = vadd.f32 0.0, %v4153
  %4155 = vmatmul.f32.gmra.mxu0 %v4104
  %v4156 = vpop.f32.mrf.mxu0
  %v4157 = vadd.f32 0.0, %v4156
  %4158 = vmatmul.f32.gmra.mxu0 %v4106
  %v4159 = vpop.f32.mrf.mxu0
  %v4160 = vadd.f32 0.0, %v4159
  %4161 = vmatmul.f32.gmra.mxu0 %v4108
  %v4162 = vpop.f32.mrf.mxu0
  %v4163 = vadd.f32 0.0, %v4162
  %4164 = vmatmul.f32.gmra.mxu0 %v4110
  %v4165 = vpop.f32.mrf.mxu0
  %v4166 = vadd.f32 0.0, %v4165
  %4167 = vmatmul.f32.gmra.mxu0 %v4112
  %v4168 = vpop.f32.mrf.mxu0
  %v4169 = vadd.f32 0.0, %v4168
  %4170 = vmatmul.f32.gmra.mxu0 %v4114
  %v4171 = vpop.f32.mrf.mxu0
  %v4172 = vadd.f32 0.0, %v4171
  %4173 = vmatmul.f32.gmra.mxu0 %v4116
  %v4174 = vpop.f32.mrf.mxu0
  %v4175 = vadd.f32 0.0, %v4174
  %4176 = vmatmul.f32.gmra.mxu0 %v4118
  %v4177 = vpop.f32.mrf.mxu0
  %v4178 = vadd.f32 0.0, %v4177
  %4179 = vmatmul.f32.gmra.mxu0 %v4120
  %v4180 = vpop.f32.mrf.mxu0
  %v4181 = vadd.f32 0.0, %v4180
  %4182 = vmatmul.f32.gmra.mxu0 %v4122
  %v4183 = vpop.f32.mrf.mxu0
  %v4184 = vadd.f32 0.0, %v4183
  %4185 = vmatmul.f32.gmra.mxu0 %v4124
  %v4186 = vpop.f32.mrf.mxu0
  %v4187 = vadd.f32 0.0, %v4186
  %4188 = vmatmul.f32.gmra.mxu0 %v4126
  %v4189 = vpop.f32.mrf.mxu0
  %v4190 = vadd.f32 0.0, %v4189
  %4191 = vmatmul.f32.gmra.mxu0 %v4128
  %v4192 = vpop.f32.mrf.mxu0
  %v4193 = vadd.f32 0.0, %v4192
  %4194 = vdwg.mxu0
  %v4195 = vmul.f32 %v3994, %v4148
  %v4196 = vmul.f32 %v3996, %v4151
  %v4197 = vmul.f32 %v3999, %v4154
  %v4198 = vmul.f32 %v4001, %v4157
  %v4199 = vmul.f32 %v4004, %v4160
  %v4200 = vmul.f32 %v4006, %v4163
  %v4201 = vmul.f32 %v4009, %v4166
  %v4202 = vmul.f32 %v4011, %v4169
  %v4203 = vmul.f32 %v4014, %v4172
  %v4204 = vmul.f32 %v4016, %v4175
  %v4205 = vmul.f32 %v4019, %v4178
  %v4206 = vmul.f32 %v4021, %v4181
  %v4207 = vmul.f32 %v4024, %v4184
  %v4208 = vmul.f32 %v4026, %v4187
  %v4209 = vmul.f32 %v4029, %v4190
  %v4210 = vmul.f32 %v4031, %v4193
  %vm4211 = vcmp.gt.f32.partialorder %v4195, 0.0
  %vm4212 = vcmp.gt.f32.partialorder %v4196, 0.0
  %vm4213 = vcmp.gt.f32.partialorder %v4197, 0.0
  %vm4214 = vcmp.gt.f32.partialorder %v4198, 0.0
  %vm4215 = vcmp.gt.f32.partialorder %v4199, 0.0
  %vm4216 = vcmp.gt.f32.partialorder %v4200, 0.0
  %vm4217 = vcmp.gt.f32.partialorder %v4201, 0.0
  %vm4218 = vcmp.gt.f32.partialorder %v4202, 0.0
  %vm4219 = vcmp.gt.f32.partialorder %v4203, 0.0
  %vm4220 = vcmp.gt.f32.partialorder %v4204, 0.0
  %vm4221 = vcmp.gt.f32.partialorder %v4205, 0.0
  %vm4222 = vcmp.gt.f32.partialorder %v4206, 0.0
  %vm4223 = vcmp.gt.f32.partialorder %v4207, 0.0
  %vm4224 = vcmp.gt.f32.partialorder %v4208, 0.0
  %vm4225 = vcmp.gt.f32.partialorder %v4209, 0.0
  %vm4226 = vcmp.gt.f32.partialorder %v4210, 0.0
  %v4227 = vmin.f32 %v4195, 0.0
  %v4228 = vmin.f32 %v4196, 0.0
  %v4229 = vmin.f32 %v4197, 0.0
  %v4230 = vmin.f32 %v4198, 0.0
  %v4231 = vmin.f32 %v4199, 0.0
  %v4232 = vmin.f32 %v4200, 0.0
  %v4233 = vmin.f32 %v4201, 0.0
  %v4234 = vmin.f32 %v4202, 0.0
  %v4235 = vmin.f32 %v4203, 0.0
  %v4236 = vmin.f32 %v4204, 0.0
  %v4237 = vmin.f32 %v4205, 0.0
  %v4238 = vmin.f32 %v4206, 0.0
  %v4239 = vmin.f32 %v4207, 0.0
  %v4240 = vmin.f32 %v4208, 0.0
  %v4241 = vmin.f32 %v4209, 0.0
  %v4242 = vmin.f32 %v4210, 0.0
  %v4243 = vmul.f32 %v4227, 1.442695
  %v4244 = vpow.pop %v4243
  %v4245 = vmul.f32 %v4228, 1.442695
  %v4246 = vpow.pop %v4245
  %v4247 = vmul.f32 %v4229, 1.442695
  %v4248 = vpow.pop %v4247
  %v4249 = vmul.f32 %v4230, 1.442695
  %v4250 = vpow.pop %v4249
  %v4251 = vmul.f32 %v4231, 1.442695
  %v4252 = vpow.pop %v4251
  %v4253 = vmul.f32 %v4232, 1.442695
  %v4254 = vpow.pop %v4253
  %v4255 = vmul.f32 %v4233, 1.442695
  %v4256 = vpow.pop %v4255
  %v4257 = vmul.f32 %v4234, 1.442695
  %v4258 = vpow.pop %v4257
  %v4259 = vmul.f32 %v4235, 1.442695
  %v4260 = vpow.pop %v4259
  %v4261 = vmul.f32 %v4236, 1.442695
  %v4262 = vpow.pop %v4261
  %v4263 = vmul.f32 %v4237, 1.442695
  %v4264 = vpow.pop %v4263
  %v4265 = vmul.f32 %v4238, 1.442695
  %v4266 = vpow.pop %v4265
  %v4267 = vmul.f32 %v4239, 1.442695
  %v4268 = vpow.pop %v4267
  %v4269 = vmul.f32 %v4240, 1.442695
  %v4270 = vpow.pop %v4269
  %v4271 = vmul.f32 %v4241, 1.442695
  %v4272 = vpow.pop %v4271
  %v4273 = vmul.f32 %v4242, 1.442695
  %v4274 = vpow.pop %v4273
  %v4275 = vsub.f32 %v4244, 1.0
  %v4276 = vsub.f32 %v4246, 1.0
  %v4277 = vsub.f32 %v4248, 1.0
  %v4278 = vsub.f32 %v4250, 1.0
  %v4279 = vsub.f32 %v4252, 1.0
  %v4280 = vsub.f32 %v4254, 1.0
  %v4281 = vsub.f32 %v4256, 1.0
  %v4282 = vsub.f32 %v4258, 1.0
  %v4283 = vsub.f32 %v4260, 1.0
  %v4284 = vsub.f32 %v4262, 1.0
  %v4285 = vsub.f32 %v4264, 1.0
  %v4286 = vsub.f32 %v4266, 1.0
  %v4287 = vsub.f32 %v4268, 1.0
  %v4288 = vsub.f32 %v4270, 1.0
  %v4289 = vsub.f32 %v4272, 1.0
  %v4290 = vsub.f32 %v4274, 1.0
  %v4291 = vsel %vm4211, %v4195, %v4275
  %v4292 = vsel %vm4212, %v4196, %v4276
  %v4293 = vsel %vm4213, %v4197, %v4277
  %v4294 = vsel %vm4214, %v4198, %v4278
  %v4295 = vsel %vm4215, %v4199, %v4279
  %v4296 = vsel %vm4216, %v4200, %v4280
  %v4297 = vsel %vm4217, %v4201, %v4281
  %v4298 = vsel %vm4218, %v4202, %v4282
  %v4299 = vsel %vm4219, %v4203, %v4283
  %v4300 = vsel %vm4220, %v4204, %v4284
  %v4301 = vsel %vm4221, %v4205, %v4285
  %v4302 = vsel %vm4222, %v4206, %v4286
  %v4303 = vsel %vm4223, %v4207, %v4287
  %v4304 = vsel %vm4224, %v4208, %v4288
  %v4305 = vsel %vm4225, %v4209, %v4289
  %v4306 = vsel %vm4226, %v4210, %v4290
  %v4307 = vpack.c.bf16 %v4292, %v4291
  %v4308 = vpack.c.bf16 %v4294, %v4293
  %v4309 = vpack.c.bf16 %v4296, %v4295
  %v4310 = vpack.c.bf16 %v4298, %v4297
  %v4311 = vpack.c.bf16 %v4300, %v4299
  %v4312 = vpack.c.bf16 %v4302, %v4301
  %v4313 = vpack.c.bf16 %v4304, %v4303
  %v4314 = vpack.c.bf16 %v4306, %v4305
  %v4315 = vld [vmem:[%s6] sm:$0xf]
  %v4316 = vld [vmem:[%s6 + $0x4] sm:$0xf]
  %v4317 = vld [vmem:[%s6 + $0x8] sm:$0xf]
  %v4318 = vld [vmem:[%s6 + $0xc] sm:$0xf]
  %v4319 = vld [vmem:[%s6 + $0x10] sm:$0xf]
  %v4320 = vld [vmem:[%s6 + $0x14] sm:$0xf]
  %v4321 = vld [vmem:[%s6 + $0x18] sm:$0xf]
  %v4322 = vld [vmem:[%s6 + $0x1c] sm:$0xf]
  %v4323 = vld [vmem:[%s7] sm:$0x1]
  %v4324 = vld [vmem:[%s8] sm:$0x1]
  %v4333 = vunpack.c.l.b16 %v4315
  %v4334 = vunpack.c.l.b16 %v4316
  %v4335 = vunpack.c.l.b16 %v4317
  %v4336 = vunpack.c.l.b16 %v4318
  %v4337 = vunpack.c.l.b16 %v4319
  %v4338 = vunpack.c.l.b16 %v4320
  %v4339 = vunpack.c.l.b16 %v4321
  %v4340 = vunpack.c.l.b16 %v4322
  %v4341 = vpack.c.b16 %v4334, %v4333
  %v4342 = vpack.c.b16 %v4336, %v4335
  %v4343 = vpack.c.b16 %v4338, %v4337
  %v4344 = vpack.c.b16 %v4340, %v4339
  %v4350 = vsel %vm307, %v4307, 0
  %v4353 = vsel %vm307, %v4308, 0
  %v4356 = vsel %vm307, %v4309, 0
  %v4359 = vsel %vm307, %v4310, 0
  %v4362 = vsel %vm307, %v4311, 0
  %v4365 = vsel %vm307, %v4312, 0
  %v4368 = vsel %vm307, %v4313, 0
  %v4371 = vsel %vm307, %v4314, 0
  %4373 = vmatpush.bf16.msra.mxu0 0
  %4374 = vmatpush.bf16.msra.mxu0 0
  %4375 = vmatpush.bf16.msra.mxu0 0
  %4376 = vmatpush.bf16.msra.mxu0 0
  %4377 = vmatpush.bf16.msra.mxu0 %v4344
  %4378 = vmatpush.bf16.msra.mxu0 %v4343
  %4379 = vmatpush.bf16.msra.mxu0 %v4342
  %4380 = vmatpush.bf16.msra.mxu0 %v4341
  %4381 = vmatmul.bf16.gmra.mxu0 %v4350
  %v4382 = vpop.f32.mrf.mxu0
  %v4383 = vadd.f32 0.0, %v4382
  %v4384 = vpop.f32.mrf.mxu0
  %v4385 = vadd.f32 0.0, %v4384
  %4386 = vmatmul.bf16.gmra.mxu0 %v4353
  %v4387 = vpop.f32.mrf.mxu0
  %v4388 = vadd.f32 0.0, %v4387
  %v4389 = vpop.f32.mrf.mxu0
  %v4390 = vadd.f32 0.0, %v4389
  %4391 = vmatmul.bf16.gmra.mxu0 %v4356
  %v4392 = vpop.f32.mrf.mxu0
  %v4393 = vadd.f32 0.0, %v4392
  %v4394 = vpop.f32.mrf.mxu0
  %v4395 = vadd.f32 0.0, %v4394
  %4396 = vmatmul.bf16.gmra.mxu0 %v4359
  %v4397 = vpop.f32.mrf.mxu0
  %v4398 = vadd.f32 0.0, %v4397
  %v4399 = vpop.f32.mrf.mxu0
  %v4400 = vadd.f32 0.0, %v4399
  %4401 = vmatmul.bf16.gmra.mxu0 %v4362
  %v4402 = vpop.f32.mrf.mxu0
  %v4403 = vadd.f32 0.0, %v4402
  %v4404 = vpop.f32.mrf.mxu0
  %v4405 = vadd.f32 0.0, %v4404
  %4406 = vmatmul.bf16.gmra.mxu0 %v4365
  %v4407 = vpop.f32.mrf.mxu0
  %v4408 = vadd.f32 0.0, %v4407
  %v4409 = vpop.f32.mrf.mxu0
  %v4410 = vadd.f32 0.0, %v4409
  %4411 = vmatmul.bf16.gmra.mxu0 %v4368
  %v4412 = vpop.f32.mrf.mxu0
  %v4413 = vadd.f32 0.0, %v4412
  %v4414 = vpop.f32.mrf.mxu0
  %v4415 = vadd.f32 0.0, %v4414
  %4416 = vmatmul.bf16.gmra.mxu0 %v4371
  %v4417 = vpop.f32.mrf.mxu0
  %v4418 = vadd.f32 0.0, %v4417
  %v4419 = vpop.f32.mrf.mxu0
  %v4420 = vadd.f32 0.0, %v4419
  %4421 = vdwg.mxu0
  %v4423 = vperm.slane %v4324, 0
  %v4425 = vmul.f32 %v4383, %v4423
  %v4426 = vmul.f32 %v4385, %v4423
  %v4427 = vmul.f32 %v4388, %v4423
  %v4428 = vmul.f32 %v4390, %v4423
  %v4429 = vmul.f32 %v4393, %v4423
  %v4430 = vmul.f32 %v4395, %v4423
  %v4431 = vmul.f32 %v4398, %v4423
  %v4432 = vmul.f32 %v4400, %v4423
  %v4433 = vmul.f32 %v4403, %v4423
  %v4434 = vmul.f32 %v4405, %v4423
  %v4435 = vmul.f32 %v4408, %v4423
  %v4436 = vmul.f32 %v4410, %v4423
  %v4437 = vmul.f32 %v4413, %v4423
  %v4438 = vmul.f32 %v4415, %v4423
  %v4439 = vmul.f32 %v4418, %v4423
  %v4440 = vmul.f32 %v4420, %v4423
  %v4441 = vsel %vm4097, %v4425, 0.0
  %4442 = vadd.xlane.f32.xlu0 %v4441
  %v4443 = vpop.xlane.xlu0 %4442
  %v4444 = vsel %vm4097, %v4426, 0.0
  %4445 = vadd.xlane.f32.xlu0 %v4444
  %v4446 = vpop.xlane.xlu0 %4445
  %v4447 = vsel %vm4097, %v4427, 0.0
  %4448 = vadd.xlane.f32.xlu0 %v4447
  %v4449 = vpop.xlane.xlu0 %4448
  %v4450 = vsel %vm4097, %v4428, 0.0
  %4451 = vadd.xlane.f32.xlu0 %v4450
  %v4452 = vpop.xlane.xlu0 %4451
  %v4453 = vsel %vm4097, %v4429, 0.0
  %4454 = vadd.xlane.f32.xlu0 %v4453
  %v4455 = vpop.xlane.xlu0 %4454
  %v4456 = vsel %vm4097, %v4430, 0.0
  %4457 = vadd.xlane.f32.xlu0 %v4456
  %v4458 = vpop.xlane.xlu0 %4457
  %v4459 = vsel %vm4097, %v4431, 0.0
  %4460 = vadd.xlane.f32.xlu0 %v4459
  %v4461 = vpop.xlane.xlu0 %4460
  %v4462 = vsel %vm4097, %v4432, 0.0
  %4463 = vadd.xlane.f32.xlu0 %v4462
  %v4464 = vpop.xlane.xlu0 %4463
  %v4465 = vsel %vm4097, %v4433, 0.0
  %4466 = vadd.xlane.f32.xlu0 %v4465
  %v4467 = vpop.xlane.xlu0 %4466
  %v4468 = vsel %vm4097, %v4434, 0.0
  %4469 = vadd.xlane.f32.xlu0 %v4468
  %v4470 = vpop.xlane.xlu0 %4469
  %v4471 = vsel %vm4097, %v4435, 0.0
  %4472 = vadd.xlane.f32.xlu0 %v4471
  %v4473 = vpop.xlane.xlu0 %4472
  %v4474 = vsel %vm4097, %v4436, 0.0
  %4475 = vadd.xlane.f32.xlu0 %v4474
  %v4476 = vpop.xlane.xlu0 %4475
  %v4477 = vsel %vm4097, %v4437, 0.0
  %4478 = vadd.xlane.f32.xlu0 %v4477
  %v4479 = vpop.xlane.xlu0 %4478
  %v4480 = vsel %vm4097, %v4438, 0.0
  %4481 = vadd.xlane.f32.xlu0 %v4480
  %v4482 = vpop.xlane.xlu0 %4481
  %v4483 = vsel %vm4097, %v4439, 0.0
  %4484 = vadd.xlane.f32.xlu0 %v4483
  %v4485 = vpop.xlane.xlu0 %4484
  %v4486 = vsel %vm4097, %v4440, 0.0
  %4487 = vadd.xlane.f32.xlu0 %v4486
  %v4488 = vpop.xlane.xlu0 %4487
  %v4490 = vperm.slane %v4323, 0
  %v4492 = vmul.f32 %v4383, %v4490
  %v4493 = vmul.f32 %v4385, %v4490
  %v4494 = vmul.f32 %v4388, %v4490
  %v4495 = vmul.f32 %v4390, %v4490
  %v4496 = vmul.f32 %v4393, %v4490
  %v4497 = vmul.f32 %v4395, %v4490
  %v4498 = vmul.f32 %v4398, %v4490
  %v4499 = vmul.f32 %v4400, %v4490
  %v4500 = vmul.f32 %v4403, %v4490
  %v4501 = vmul.f32 %v4405, %v4490
  %v4502 = vmul.f32 %v4408, %v4490
  %v4503 = vmul.f32 %v4410, %v4490
  %v4504 = vmul.f32 %v4413, %v4490
  %v4505 = vmul.f32 %v4415, %v4490
  %v4506 = vmul.f32 %v4418, %v4490
  %v4507 = vmul.f32 %v4420, %v4490
  %v4508 = vsel %vm4097, %v4492, 0.0
  %4509 = vadd.xlane.f32.xlu0 %v4508
  %v4510 = vpop.xlane.xlu0 %4509
  %v4511 = vsel %vm4097, %v4493, 0.0
  %4512 = vadd.xlane.f32.xlu0 %v4511
  %v4513 = vpop.xlane.xlu0 %4512
  %v4514 = vsel %vm4097, %v4494, 0.0
  %4515 = vadd.xlane.f32.xlu0 %v4514
  %v4516 = vpop.xlane.xlu0 %4515
  %v4517 = vsel %vm4097, %v4495, 0.0
  %4518 = vadd.xlane.f32.xlu0 %v4517
  %v4519 = vpop.xlane.xlu0 %4518
  %v4520 = vsel %vm4097, %v4496, 0.0
  %4521 = vadd.xlane.f32.xlu0 %v4520
  %v4522 = vpop.xlane.xlu0 %4521
  %v4523 = vsel %vm4097, %v4497, 0.0
  %4524 = vadd.xlane.f32.xlu0 %v4523
  %v4525 = vpop.xlane.xlu0 %4524
  %v4526 = vsel %vm4097, %v4498, 0.0
  %4527 = vadd.xlane.f32.xlu0 %v4526
  %v4528 = vpop.xlane.xlu0 %4527
  %v4529 = vsel %vm4097, %v4499, 0.0
  %4530 = vadd.xlane.f32.xlu0 %v4529
  %v4531 = vpop.xlane.xlu0 %4530
  %v4532 = vsel %vm4097, %v4500, 0.0
  %4533 = vadd.xlane.f32.xlu0 %v4532
  %v4534 = vpop.xlane.xlu0 %4533
  %v4535 = vsel %vm4097, %v4501, 0.0
  %4536 = vadd.xlane.f32.xlu0 %v4535
  %v4537 = vpop.xlane.xlu0 %4536
  %v4538 = vsel %vm4097, %v4502, 0.0
  %4539 = vadd.xlane.f32.xlu0 %v4538
  %v4540 = vpop.xlane.xlu0 %4539
  %v4541 = vsel %vm4097, %v4503, 0.0
  %4542 = vadd.xlane.f32.xlu0 %v4541
  %v4543 = vpop.xlane.xlu0 %4542
  %v4544 = vsel %vm4097, %v4504, 0.0
  %4545 = vadd.xlane.f32.xlu0 %v4544
  %v4546 = vpop.xlane.xlu0 %4545
  %v4547 = vsel %vm4097, %v4505, 0.0
  %4548 = vadd.xlane.f32.xlu0 %v4547
  %v4549 = vpop.xlane.xlu0 %4548
  %v4550 = vsel %vm4097, %v4506, 0.0
  %4551 = vadd.xlane.f32.xlu0 %v4550
  %v4552 = vpop.xlane.xlu0 %4551
  %v4553 = vsel %vm4097, %v4507, 0.0
  %4554 = vadd.xlane.f32.xlu0 %v4553
  %v4555 = vpop.xlane.xlu0 %4554
  %4556 = vxpose.xlu0.b32.start [1/16] %v4510, 128
  %4557 = vxpose.xlu0.b32.cont [2/16] %v4513, 128
  %4558 = vxpose.xlu0.b32.cont [3/16] %v4516, 128
  %4559 = vxpose.xlu0.b32.cont [4/16] %v4519, 128
  %4560 = vxpose.xlu0.b32.cont [5/16] %v4522, 128
  %4561 = vxpose.xlu0.b32.cont [6/16] %v4525, 128
  %4562 = vxpose.xlu0.b32.cont [7/16] %v4528, 128
  %4563 = vxpose.xlu0.b32.cont [8/16] %v4531, 128
  %4564 = vxpose.xlu0.b32.cont [9/16] %v4534, 128
  %4565 = vxpose.xlu0.b32.cont [10/16] %v4537, 128
  %4566 = vxpose.xlu0.b32.cont [11/16] %v4540, 128
  %4567 = vxpose.xlu0.b32.cont [12/16] %v4543, 128
  %4568 = vxpose.xlu0.b32.cont [13/16] %v4546, 128
  %4569 = vxpose.xlu0.b32.cont [14/16] %v4549, 128
  %4570 = vxpose.xlu0.b32.cont [15/16] %v4552, 128
  %4571 = vxpose.xlu0.b32.end [16/16] %v4555, 128
  %v4572 = vpop.trf.xlu0
  %v4573 = vpop.trf.xlu0
  %v4574 = vpop.trf.xlu0
  %v4575 = vpop.trf.xlu0
  %v4576 = vpop.trf.xlu0
  %v4577 = vpop.trf.xlu0
  %v4578 = vpop.trf.xlu0
  %v4579 = vpop.trf.xlu0
  %v4580 = vpop.trf.xlu0
  %v4581 = vpop.trf.xlu0
  %v4582 = vpop.trf.xlu0
  %v4583 = vpop.trf.xlu0
  %v4584 = vpop.trf.xlu0
  %v4585 = vpop.trf.xlu0
  %v4586 = vpop.trf.xlu0
  %v4587 = vpop.trf.xlu0
  %v4588 = vperm.slane %v4572, 0
  %v4589 = vadd.f32 %v4443, %v4588
  %v4590 = vadd.f32 %v4446, %v4588
  %v4591 = vadd.f32 %v4449, %v4588
  %v4592 = vadd.f32 %v4452, %v4588
  %v4593 = vadd.f32 %v4455, %v4588
  %v4594 = vadd.f32 %v4458, %v4588
  %v4595 = vadd.f32 %v4461, %v4588
  %v4596 = vadd.f32 %v4464, %v4588
  %v4597 = vadd.f32 %v4467, %v4588
  %v4598 = vadd.f32 %v4470, %v4588
  %v4599 = vadd.f32 %v4473, %v4588
  %v4600 = vadd.f32 %v4476, %v4588
  %v4601 = vadd.f32 %v4479, %v4588
  %v4602 = vadd.f32 %v4482, %v4588
  %v4603 = vadd.f32 %v4485, %v4588
  %v4604 = vadd.f32 %v4488, %v4588
  %v4605 = vmul.f32 %v4589, 0.2
  %v4606 = vmul.f32 %v4590, 0.2
  %v4607 = vmul.f32 %v4591, 0.2
  %v4608 = vmul.f32 %v4592, 0.2
  %v4609 = vmul.f32 %v4593, 0.2
  %v4610 = vmul.f32 %v4594, 0.2
  %v4611 = vmul.f32 %v4595, 0.2
  %v4612 = vmul.f32 %v4596, 0.2
  %v4613 = vmul.f32 %v4597, 0.2
  %v4614 = vmul.f32 %v4598, 0.2
  %v4615 = vmul.f32 %v4599, 0.2
  %v4616 = vmul.f32 %v4600, 0.2
  %v4617 = vmul.f32 %v4601, 0.2
  %v4618 = vmul.f32 %v4602, 0.2
  %v4619 = vmul.f32 %v4603, 0.2
  %v4620 = vmul.f32 %v4604, 0.2
  %v4621 = vmax.f32 %v4589, %v4605
  %v4622 = vmax.f32 %v4590, %v4606
  %v4623 = vmax.f32 %v4591, %v4607
  %v4624 = vmax.f32 %v4592, %v4608
  %v4625 = vmax.f32 %v4593, %v4609
  %v4626 = vmax.f32 %v4594, %v4610
  %v4627 = vmax.f32 %v4595, %v4611
  %v4628 = vmax.f32 %v4596, %v4612
  %v4629 = vmax.f32 %v4597, %v4613
  %v4630 = vmax.f32 %v4598, %v4614
  %v4631 = vmax.f32 %v4599, %v4615
  %v4632 = vmax.f32 %v4600, %v4616
  %v4633 = vmax.f32 %v4601, %v4617
  %v4634 = vmax.f32 %v4602, %v4618
  %v4635 = vmax.f32 %v4603, %v4619
  %v4636 = vmax.f32 %v4604, %v4620
  %v4637 = vadd.f32 %v4621, %v86
  %v4638 = vadd.f32 %v4622, %v87
  %v4639 = vadd.f32 %v4623, %v88
  %v4640 = vadd.f32 %v4624, %v89
  %v4641 = vadd.f32 %v4625, %v90
  %v4642 = vadd.f32 %v4626, %v91
  %v4643 = vadd.f32 %v4627, %v92
  %v4644 = vadd.f32 %v4628, %v93
  %v4645 = vadd.f32 %v4629, %v94
  %v4646 = vadd.f32 %v4630, %v95
  %v4647 = vadd.f32 %v4631, %v96
  %v4648 = vadd.f32 %v4632, %v97
  %v4649 = vadd.f32 %v4633, %v98
  %v4650 = vadd.f32 %v4634, %v99
  %v4651 = vadd.f32 %v4635, %v100
  %v4652 = vadd.f32 %v4636, %v101
  %4653 = vmax.xlane.f32.xlu0 %v4637
  %v4654 = vpop.xlane.xlu0 %4653
  %4655 = vmax.xlane.f32.xlu0 %v4638
  %v4656 = vpop.xlane.xlu0 %4655
  %4657 = vmax.xlane.f32.xlu0 %v4639
  %v4658 = vpop.xlane.xlu0 %4657
  %4659 = vmax.xlane.f32.xlu0 %v4640
  %v4660 = vpop.xlane.xlu0 %4659
  %4661 = vmax.xlane.f32.xlu0 %v4641
  %v4662 = vpop.xlane.xlu0 %4661
  %4663 = vmax.xlane.f32.xlu0 %v4642
  %v4664 = vpop.xlane.xlu0 %4663
  %4665 = vmax.xlane.f32.xlu0 %v4643
  %v4666 = vpop.xlane.xlu0 %4665
  %4667 = vmax.xlane.f32.xlu0 %v4644
  %v4668 = vpop.xlane.xlu0 %4667
  %4669 = vmax.xlane.f32.xlu0 %v4645
  %v4670 = vpop.xlane.xlu0 %4669
  %4671 = vmax.xlane.f32.xlu0 %v4646
  %v4672 = vpop.xlane.xlu0 %4671
  %4673 = vmax.xlane.f32.xlu0 %v4647
  %v4674 = vpop.xlane.xlu0 %4673
  %4675 = vmax.xlane.f32.xlu0 %v4648
  %v4676 = vpop.xlane.xlu0 %4675
  %4677 = vmax.xlane.f32.xlu0 %v4649
  %v4678 = vpop.xlane.xlu0 %4677
  %4679 = vmax.xlane.f32.xlu0 %v4650
  %v4680 = vpop.xlane.xlu0 %4679
  %4681 = vmax.xlane.f32.xlu0 %v4651
  %v4682 = vpop.xlane.xlu0 %4681
  %4683 = vmax.xlane.f32.xlu0 %v4652
  %v4684 = vpop.xlane.xlu0 %4683
  %v4685 = vsub.f32 %v4637, %v4654
  %v4686 = vsub.f32 %v4638, %v4656
  %v4687 = vsub.f32 %v4639, %v4658
  %v4688 = vsub.f32 %v4640, %v4660
  %v4689 = vsub.f32 %v4641, %v4662
  %v4690 = vsub.f32 %v4642, %v4664
  %v4691 = vsub.f32 %v4643, %v4666
  %v4692 = vsub.f32 %v4644, %v4668
  %v4693 = vsub.f32 %v4645, %v4670
  %v4694 = vsub.f32 %v4646, %v4672
  %v4695 = vsub.f32 %v4647, %v4674
  %v4696 = vsub.f32 %v4648, %v4676
  %v4697 = vsub.f32 %v4649, %v4678
  %v4698 = vsub.f32 %v4650, %v4680
  %v4699 = vsub.f32 %v4651, %v4682
  %v4700 = vsub.f32 %v4652, %v4684
  %v4701 = vmul.f32 %v4685, 1.442695
  %v4702 = vpow.pop %v4701
  %v4703 = vmul.f32 %v4686, 1.442695
  %v4704 = vpow.pop %v4703
  %v4705 = vmul.f32 %v4687, 1.442695
  %v4706 = vpow.pop %v4705
  %v4707 = vmul.f32 %v4688, 1.442695
  %v4708 = vpow.pop %v4707
  %v4709 = vmul.f32 %v4689, 1.442695
  %v4710 = vpow.pop %v4709
  %v4711 = vmul.f32 %v4690, 1.442695
  %v4712 = vpow.pop %v4711
  %v4713 = vmul.f32 %v4691, 1.442695
  %v4714 = vpow.pop %v4713
  %v4715 = vmul.f32 %v4692, 1.442695
  %v4716 = vpow.pop %v4715
  %v4717 = vmul.f32 %v4693, 1.442695
  %v4718 = vpow.pop %v4717
  %v4719 = vmul.f32 %v4694, 1.442695
  %v4720 = vpow.pop %v4719
  %v4721 = vmul.f32 %v4695, 1.442695
  %v4722 = vpow.pop %v4721
  %v4723 = vmul.f32 %v4696, 1.442695
  %v4724 = vpow.pop %v4723
  %v4725 = vmul.f32 %v4697, 1.442695
  %v4726 = vpow.pop %v4725
  %v4727 = vmul.f32 %v4698, 1.442695
  %v4728 = vpow.pop %v4727
  %v4729 = vmul.f32 %v4699, 1.442695
  %v4730 = vpow.pop %v4729
  %v4731 = vmul.f32 %v4700, 1.442695
  %v4732 = vpow.pop %v4731
  %4733 = vadd.xlane.f32.xlu0 %v4702
  %v4734 = vpop.xlane.xlu0 %4733
  %4735 = vadd.xlane.f32.xlu0 %v4704
  %v4736 = vpop.xlane.xlu0 %4735
  %4737 = vadd.xlane.f32.xlu0 %v4706
  %v4738 = vpop.xlane.xlu0 %4737
  %4739 = vadd.xlane.f32.xlu0 %v4708
  %v4740 = vpop.xlane.xlu0 %4739
  %4741 = vadd.xlane.f32.xlu0 %v4710
  %v4742 = vpop.xlane.xlu0 %4741
  %4743 = vadd.xlane.f32.xlu0 %v4712
  %v4744 = vpop.xlane.xlu0 %4743
  %4745 = vadd.xlane.f32.xlu0 %v4714
  %v4746 = vpop.xlane.xlu0 %4745
  %4747 = vadd.xlane.f32.xlu0 %v4716
  %v4748 = vpop.xlane.xlu0 %4747
  %4749 = vadd.xlane.f32.xlu0 %v4718
  %v4750 = vpop.xlane.xlu0 %4749
  %4751 = vadd.xlane.f32.xlu0 %v4720
  %v4752 = vpop.xlane.xlu0 %4751
  %4753 = vadd.xlane.f32.xlu0 %v4722
  %v4754 = vpop.xlane.xlu0 %4753
  %4755 = vadd.xlane.f32.xlu0 %v4724
  %v4756 = vpop.xlane.xlu0 %4755
  %4757 = vadd.xlane.f32.xlu0 %v4726
  %v4758 = vpop.xlane.xlu0 %4757
  %4759 = vadd.xlane.f32.xlu0 %v4728
  %v4760 = vpop.xlane.xlu0 %4759
  %4761 = vadd.xlane.f32.xlu0 %v4730
  %v4762 = vpop.xlane.xlu0 %4761
  %4763 = vadd.xlane.f32.xlu0 %v4732
  %v4764 = vpop.xlane.xlu0 %4763
  %v4765 = vpack.c.bf16 %v4704, %v4702
  %v4766 = vpack.c.bf16 %v4708, %v4706
  %v4767 = vpack.c.bf16 %v4712, %v4710
  %v4768 = vpack.c.bf16 %v4716, %v4714
  %v4769 = vpack.c.bf16 %v4720, %v4718
  %v4770 = vpack.c.bf16 %v4724, %v4722
  %v4771 = vpack.c.bf16 %v4728, %v4726
  %v4772 = vpack.c.bf16 %v4732, %v4730
  %v4773 = vpack.c.bf16 %v4385, %v4383
  %v4774 = vpack.c.bf16 %v4390, %v4388
  %v4775 = vpack.c.bf16 %v4395, %v4393
  %v4776 = vpack.c.bf16 %v4400, %v4398
  %v4777 = vpack.c.bf16 %v4405, %v4403
  %v4778 = vpack.c.bf16 %v4410, %v4408
  %v4779 = vpack.c.bf16 %v4415, %v4413
  %v4780 = vpack.c.bf16 %v4420, %v4418
  %4781 = vmatpush.bf16.msra.mxu0 %v4780
  %4782 = vmatpush.bf16.msra.mxu0 %v4779
  %4783 = vmatpush.bf16.msra.mxu0 %v4778
  %4784 = vmatpush.bf16.msra.mxu0 %v4777
  %4785 = vmatpush.bf16.msra.mxu0 %v4776
  %4786 = vmatpush.bf16.msra.mxu0 %v4775
  %4787 = vmatpush.bf16.msra.mxu0 %v4774
  %4788 = vmatpush.bf16.msra.mxu0 %v4773
  %4789 = vmatmul.bf16.gmra.mxu0 %v4765
  %v4790 = vpop.f32.mrf.mxu0
  %v4791 = vadd.f32 0.0, %v4790
  %v4792 = vpop.f32.mrf.mxu0
  %v4793 = vadd.f32 0.0, %v4792
  %4794 = vmatmul.bf16.gmra.mxu0 %v4766
  %v4795 = vpop.f32.mrf.mxu0
  %v4796 = vadd.f32 0.0, %v4795
  %v4797 = vpop.f32.mrf.mxu0
  %v4798 = vadd.f32 0.0, %v4797
  %4799 = vmatmul.bf16.gmra.mxu0 %v4767
  %v4800 = vpop.f32.mrf.mxu0
  %v4801 = vadd.f32 0.0, %v4800
  %v4802 = vpop.f32.mrf.mxu0
  %v4803 = vadd.f32 0.0, %v4802
  %4804 = vmatmul.bf16.gmra.mxu0 %v4768
  %v4805 = vpop.f32.mrf.mxu0
  %v4806 = vadd.f32 0.0, %v4805
  %v4807 = vpop.f32.mrf.mxu0
  %v4808 = vadd.f32 0.0, %v4807
  %4809 = vmatmul.bf16.gmra.mxu0 %v4769
  %v4810 = vpop.f32.mrf.mxu0
  %v4811 = vadd.f32 0.0, %v4810
  %v4812 = vpop.f32.mrf.mxu0
  %v4813 = vadd.f32 0.0, %v4812
  %4814 = vmatmul.bf16.gmra.mxu0 %v4770
  %v4815 = vpop.f32.mrf.mxu0
  %v4816 = vadd.f32 0.0, %v4815
  %v4817 = vpop.f32.mrf.mxu0
  %v4818 = vadd.f32 0.0, %v4817
  %4819 = vmatmul.bf16.gmra.mxu0 %v4771
  %v4820 = vpop.f32.mrf.mxu0
  %v4821 = vadd.f32 0.0, %v4820
  %v4822 = vpop.f32.mrf.mxu0
  %v4823 = vadd.f32 0.0, %v4822
  %4824 = vmatmul.bf16.gmra.mxu0 %v4772
  %v4825 = vpop.f32.mrf.mxu0
  %v4826 = vadd.f32 0.0, %v4825
  %v4827 = vpop.f32.mrf.mxu0
  %v4828 = vadd.f32 0.0, %v4827
  %4829 = vdwg.mxu0
  %v4830 = vrcp.pop %v4734
  %v4831 = vrcp.pop %v4736
  %v4832 = vrcp.pop %v4738
  %v4833 = vrcp.pop %v4740
  %v4834 = vrcp.pop %v4742
  %v4835 = vrcp.pop %v4744
  %v4836 = vrcp.pop %v4746
  %v4837 = vrcp.pop %v4748
  %v4838 = vrcp.pop %v4750
  %v4839 = vrcp.pop %v4752
  %v4840 = vrcp.pop %v4754
  %v4841 = vrcp.pop %v4756
  %v4842 = vrcp.pop %v4758
  %v4843 = vrcp.pop %v4760
  %v4844 = vrcp.pop %v4762
  %v4845 = vrcp.pop %v4764
  %v4846 = vmul.f32 %v4791, %v4830
  %v4847 = vmul.f32 %v4793, %v4831
  %v4848 = vmul.f32 %v4796, %v4832
  %v4849 = vmul.f32 %v4798, %v4833
  %v4850 = vmul.f32 %v4801, %v4834
  %v4851 = vmul.f32 %v4803, %v4835
  %v4852 = vmul.f32 %v4806, %v4836
  %v4853 = vmul.f32 %v4808, %v4837
  %v4854 = vmul.f32 %v4811, %v4838
  %v4855 = vmul.f32 %v4813, %v4839
  %v4856 = vmul.f32 %v4816, %v4840
  %v4857 = vmul.f32 %v4818, %v4841
  %v4858 = vmul.f32 %v4821, %v4842
  %v4859 = vmul.f32 %v4823, %v4843
  %v4860 = vmul.f32 %v4826, %v4844
  %v4861 = vmul.f32 %v4828, %v4845
  %v4862 = vlaneseq
  %v4863 = vand.u32 %v4862, 127
  %vm4864 = vcmp.lt.s32.totalorder %v4863, 7
  %v4865 = vsel %vm4864, 1, 0
  %vm4866 = vcmp.eq.s32.totalorder %v4865, 1
  %v4867 = vsel %vm4866, %v4846, -1e+30
  %v4868 = vsel %vm4866, %v4847, -1e+30
  %v4869 = vsel %vm4866, %v4848, -1e+30
  %v4870 = vsel %vm4866, %v4849, -1e+30
  %v4871 = vsel %vm4866, %v4850, -1e+30
  %v4872 = vsel %vm4866, %v4851, -1e+30
  %v4873 = vsel %vm4866, %v4852, -1e+30
  %v4874 = vsel %vm4866, %v4853, -1e+30
  %v4875 = vsel %vm4866, %v4854, -1e+30
  %v4876 = vsel %vm4866, %v4855, -1e+30
  %v4877 = vsel %vm4866, %v4856, -1e+30
  %v4878 = vsel %vm4866, %v4857, -1e+30
  %v4879 = vsel %vm4866, %v4858, -1e+30
  %v4880 = vsel %vm4866, %v4859, -1e+30
  %v4881 = vsel %vm4866, %v4860, -1e+30
  %v4882 = vsel %vm4866, %v4861, -1e+30
  %v4883 = vsel %vm4097, %v4867, -inf
  %4884 = vmax.xlane.f32.xlu0 %v4883
  %v4885 = vpop.xlane.xlu0 %4884
  %v4886 = vsel %vm4097, %v4868, -inf
  %4887 = vmax.xlane.f32.xlu0 %v4886
  %v4888 = vpop.xlane.xlu0 %4887
  %v4889 = vsel %vm4097, %v4869, -inf
  %4890 = vmax.xlane.f32.xlu0 %v4889
  %v4891 = vpop.xlane.xlu0 %4890
  %v4892 = vsel %vm4097, %v4870, -inf
  %4893 = vmax.xlane.f32.xlu0 %v4892
  %v4894 = vpop.xlane.xlu0 %4893
  %v4895 = vsel %vm4097, %v4871, -inf
  %4896 = vmax.xlane.f32.xlu0 %v4895
  %v4897 = vpop.xlane.xlu0 %4896
  %v4898 = vsel %vm4097, %v4872, -inf
  %4899 = vmax.xlane.f32.xlu0 %v4898
  %v4900 = vpop.xlane.xlu0 %4899
  %v4901 = vsel %vm4097, %v4873, -inf
  %4902 = vmax.xlane.f32.xlu0 %v4901
  %v4903 = vpop.xlane.xlu0 %4902
  %v4904 = vsel %vm4097, %v4874, -inf
  %4905 = vmax.xlane.f32.xlu0 %v4904
  %v4906 = vpop.xlane.xlu0 %4905
  %v4907 = vsel %vm4097, %v4875, -inf
  %4908 = vmax.xlane.f32.xlu0 %v4907
  %v4909 = vpop.xlane.xlu0 %4908
  %v4910 = vsel %vm4097, %v4876, -inf
  %4911 = vmax.xlane.f32.xlu0 %v4910
  %v4912 = vpop.xlane.xlu0 %4911
  %v4913 = vsel %vm4097, %v4877, -inf
  %4914 = vmax.xlane.f32.xlu0 %v4913
  %v4915 = vpop.xlane.xlu0 %4914
  %v4916 = vsel %vm4097, %v4878, -inf
  %4917 = vmax.xlane.f32.xlu0 %v4916
  %v4918 = vpop.xlane.xlu0 %4917
  %v4919 = vsel %vm4097, %v4879, -inf
  %4920 = vmax.xlane.f32.xlu0 %v4919
  %v4921 = vpop.xlane.xlu0 %4920
  %v4922 = vsel %vm4097, %v4880, -inf
  %4923 = vmax.xlane.f32.xlu0 %v4922
  %v4924 = vpop.xlane.xlu0 %4923
  %v4925 = vsel %vm4097, %v4881, -inf
  %4926 = vmax.xlane.f32.xlu0 %v4925
  %v4927 = vpop.xlane.xlu0 %4926
  %v4928 = vsel %vm4097, %v4882, -inf
  %4929 = vmax.xlane.f32.xlu0 %v4928
  %v4930 = vpop.xlane.xlu0 %4929
  %v4931 = vsub.f32 %v4867, %v4885
  %v4932 = vsub.f32 %v4868, %v4888
  %v4933 = vsub.f32 %v4869, %v4891
  %v4934 = vsub.f32 %v4870, %v4894
  %v4935 = vsub.f32 %v4871, %v4897
  %v4936 = vsub.f32 %v4872, %v4900
  %v4937 = vsub.f32 %v4873, %v4903
  %v4938 = vsub.f32 %v4874, %v4906
  %v4939 = vsub.f32 %v4875, %v4909
  %v4940 = vsub.f32 %v4876, %v4912
  %v4941 = vsub.f32 %v4877, %v4915
  %v4942 = vsub.f32 %v4878, %v4918
  %v4943 = vsub.f32 %v4879, %v4921
  %v4944 = vsub.f32 %v4880, %v4924
  %v4945 = vsub.f32 %v4881, %v4927
  %v4946 = vsub.f32 %v4882, %v4930
  %v4947 = vmul.f32 %v4931, 1.442695
  %v4948 = vpow.pop %v4947
  %v4949 = vmul.f32 %v4932, 1.442695
  %v4950 = vpow.pop %v4949
  %v4951 = vmul.f32 %v4933, 1.442695
  %v4952 = vpow.pop %v4951
  %v4953 = vmul.f32 %v4934, 1.442695
  %v4954 = vpow.pop %v4953
  %v4955 = vmul.f32 %v4935, 1.442695
  %v4956 = vpow.pop %v4955
  %v4957 = vmul.f32 %v4936, 1.442695
  %v4958 = vpow.pop %v4957
  %v4959 = vmul.f32 %v4937, 1.442695
  %v4960 = vpow.pop %v4959
  %v4961 = vmul.f32 %v4938, 1.442695
  %v4962 = vpow.pop %v4961
  %v4963 = vmul.f32 %v4939, 1.442695
  %v4964 = vpow.pop %v4963
  %v4965 = vmul.f32 %v4940, 1.442695
  %v4966 = vpow.pop %v4965
  %v4967 = vmul.f32 %v4941, 1.442695
  %v4968 = vpow.pop %v4967
  %v4969 = vmul.f32 %v4942, 1.442695
  %v4970 = vpow.pop %v4969
  %v4971 = vmul.f32 %v4943, 1.442695
  %v4972 = vpow.pop %v4971
  %v4973 = vmul.f32 %v4944, 1.442695
  %v4974 = vpow.pop %v4973
  %v4975 = vmul.f32 %v4945, 1.442695
  %v4976 = vpow.pop %v4975
  %v4977 = vmul.f32 %v4946, 1.442695
  %v4978 = vpow.pop %v4977
  %v4979 = vsel %vm4097, %v4948, 0.0
  %4980 = vadd.xlane.f32.xlu0 %v4979
  %v4981 = vpop.xlane.xlu0 %4980
  %v4982 = vsel %vm4097, %v4950, 0.0
  %4983 = vadd.xlane.f32.xlu0 %v4982
  %v4984 = vpop.xlane.xlu0 %4983
  %v4985 = vsel %vm4097, %v4952, 0.0
  %4986 = vadd.xlane.f32.xlu0 %v4985
  %v4987 = vpop.xlane.xlu0 %4986
  %v4988 = vsel %vm4097, %v4954, 0.0
  %4989 = vadd.xlane.f32.xlu0 %v4988
  %v4990 = vpop.xlane.xlu0 %4989
  %v4991 = vsel %vm4097, %v4956, 0.0
  %4992 = vadd.xlane.f32.xlu0 %v4991
  %v4993 = vpop.xlane.xlu0 %4992
  %v4994 = vsel %vm4097, %v4958, 0.0
  %4995 = vadd.xlane.f32.xlu0 %v4994
  %v4996 = vpop.xlane.xlu0 %4995
  %v4997 = vsel %vm4097, %v4960, 0.0
  %4998 = vadd.xlane.f32.xlu0 %v4997
  %v4999 = vpop.xlane.xlu0 %4998
  %v5000 = vsel %vm4097, %v4962, 0.0
  %5001 = vadd.xlane.f32.xlu0 %v5000
  %v5002 = vpop.xlane.xlu0 %5001
  %v5003 = vsel %vm4097, %v4964, 0.0
  %5004 = vadd.xlane.f32.xlu0 %v5003
  %v5005 = vpop.xlane.xlu0 %5004
  %v5006 = vsel %vm4097, %v4966, 0.0
  %5007 = vadd.xlane.f32.xlu0 %v5006
  %v5008 = vpop.xlane.xlu0 %5007
  %v5009 = vsel %vm4097, %v4968, 0.0
  %5010 = vadd.xlane.f32.xlu0 %v5009
  %v5011 = vpop.xlane.xlu0 %5010
  %v5012 = vsel %vm4097, %v4970, 0.0
  %5013 = vadd.xlane.f32.xlu0 %v5012
  %v5014 = vpop.xlane.xlu0 %5013
  %v5015 = vsel %vm4097, %v4972, 0.0
  %5016 = vadd.xlane.f32.xlu0 %v5015
  %v5017 = vpop.xlane.xlu0 %5016
  %v5018 = vsel %vm4097, %v4974, 0.0
  %5019 = vadd.xlane.f32.xlu0 %v5018
  %v5020 = vpop.xlane.xlu0 %5019
  %v5021 = vsel %vm4097, %v4976, 0.0
  %5022 = vadd.xlane.f32.xlu0 %v5021
  %v5023 = vpop.xlane.xlu0 %5022
  %v5024 = vsel %vm4097, %v4978, 0.0
  %5025 = vadd.xlane.f32.xlu0 %v5024
  %v5026 = vpop.xlane.xlu0 %5025
  %v5027 = vlog2.pop %v4981
  %v5028 = vmul.f32 %v5027, 0.6931472
  %v5029 = vlog2.pop %v4984
  %v5030 = vmul.f32 %v5029, 0.6931472
  %v5031 = vlog2.pop %v4987
  %v5032 = vmul.f32 %v5031, 0.6931472
  %v5033 = vlog2.pop %v4990
  %v5034 = vmul.f32 %v5033, 0.6931472
  %v5035 = vlog2.pop %v4993
  %v5036 = vmul.f32 %v5035, 0.6931472
  %v5037 = vlog2.pop %v4996
  %v5038 = vmul.f32 %v5037, 0.6931472
  %v5039 = vlog2.pop %v4999
  %v5040 = vmul.f32 %v5039, 0.6931472
  %v5041 = vlog2.pop %v5002
  %v5042 = vmul.f32 %v5041, 0.6931472
  %v5043 = vlog2.pop %v5005
  %v5044 = vmul.f32 %v5043, 0.6931472
  %v5045 = vlog2.pop %v5008
  %v5046 = vmul.f32 %v5045, 0.6931472
  %v5047 = vlog2.pop %v5011
  %v5048 = vmul.f32 %v5047, 0.6931472
  %v5049 = vlog2.pop %v5014
  %v5050 = vmul.f32 %v5049, 0.6931472
  %v5051 = vlog2.pop %v5017
  %v5052 = vmul.f32 %v5051, 0.6931472
  %v5053 = vlog2.pop %v5020
  %v5054 = vmul.f32 %v5053, 0.6931472
  %v5055 = vlog2.pop %v5023
  %v5056 = vmul.f32 %v5055, 0.6931472
  %v5057 = vlog2.pop %v5026
  %v5058 = vmul.f32 %v5057, 0.6931472
  %v5059 = vsub.f32 %v4931, %v5028
  %v5060 = vsub.f32 %v4932, %v5030
  %v5061 = vsub.f32 %v4933, %v5032
  %v5062 = vsub.f32 %v4934, %v5034
  %v5063 = vsub.f32 %v4935, %v5036
  %v5064 = vsub.f32 %v4936, %v5038
  %v5065 = vsub.f32 %v4937, %v5040
  %v5066 = vsub.f32 %v4938, %v5042
  %v5067 = vsub.f32 %v4939, %v5044
  %v5068 = vsub.f32 %v4940, %v5046
  %v5069 = vsub.f32 %v4941, %v5048
  %v5070 = vsub.f32 %v4942, %v5050
  %v5071 = vsub.f32 %v4943, %v5052
  %v5072 = vsub.f32 %v4944, %v5054
  %v5073 = vsub.f32 %v4945, %v5056
  %v5074 = vsub.f32 %v4946, %v5058
  %5075 = vst.msk [vmem:[%s9] sm:$0xff] %vm4097, %v5059
  %5076 = vst.msk [vmem:[%s9 + $0x8] sm:$0xff] %vm4097, %v5060
  %5077 = vst.msk [vmem:[%s9 + $0x10] sm:$0xff] %vm4097, %v5061
  %5078 = vst.msk [vmem:[%s9 + $0x18] sm:$0xff] %vm4097, %v5062
  %5079 = vst.msk [vmem:[%s9 + $0x20] sm:$0xff] %vm4097, %v5063
  %5080 = vst.msk [vmem:[%s9 + $0x28] sm:$0xff] %vm4097, %v5064
  %5081 = vst.msk [vmem:[%s9 + $0x30] sm:$0xff] %vm4097, %v5065
  %5082 = vst.msk [vmem:[%s9 + $0x38] sm:$0xff] %vm4097, %v5066
  %5083 = vst.msk [vmem:[%s9 + $0x40] sm:$0xff] %vm4097, %v5067
  %5084 = vst.msk [vmem:[%s9 + $0x48] sm:$0xff] %vm4097, %v5068
  %5085 = vst.msk [vmem:[%s9 + $0x50] sm:$0xff] %vm4097, %v5069
  %5086 = vst.msk [vmem:[%s9 + $0x58] sm:$0xff] %vm4097, %v5070
  %5087 = vst.msk [vmem:[%s9 + $0x60] sm:$0xff] %vm4097, %v5071
  %5088 = vst.msk [vmem:[%s9 + $0x68] sm:$0xff] %vm4097, %v5072
  %5089 = vst.msk [vmem:[%s9 + $0x70] sm:$0xff] %vm4097, %v5073
  %5090 = vst.msk [vmem:[%s9 + $0x78] sm:$0xff] %vm4097, %v5074
  // Predicated region
  $region38: #{_forward.1} parent=0 // pred_check
    _
  $region39: #{_forward.1} parent=0 // pred_check_branch
    %5092 = sbr.rel (0) target = $region41
  $region40: #{_forward.1} parent=0 // pred_region
    _
  $region41: #{_forward.1} parent=0 // pred_fallthru
    _
  // Predicated region
  $region42: #{_forward.1} parent=0 // pred_check
    _
  $region43: #{_forward.1} parent=0 // pred_check_branch
    %5094 = sbr.rel (0) target = $region45
  $region44: #{_forward.1} parent=0 // pred_region
    _
  $region45: #{_forward.1} parent=0 // pred_fallthru
    _

</llo_original>
